<compile_context>
chip_gen: v7x
topology: tpu7x:2x2x1
jax: 0.10.0
libtpu: 0.0.40
codegen_flags: <defaults>
</compile_context>

<pallas_src>
import jax
import jax.numpy as jnp
from jax import lax
from jax.experimental import pallas as pl
from jax.experimental.pallas import tpu as pltpu

NEG_SLOPE = 0.01            # nn.LeakyReLU() default negative_slope
TM = 128                    # row tile (sublane aligned, 128-lane friendly)
F32 = jnp.float32
VMEM_LIMIT = 32 * 1024 * 1024


def _lrelu(x):
    return jnp.where(x > 0, x, NEG_SLOPE * x)


def _round_up(n, m):
    return ((n + m - 1) // m) * m


def _pad_rows(x, rows):
    return jnp.pad(x.astype(F32), ((0, rows - x.shape[0]), (0, 0)))


def _pad_idx(idx, rows, fill=-1):
    return jnp.pad(idx.astype(jnp.int32), (0, rows - idx.shape[0]),
                   constant_values=fill)


def _rep_spec(shape):
    """Grid-invariant block (weights / small fully-resident tensors)."""
    return pl.BlockSpec(shape, lambda i: (0,) * len(shape))


def _r2(b):
    return b.reshape(1, -1)


# ----------------------------- kernels --------------------------------------

def _ff_pair_kernel(xn_ref, xg_ref,
                    wn1, bn1, wn2, bn2,
                    wg1, bg1, wg2, bg2,
                    vu_ref):
    """vu = [ff_node(node_feats) | ff_graph(graph_feats)]  -> lane-dense 128-wide."""
    xn = xn_ref[...]
    hv = _lrelu(jnp.dot(xn, wn1[...], preferred_element_type=F32) + bn1[...])
    v = _lrelu(jnp.dot(hv, wn2[...], preferred_element_type=F32) + bn2[...])
    xg = xg_ref[...]
    hu = _lrelu(jnp.dot(xg, wg1[...], preferred_element_type=F32) + bg1[...])
    u = _lrelu(jnp.dot(hu, wg2[...], preferred_element_type=F32) + bg2[...])
    vu_ref[...] = jnp.concatenate([v, u], axis=1)


def _edge_kernel(xe_ref, src_ref, dstc_ref, dstr_ref, vu_ref,
                 we1, be1, we2, be2,
                 w_src, w_dst, w_ee, b1, w2, b2,
                 eout_ref, eagg_ref):
    """ff_edge + edge_update (+residual) + scatter of [e_new | deg] into dst nodes."""
    @pl.when(pl.program_id(0) == 0)
    def _():
        eagg_ref[...] = jnp.zeros_like(eagg_ref)

    xe = xe_ref[...]                                                       # [TM, D]
    h = _lrelu(jnp.dot(xe, we1[...], preferred_element_type=F32) + be1[...])
    e = _lrelu(jnp.dot(h, we2[...], preferred_element_type=F32) + be2[...])  # [TM, H]

    tm = xe.shape[0]
    np_rows = vu_ref.shape[0]
    vu = vu_ref[...]                                                       # [Np, 2H]

    # in-VMEM one-hot gathers (never materialized in HBM); padded edges (idx=-1) -> zero rows
    col_ids = lax.broadcasted_iota(jnp.int32, (tm, np_rows), 1)
    oh_src = (col_ids == src_ref[...]).astype(F32)                         # [TM, Np]
    oh_dst = (col_ids == dstc_ref[...]).astype(F32)
    g_src = jnp.dot(oh_src, vu, preferred_element_type=F32)                # [v_src | u_src]
    g_dst = jnp.dot(oh_dst, vu, preferred_element_type=F32)                # [v_dst | u_dst]

    # cat([v_src, v_dst, e, u_dst]) @ W1  expressed as split-slab matmuls
    h1 = _lrelu(jnp.dot(g_src, w_src[...], preferred_element_type=F32)
                + jnp.dot(g_dst, w_dst[...], preferred_element_type=F32)
                + jnp.dot(e, w_ee[...], preferred_element_type=F32)
                + b1[...])
    e_new = _lrelu(jnp.dot(h1, w2[...], preferred_element_type=F32) + b2[...])  # [TM, O]

    eout_ref[...] = e_new + xe                                             # fused residual

    # scatter-add [e_new | 1...1] into node-indexed accumulator: one MXU op yields
    # both the per-node ef-sum (lanes :O) and the replicated in-degree (lanes O:).
    payload = jnp.concatenate([e_new, jnp.ones_like(e_new)], axis=1)       # [TM, 2O]
    row_ids = lax.broadcasted_iota(jnp.int32, (np_rows, tm), 0)
    oh_scat = (row_ids == dstr_ref[...]).astype(F32)                       # [Np, TM]
    eagg_ref[...] += jnp.dot(oh_scat, payload, preferred_element_type=F32)


def _node_kernel(vu_ref, eagg_ref, xn_ref, ngr_ref,
                 w_vu, w_ef, b1, w2, b2,
                 nout_ref, pool_ref):
    """node_update (+residual) + per-graph pooling accumulation (lane-dense [G,128])."""
    @pl.when(pl.program_id(0) == 0)
    def _():
        pool_ref[...] = jnp.zeros_like(pool_ref)

    o = nout_ref.shape[1]
    vu = vu_ref[...]                                                       # [TM, 2H]
    agg = eagg_ref[...]                                                    # [TM, 2O]
    ef_sum = agg[:, :o]                                                    # [TM, O]
    deg = agg[:, o:]                                                       # [TM, O] (deg replicated)
    ef = ef_sum * pl.reciprocal(jnp.maximum(deg, 1.0), approx=True)        # mean over in-edges

    # cat([v, ef, u]) @ W1 as split-slab matmuls (v,u come packed in vu)
    h = _lrelu(jnp.dot(vu, w_vu[...], preferred_element_type=F32)
               + jnp.dot(ef, w_ef[...], preferred_element_type=F32)
               + b1[...])
    n_new = _lrelu(jnp.dot(h, w2[...], preferred_element_type=F32) + b2[...])  # [TM, O]
    nout_ref[...] = n_new + xn_ref[...]                                    # fused residual

    tm = vu.shape[0]
    gp = pool_ref.shape[0]
    u = vu[:, vu.shape[1] // 2:]                                           # [TM, H]
    pooled = jnp.concatenate([n_new, ef_sum, u], axis=1)                   # [TM, 128]
    row_ids = lax.broadcasted_iota(jnp.int32, (gp, tm), 0)
    oh = (row_ids == ngr_ref[...]).astype(F32)                             # [Gp, TM]
    pool_ref[...] += jnp.dot(oh, pooled, preferred_element_type=F32)


def _graph_kernel(pool_ref, cntn_ref, cnte_ref, ngc_ref, xg_ref,
                  w1, b1, w2, b2,
                  gout_ref):
    """graph_update (count divisions via approx reciprocal) + broadcast to nodes + residual."""
    pool = pool_ref[...]                                                   # [Gp, 128]
    gp, width = pool.shape
    o = gout_ref.shape[1]
    inv_n = pl.reciprocal(jnp.maximum(cntn_ref[...], 1.0), approx=True)    # [Gp, 1]
    inv_e = pl.reciprocal(jnp.maximum(cnte_ref[...], 1.0), approx=True)    # [Gp, 1]
    lane = lax.broadcasted_iota(jnp.int32, (gp, width), 1)
    scale = jnp.where(lane < o, inv_n, jnp.where(lane < 2 * o, inv_e, inv_n))
    cat_g = pool * scale                                                   # [node|edge|graph] pools

    h = _lrelu(jnp.dot(cat_g, w1[...], preferred_element_type=F32) + b1[...])
    g_new = _lrelu(jnp.dot(h, w2[...], preferred_element_type=F32) + b2[...])  # [Gp, O]

    tm = xg_ref.shape[0]
    col_ids = lax.broadcasted_iota(jnp.int32, (tm, gp), 1)
    oh = (col_ids == ngc_ref[...]).astype(F32)                             # [TM, Gp]
    g_node = jnp.dot(oh, g_new, preferred_element_type=F32)                # repeat_interleave
    gout_ref[...] = g_node + xg_ref[...]                                   # fused residual


# ----------------------------- MegNet_layer forward --------------------------

def megnet_layer_forward(params, node_feats, edge_feats, graph_feats,
                         src, dst, node_graph, batch_num_nodes, batch_num_edges):
    N, D = node_feats.shape
    E = edge_feats.shape[0]
    G = batch_num_nodes.shape[0]

    Np = _round_up(max(N, 1), TM)
    Ep = _round_up(max(E, 1), TM)
    Gp = _round_up(max(G, 1), 8)
    gN, gE = Np // TM, Ep // TM

    # ---- weights (split into slabs so concats are never materialized) ----
    wn1, bn1, wn2, bn2 = params["ff_node"]
    we1, be1, we2, be2 = params["ff_edge"]
    wg1, bg1, wg2, bg2 = params["ff_graph"]
    Wue1, bue1, Wue2, bue2 = params["edge_update"]      # [256,64],[64],[64,32],[32]
    Wun1, bun1, Wun2, bun2 = params["node_update"]      # [160,64]
    Wug1, bug1, Wug2, bug2 = params["graph_update"]     # [128,64]

    H = wn2.shape[1]           # 64
    O = Wue2.shape[1]          # 32 (= in_dim)

    w_src = jnp.concatenate([Wue1[0:H], jnp.zeros((H, Wue1.shape[1]), F32)], axis=0)  # acts on [v_src|u_src]
    w_dst = jnp.concatenate([Wue1[H:2 * H], Wue1[3 * H:4 * H]], axis=0)               # acts on [v_dst|u_dst]
    w_ee = Wue1[2 * H:3 * H]
    w_vu = jnp.concatenate([Wun1[0:H], Wun1[H + O:H + O + H]], axis=0)                # acts on [v|u]
    w_ef = Wun1[H:H + O]

    # ---- padded inputs / index vectors ----
    xn = _pad_rows(node_feats, Np)
    xg = _pad_rows(graph_feats, Np)
    xe = _pad_rows(edge_feats, Ep)
    src_c = _pad_idx(src, Ep).reshape(Ep, 1)
    dst_c = _pad_idx(dst, Ep).reshape(Ep, 1)
    dst_r = _pad_idx(dst, Ep).reshape(1, Ep)
    ng_c = _pad_idx(node_graph, Np).reshape(Np, 1)
    ng_r = _pad_idx(node_graph, Np).reshape(1, Np)
    cnt_n = jnp.zeros((Gp, 1), F32).at[:G, 0].set(batch_num_nodes.astype(F32))
    cnt_e = jnp.zeros((Gp, 1), F32).at[:G, 0].set(batch_num_edges.astype(F32))

    cp_par = pltpu.CompilerParams(dimension_semantics=("parallel",),
                                  vmem_limit_bytes=VMEM_LIMIT)
    cp_arb = pltpu.CompilerParams(dimension_semantics=("arbitrary",),
                                  vmem_limit_bytes=VMEM_LIMIT)

    # ---- K1: fused ff_node + ff_graph -> vu [Np, 128] ----
    vu = pl.pallas_call(
        _ff_pair_kernel,
        out_shape=jax.ShapeDtypeStruct((Np, 2 * H), F32),
        grid=(gN,),
        in_specs=[
            pl.BlockSpec((TM, D), lambda i: (i, 0)),
            pl.BlockSpec((TM, D), lambda i: (i, 0)),
            _rep_spec((D, D)), _rep_spec((1, D)), _rep_spec((D, H)), _rep_spec((1, H)),
            _rep_spec((D, D)), _rep_spec((1, D)), _rep_spec((D, H)), _rep_spec((1, H)),
        ],
        out_specs=pl.BlockSpec((TM, 2 * H), lambda i: (i, 0)),
        compiler_params=cp_par,
    )(xn, xg, wn1, _r2(bn1), wn2, _r2(bn2), wg1, _r2(bg1), wg2, _r2(bg2))

    # ---- K2: edge path (ff_edge + edge_update + residual + fused [ef_sum|deg] scatter) ----
    e_out_p, eagg_p = pl.pallas_call(
        _edge_kernel,
        out_shape=(jax.ShapeDtypeStruct((Ep, O), F32),
                   jax.ShapeDtypeStruct((Np, 2 * O), F32)),
        grid=(gE,),
        in_specs=[
            pl.BlockSpec((TM, D), lambda i: (i, 0)),
            pl.BlockSpec((TM, 1), lambda i: (i, 0)),
            pl.BlockSpec((TM, 1), lambda i: (i, 0)),
            pl.BlockSpec((1, TM), lambda i: (0, i)),
            _rep_spec((Np, 2 * H)),
            _rep_spec((D, D)), _rep_spec((1, D)), _rep_spec((D, H)), _rep_spec((1, H)),
            _rep_spec((2 * H, H)), _rep_spec((2 * H, H)), _rep_spec((H, H)),
            _rep_spec((1, H)), _rep_spec((H, O)), _rep_spec((1, O)),
        ],
        out_specs=(pl.BlockSpec((TM, O), lambda i: (i, 0)),
                   pl.BlockSpec((Np, 2 * O), lambda i: (0, 0))),
        compiler_params=cp_arb,
    )(xe, src_c, dst_c, dst_r, vu,
      we1, _r2(be1), we2, _r2(be2),
      w_src, w_dst, w_ee, _r2(bue1), Wue2, _r2(bue2))

    # ---- K3: node path (node_update + residual + pooling accumulation) ----
    node_out_p, pool = pl.pallas_call(
        _node_kernel,
        out_shape=(jax.ShapeDtypeStruct((Np, O), F32),
                   jax.ShapeDtypeStruct((Gp, 2 * O + H), F32)),
        grid=(gN,),
        in_specs=[
            pl.BlockSpec((TM, 2 * H), lambda i: (i, 0)),
            pl.BlockSpec((TM, 2 * O), lambda i: (i, 0)),
            pl.BlockSpec((TM, D), lambda i: (i, 0)),
            pl.BlockSpec((1, TM), lambda i: (0, i)),
            _rep_spec((2 * H, H)), _rep_spec((O, H)),
            _rep_spec((1, H)), _rep_spec((H, O)), _rep_spec((1, O)),
        ],
        out_specs=(pl.BlockSpec((TM, O), lambda i: (i, 0)),
                   pl.BlockSpec((Gp, 2 * O + H), lambda i: (0, 0))),
        compiler_params=cp_arb,
    )(vu, eagg_p, xn, ng_r,
      w_vu, w_ef, _r2(bun1), Wun2, _r2(bun2))

    # ---- K4: graph path (graph_update + broadcast-to-nodes + residual) ----
    graph_out_p = pl.pallas_call(
        _graph_kernel,
        out_shape=jax.ShapeDtypeStruct((Np, O), F32),
        grid=(gN,),
        in_specs=[
            _rep_spec((Gp, 2 * O + H)),
            _rep_spec((Gp, 1)), _rep_spec((Gp, 1)),
            pl.BlockSpec((TM, 1), lambda i: (i, 0)),
            pl.BlockSpec((TM, D), lambda i: (i, 0)),
            _rep_spec((2 * O + H, H)), _rep_spec((1, H)),
            _rep_spec((H, O)), _rep_spec((1, O)),
        ],
        out_specs=pl.BlockSpec((TM, O), lambda i: (i, 0)),
        compiler_params=cp_par,
    )(pool, cnt_n, cnt_e, ng_c, xg,
      Wug1, _r2(bug1), Wug2, _r2(bug2))

    return node_out_p[:N], e_out_p[:E], graph_out_p[:N]


# ----------------------------- pure-JAX reference ----------------------------

def _ref_mlp2(x, w1, b1, w2, b2):
    h = _lrelu(x @ w1 + b1)
    return _lrelu(h @ w2 + b2)


def reference_forward(params, node_feats, edge_feats, graph_feats,
                      src, dst, node_graph, batch_num_nodes, batch_num_edges):
    N = node_feats.shape[0]
    G = batch_num_nodes.shape[0]
    v = _ref_mlp2(node_feats, *params["ff_node"])
    e = _ref_mlp2(edge_feats, *params["ff_edge"])
    u = _ref_mlp2(graph_feats, *params["ff_graph"])
    e_new = _ref_mlp2(jnp.concatenate([v[src], v[dst], e, u[dst]], 1), *params["edge_update"])
    ef_sum = jax.ops.segment_sum(e_new, dst, num_segments=N)
    in_deg = jax.ops.segment_sum(jnp.ones((e_new.shape[0],)), dst, num_segments=N)[:, None]
    ef = ef_sum / jnp.maximum(in_deg, 1.0)
    n_new = _ref_mlp2(jnp.concatenate([v, ef, u], 1), *params["node_update"])
    nn_cnt = batch_num_nodes.astype(F32)[:, None]
    ne_cnt = batch_num_edges.astype(F32)[:, None]
    node_pool = jax.ops.segment_sum(n_new, node_graph, num_segments=G) / nn_cnt
    edge_pool = jax.ops.segment_sum(ef_sum, node_graph, num_segments=G) / ne_cnt
    graph_pool = jax.ops.segment_sum(u, node_graph, num_segments=G) / nn_cnt
    g_new = _ref_mlp2(jnp.concatenate([node_pool, edge_pool, graph_pool], 1), *params["graph_update"])
    return (n_new + node_feats, e_new + edge_feats, g_new[node_graph] + graph_feats)


# ----------------------------- setup & main -----------------------------------

def make_params(key, in_dim=32, hidden=(64, 64)):
    h0, h1 = hidden
    h_last = in_dim
    dims = {
        "ff_node":      [(in_dim, in_dim), (in_dim, h0)],
        "ff_edge":      [(in_dim, in_dim), (in_dim, h0)],
        "ff_graph":     [(in_dim, in_dim), (in_dim, h0)],
        "edge_update":  [(h0 * 2 + h0 + h0, h1), (h1, h_last)],
        "node_update":  [(h0 + h_last + h0, h1), (h1, h_last)],
        "graph_update": [(h_last + h_last + h0, h1), (h1, h_last)],
    }
    params = {}
    for name, layer_dims in dims.items():
        entries = []
        for (din, dout) in layer_dims:
            key, k_w, k_b = jax.random.split(key, 3)
            entries.append(jax.random.normal(k_w, (din, dout), F32) * 0.1)
            entries.append(jax.random.normal(k_b, (dout,), F32) * 0.01)
        params[name] = tuple(entries)
    return params


def _check(out, ref):
    for o, r in zip(out, ref):
        assert o.shape == r.shape and o.dtype == F32
        assert jnp.allclose(o, r, rtol=2e-2, atol=2e-2), "mismatch vs reference"


if __name__ == "__main__":
    key = jax.random.PRNGKey(0)
    in_dim = 32
    params = make_params(key, in_dim=in_dim, hidden=(64, 64))
    fwd = jax.jit(megnet_layer_forward)

    # --- test 1: tiny batched graph (2 graphs) ---
    src = jnp.array([0, 1, 2, 3, 4, 1, 5, 6, 7, 6], dtype=jnp.int32)
    dst = jnp.array([1, 2, 3, 4, 0, 0, 6, 7, 5, 5], dtype=jnp.int32)
    node_graph = jnp.array([0, 0, 0, 0, 0, 1, 1, 1], dtype=jnp.int32)
    bnn = jnp.array([5, 3], dtype=jnp.int32)
    bne = jnp.array([6, 4], dtype=jnp.int32)
    N, E, G = 8, 10, 2

    key, k_n, k_e, k_g = jax.random.split(key, 4)
    node_feats = jax.random.normal(k_n, (N, in_dim), F32)
    edge_feats = jax.random.normal(k_e, (E, in_dim), F32)
    graph_feats = jax.random.normal(k_g, (G, in_dim), F32)[node_graph]

    out = jax.block_until_ready(fwd(params, node_feats, edge_feats, graph_feats,
                                    src, dst, node_graph, bnn, bne))
    ref = reference_forward(params, node_feats, edge_feats, graph_feats,
                            src, dst, node_graph, bnn, bne)
    _check(out, ref)

    # --- test 2: larger graph exercising multi-tile grids + accumulators ---
    N2, E2, G2 = 300, 700, 4
    bnn2 = jnp.array([100, 120, 50, 30], dtype=jnp.int32)
    bne2 = jnp.array([200, 250, 150, 100], dtype=jnp.int32)
    node_graph2 = jnp.repeat(jnp.arange(G2, dtype=jnp.int32), bnn2)
    key, k1, k2, k3, k4, k5 = jax.random.split(key, 6)
    src2 = jax.random.randint(k1, (E2,), 0, N2, dtype=jnp.int32)
    dst2 = jax.random.randint(k2, (E2,), 0, N2, dtype=jnp.int32)
    nf2 = jax.random.normal(k3, (N2, in_dim), F32)
    ef2 = jax.random.normal(k4, (E2, in_dim), F32)
    gf2 = jax.random.normal(k5, (G2, in_dim), F32)[node_graph2]

    out2 = jax.block_until_ready(fwd(params, nf2, ef2, gf2,
                                     src2, dst2, node_graph2, bnn2, bne2))
    ref2 = reference_forward(params, nf2, ef2, gf2,
                             src2, dst2, node_graph2, bnn2, bne2)
    _check(out2, ref2)

    print("KERNEL_OK")
</pallas_src>

<mosaic_0001>
module attributes {stable_mosaic.version = 11 : i64} {
  func.func @_node_kernel(%arg0: i32, %arg1: memref<128x128xf32, #tpu.memory_space<vmem>>, %arg2: memref<128x64xf32, #tpu.memory_space<vmem>>, %arg3: memref<128x32xf32, #tpu.memory_space<vmem>>, %arg4: memref<1x128xi32, #tpu.memory_space<vmem>>, %arg5: memref<128x64xf32, #tpu.memory_space<vmem>>, %arg6: memref<32x64xf32, #tpu.memory_space<vmem>>, %arg7: memref<1x64xf32, #tpu.memory_space<vmem>>, %arg8: memref<64x32xf32, #tpu.memory_space<vmem>>, %arg9: memref<1x32xf32, #tpu.memory_space<vmem>>, %arg10: memref<128x32xf32, #tpu.memory_space<vmem>>, %arg11: memref<8x128xf32, #tpu.memory_space<vmem>>) attributes {dimension_semantics = [#tpu.dimension_semantics<arbitrary>], iteration_bounds = array<i64: 1>, scalar_prefetch = 0 : i64, scratch_operands = 0 : i64, tpu.core_type = #tpu.core_type<tc>, window_params = [{transform_indices = @transform_0, window_bounds = array<i64: 128, 128>}, {transform_indices = @transform_1, window_bounds = array<i64: 128, 64>}, {transform_indices = @transform_2, window_bounds = array<i64: 128, 32>}, {transform_indices = @transform_3, window_bounds = array<i64: 1, 128>}, {pipeline_mode = #tpu.pipeline_mode<synchronous>, transform_indices = @transform_4, window_bounds = array<i64: 128, 64>}, {pipeline_mode = #tpu.pipeline_mode<synchronous>, transform_indices = @transform_5, window_bounds = array<i64: 32, 64>}, {pipeline_mode = #tpu.pipeline_mode<synchronous>, transform_indices = @transform_6, window_bounds = array<i64: 1, 64>}, {pipeline_mode = #tpu.pipeline_mode<synchronous>, transform_indices = @transform_7, window_bounds = array<i64: 64, 32>}, {pipeline_mode = #tpu.pipeline_mode<synchronous>, transform_indices = @transform_8, window_bounds = array<i64: 1, 32>}, {transform_indices = @transform_9, window_bounds = array<i64: 128, 32>}, {pipeline_mode = #tpu.pipeline_mode<synchronous>, transform_indices = @transform_10, window_bounds = array<i64: 8, 128>}]} {
    %c0_i32 = arith.constant 0 : i32
    %0 = arith.cmpi eq, %arg0, %c0_i32 : i32
    %1 = arith.extui %0 : i1 to i32
    %c0_i32_0 = arith.constant 0 : i32
    %2 = arith.cmpi ne, %1, %c0_i32_0 : i32
    scf.if %2 {
      %cst_32 = arith.constant 0.000000e+00 : f32
      %49 = vector.broadcast %cst_32 : f32 to vector<8x128xf32>
      %c0_33 = arith.constant 0 : index
      %c0_34 = arith.constant 0 : index
      %50 = vector.load %arg11[%c0_33, %c0_34] : memref<8x128xf32, #tpu.memory_space<vmem>>, vector<8x128xf32>
      tpu.vector_store %arg11[%c0_33, %c0_34], %49 {strides = array<i32>} : memref<8x128xf32, #tpu.memory_space<vmem>>, vector<8x128xf32>,
    } else {
    }
    %c0 = arith.constant 0 : index
    %c0_1 = arith.constant 0 : index
    %3 = vector.load %arg1[%c0, %c0_1] : memref<128x128xf32, #tpu.memory_space<vmem>>, vector<128x128xf32>
    %c0_2 = arith.constant 0 : index
    %c0_3 = arith.constant 0 : index
    %4 = vector.load %arg2[%c0_2, %c0_3] : memref<128x64xf32, #tpu.memory_space<vmem>>, vector<128x64xf32>
    %5 = vector.extract_strided_slice %4 {offsets = [0, 0], sizes = [128, 32], strides = [1, 1]} : vector<128x64xf32> to vector<128x32xf32>
    %6 = vector.extract_strided_slice %4 {offsets = [0, 32], sizes = [128, 32], strides = [1, 1]} : vector<128x64xf32> to vector<128x32xf32>
    %cst = arith.constant 1.000000e+00 : f32
    %7 = vector.broadcast %cst : f32 to vector<128x32xf32>
    %8 = arith.maximumf %6, %7 : vector<128x32xf32>
    %9 = tpu.reciprocal %8 {approx = true} : vector<128x32xf32> -> vector<128x32xf32>
    %10 = arith.mulf %5, %9 : vector<128x32xf32>
    %c0_4 = arith.constant 0 : index
    %c0_5 = arith.constant 0 : index
    %11 = vector.load %arg5[%c0_4, %c0_5] : memref<128x64xf32, #tpu.memory_space<vmem>>, vector<128x64xf32>
    %cst_6 = arith.constant dense<0.000000e+00> : vector<128x64xf32>
    %12 = tpu.matmul %3, %11, %cst_6 {dimension_numbers = #tpu.dot_dimension_numbers<[1], [0], [0], [1], [0, 0, 1, 1], [], []>} : vector<128x128xf32>, vector<128x64xf32>, vector<128x64xf32> -> vector<128x64xf32>
    %c0_7 = arith.constant 0 : index
    %c0_8 = arith.constant 0 : index
    %13 = vector.load %arg6[%c0_7, %c0_8] : memref<32x64xf32, #tpu.memory_space<vmem>>, vector<32x64xf32>
    %cst_9 = arith.constant dense<0.000000e+00> : vector<128x64xf32>
    %14 = tpu.matmul %10, %13, %cst_9 {dimension_numbers = #tpu.dot_dimension_numbers<[1], [0], [0], [1], [0, 0, 1, 1], [], []>} : vector<128x32xf32>, vector<32x64xf32>, vector<128x64xf32> -> vector<128x64xf32>
    %15 = arith.addf %12, %14 : vector<128x64xf32>
    %c0_10 = arith.constant 0 : index
    %c0_11 = arith.constant 0 : index
    %16 = vector.load %arg7[%c0_10, %c0_11] : memref<1x64xf32, #tpu.memory_space<vmem>>, vector<1x64xf32>
    %17 = vector.broadcast %16 : vector<1x64xf32> to vector<128x64xf32>
    %18 = arith.addf %15, %17 : vector<128x64xf32>
    %cst_12 = arith.constant 0.000000e+00 : f32
    %19 = vector.broadcast %cst_12 : f32 to vector<128x64xf32>
    %20 = arith.cmpf ogt, %18, %19 : vector<128x64xf32>
    %cst_13 = arith.constant 0.00999999977 : f32
    %21 = vector.broadcast %cst_13 : f32 to vector<128x64xf32>
    %22 = arith.mulf %21, %18 : vector<128x64xf32>
    %23 = arith.select %20, %18, %22 : vector<128x64xi1>, vector<128x64xf32>
    %c0_14 = arith.constant 0 : index
    %c0_15 = arith.constant 0 : index
    %24 = vector.load %arg8[%c0_14, %c0_15] : memref<64x32xf32, #tpu.memory_space<vmem>>, vector<64x32xf32>
    %cst_16 = arith.constant dense<0.000000e+00> : vector<128x32xf32>
    %25 = tpu.matmul %23, %24, %cst_16 {dimension_numbers = #tpu.dot_dimension_numbers<[1], [0], [0], [1], [0, 0, 1, 1], [], []>} : vector<128x64xf32>, vector<64x32xf32>, vector<128x32xf32> -> vector<128x32xf32>
    %c0_17 = arith.constant 0 : index
    %c0_18 = arith.constant 0 : index
    %26 = vector.load %arg9[%c0_17, %c0_18] : memref<1x32xf32, #tpu.memory_space<vmem>>, vector<1x32xf32>
    %27 = vector.broadcast %26 : vector<1x32xf32> to vector<128x32xf32>
    %28 = arith.addf %25, %27 : vector<128x32xf32>
    %cst_19 = arith.constant 0.000000e+00 : f32
    %29 = vector.broadcast %cst_19 : f32 to vector<128x32xf32>
    %30 = arith.cmpf ogt, %28, %29 : vector<128x32xf32>
    %cst_20 = arith.constant 0.00999999977 : f32
    %31 = vector.broadcast %cst_20 : f32 to vector<128x32xf32>
    %32 = arith.mulf %31, %28 : vector<128x32xf32>
    %33 = arith.select %30, %28, %32 : vector<128x32xi1>, vector<128x32xf32>
    %c0_21 = arith.constant 0 : index
    %c0_22 = arith.constant 0 : index
    %34 = vector.load %arg3[%c0_21, %c0_22] : memref<128x32xf32, #tpu.memory_space<vmem>>, vector<128x32xf32>
    %35 = arith.addf %33, %34 : vector<128x32xf32>
    %c0_23 = arith.constant 0 : index
    %c0_24 = arith.constant 0 : index
    %36 = vector.load %arg10[%c0_23, %c0_24] : memref<128x32xf32, #tpu.memory_space<vmem>>, vector<128x32xf32>
    tpu.vector_store %arg10[%c0_23, %c0_24], %35 {strides = array<i32>} : memref<128x32xf32, #tpu.memory_space<vmem>>, vector<128x32xf32>,
    %37 = vector.extract_strided_slice %3 {offsets = [0, 64], sizes = [128, 64], strides = [1, 1]} : vector<128x128xf32> to vector<128x64xf32>
    %38 = tpu.concatenate %33, %5, %37 in 1 : vector<128x32xf32>, vector<128x32xf32>, vector<128x64xf32> -> vector<128x128xf32>
    %39 = tpu.iota {dimensions = array<i32: 0>} : vector<8x128xi32>
    %c0_25 = arith.constant 0 : index
    %c0_26 = arith.constant 0 : index
    %40 = vector.load %arg4[%c0_25, %c0_26] : memref<1x128xi32, #tpu.memory_space<vmem>>, vector<1x128xi32>
    %41 = vector.broadcast %40 : vector<1x128xi32> to vector<8x128xi32>
    %42 = arith.cmpi eq, %39, %41 : vector<8x128xi32>
    %43 = arith.extui %42 : vector<8x128xi1> to vector<8x128xi32>
    %44 = arith.sitofp %43 : vector<8x128xi32> to vector<8x128xf32>
    %c0_27 = arith.constant 0 : index
    %c0_28 = arith.constant 0 : index
    %45 = vector.load %arg11[%c0_27, %c0_28] : memref<8x128xf32, #tpu.memory_space<vmem>>, vector<8x128xf32>
    %cst_29 = arith.constant dense<0.000000e+00> : vector<8x128xf32>
    %46 = tpu.matmul %44, %38, %cst_29 {dimension_numbers = #tpu.dot_dimension_numbers<[1], [0], [0], [1], [0, 0, 1, 1], [], []>} : vector<8x128xf32>, vector<128x128xf32>, vector<8x128xf32> -> vector<8x128xf32>
    %47 = arith.addf %45, %46 : vector<8x128xf32>
    %c0_30 = arith.constant 0 : index
    %c0_31 = arith.constant 0 : index
    %48 = vector.load %arg11[%c0_30, %c0_31] : memref<8x128xf32, #tpu.memory_space<vmem>>, vector<8x128xf32>
    tpu.vector_store %arg11[%c0_30, %c0_31], %47 {strides = array<i32>} : memref<8x128xf32, #tpu.memory_space<vmem>>, vector<8x128xf32>,
    return
  }
  func.func @transform_0(%arg0: i32) -> (i32, i32) {
    %c0_i32 = arith.constant 0 : i32
    %c0_i32_0 = arith.constant 0 : i32
    return %arg0, %c0_i32 : i32, i32
  }
  func.func @transform_1(%arg0: i32) -> (i32, i32) {
    %c0_i32 = arith.constant 0 : i32
    %c0_i32_0 = arith.constant 0 : i32
    return %arg0, %c0_i32 : i32, i32
  }
  func.func @transform_2(%arg0: i32) -> (i32, i32) {
    %c0_i32 = arith.constant 0 : i32
    %c0_i32_0 = arith.constant 0 : i32
    return %arg0, %c0_i32 : i32, i32
  }
  func.func @transform_3(%arg0: i32) -> (i32, i32) {
    %c0_i32 = arith.constant 0 : i32
    %c0_i32_0 = arith.constant 0 : i32
    return %c0_i32, %arg0 : i32, i32
  }
  func.func @transform_4(%arg0: i32) -> (i32, i32) {
    %c0_i32 = arith.constant 0 : i32
    %c0_i32_0 = arith.constant 0 : i32
    %c0_i32_1 = arith.constant 0 : i32
    return %c0_i32, %c0_i32_0 : i32, i32
  }
  func.func @transform_5(%arg0: i32) -> (i32, i32) {
    %c0_i32 = arith.constant 0 : i32
    %c0_i32_0 = arith.constant 0 : i32
    %c0_i32_1 = arith.constant 0 : i32
    return %c0_i32, %c0_i32_0 : i32, i32
  }
  func.func @transform_6(%arg0: i32) -> (i32, i32) {
    %c0_i32 = arith.constant 0 : i32
    %c0_i32_0 = arith.constant 0 : i32
    %c0_i32_1 = arith.constant 0 : i32
    return %c0_i32, %c0_i32_0 : i32, i32
  }
  func.func @transform_7(%arg0: i32) -> (i32, i32) {
    %c0_i32 = arith.constant 0 : i32
    %c0_i32_0 = arith.constant 0 : i32
    %c0_i32_1 = arith.constant 0 : i32
    return %c0_i32, %c0_i32_0 : i32, i32
  }
  func.func @transform_8(%arg0: i32) -> (i32, i32) {
    %c0_i32 = arith.constant 0 : i32
    %c0_i32_0 = arith.constant 0 : i32
    %c0_i32_1 = arith.constant 0 : i32
    return %c0_i32, %c0_i32_0 : i32, i32
  }
  func.func @transform_9(%arg0: i32) -> (i32, i32) {
    %c0_i32 = arith.constant 0 : i32
    %c0_i32_0 = arith.constant 0 : i32
    return %arg0, %c0_i32 : i32, i32
  }
  func.func @transform_10(%arg0: i32) -> (i32, i32) {
    %c0_i32 = arith.constant 0 : i32
    %c0_i32_0 = arith.constant 0 : i32
    %c0_i32_1 = arith.constant 0 : i32
    return %c0_i32, %c0_i32_0 : i32, i32
  }
}

module attributes {stable_mosaic.version = 11 : i64} {
  func.func @_ff_pair_kernel(%arg0: i32, %arg1: memref<128x32xf32, #tpu.memory_space<vmem>>, %arg2: memref<128x32xf32, #tpu.memory_space<vmem>>, %arg3: memref<32x32xf32, #tpu.memory_space<vmem>>, %arg4: memref<1x32xf32, #tpu.memory_space<vmem>>, %arg5: memref<32x64xf32, #tpu.memory_space<vmem>>, %arg6: memref<1x64xf32, #tpu.memory_space<vmem>>, %arg7: memref<32x32xf32, #tpu.memory_space<vmem>>, %arg8: memref<1x32xf32, #tpu.memory_space<vmem>>, %arg9: memref<32x64xf32, #tpu.memory_space<vmem>>, %arg10: memref<1x64xf32, #tpu.memory_space<vmem>>, %arg11: memref<128x128xf32, #tpu.memory_space<vmem>>) attributes {dimension_semantics = [#tpu.dimension_semantics<parallel>], iteration_bounds = array<i64: 1>, scalar_prefetch = 0 : i64, scratch_operands = 0 : i64, tpu.core_type = #tpu.core_type<tc>, window_params = [{transform_indices = @transform_0, window_bounds = array<i64: 128, 32>}, {transform_indices = @transform_1, window_bounds = array<i64: 128, 32>}, {pipeline_mode = #tpu.pipeline_mode<synchronous>, transform_indices = @transform_2, window_bounds = array<i64: 32, 32>}, {pipeline_mode = #tpu.pipeline_mode<synchronous>, transform_indices = @transform_3, window_bounds = array<i64: 1, 32>}, {pipeline_mode = #tpu.pipeline_mode<synchronous>, transform_indices = @transform_4, window_bounds = array<i64: 32, 64>}, {pipeline_mode = #tpu.pipeline_mode<synchronous>, transform_indices = @transform_5, window_bounds = array<i64: 1, 64>}, {pipeline_mode = #tpu.pipeline_mode<synchronous>, transform_indices = @transform_6, window_bounds = array<i64: 32, 32>}, {pipeline_mode = #tpu.pipeline_mode<synchronous>, transform_indices = @transform_7, window_bounds = array<i64: 1, 32>}, {pipeline_mode = #tpu.pipeline_mode<synchronous>, transform_indices = @transform_8, window_bounds = array<i64: 32, 64>}, {pipeline_mode = #tpu.pipeline_mode<synchronous>, transform_indices = @transform_9, window_bounds = array<i64: 1, 64>}, {transform_indices = @transform_10, window_bounds = array<i64: 128, 128>}]} {
    %c0 = arith.constant 0 : index
    %c0_0 = arith.constant 0 : index
    %0 = vector.load %arg1[%c0, %c0_0] : memref<128x32xf32, #tpu.memory_space<vmem>>, vector<128x32xf32>
    %c0_1 = arith.constant 0 : index
    %c0_2 = arith.constant 0 : index
    %1 = vector.load %arg3[%c0_1, %c0_2] : memref<32x32xf32, #tpu.memory_space<vmem>>, vector<32x32xf32>
    %cst = arith.constant dense<0.000000e+00> : vector<128x32xf32>
    %2 = tpu.matmul %0, %1, %cst {dimension_numbers = #tpu.dot_dimension_numbers<[1], [0], [0], [1], [0, 0, 1, 1], [], []>} : vector<128x32xf32>, vector<32x32xf32>, vector<128x32xf32> -> vector<128x32xf32>
    %c0_3 = arith.constant 0 : index
    %c0_4 = arith.constant 0 : index
    %3 = vector.load %arg4[%c0_3, %c0_4] : memref<1x32xf32, #tpu.memory_space<vmem>>, vector<1x32xf32>
    %4 = vector.broadcast %3 : vector<1x32xf32> to vector<128x32xf32>
    %5 = arith.addf %2, %4 : vector<128x32xf32>
    %cst_5 = arith.constant 0.000000e+00 : f32
    %6 = vector.broadcast %cst_5 : f32 to vector<128x32xf32>
    %7 = arith.cmpf ogt, %5, %6 : vector<128x32xf32>
    %cst_6 = arith.constant 0.00999999977 : f32
    %8 = vector.broadcast %cst_6 : f32 to vector<128x32xf32>
    %9 = arith.mulf %8, %5 : vector<128x32xf32>
    %10 = arith.select %7, %5, %9 : vector<128x32xi1>, vector<128x32xf32>
    %c0_7 = arith.constant 0 : index
    %c0_8 = arith.constant 0 : index
    %11 = vector.load %arg5[%c0_7, %c0_8] : memref<32x64xf32, #tpu.memory_space<vmem>>, vector<32x64xf32>
    %cst_9 = arith.constant dense<0.000000e+00> : vector<128x64xf32>
    %12 = tpu.matmul %10, %11, %cst_9 {dimension_numbers = #tpu.dot_dimension_numbers<[1], [0], [0], [1], [0, 0, 1, 1], [], []>} : vector<128x32xf32>, vector<32x64xf32>, vector<128x64xf32> -> vector<128x64xf32>
    %c0_10 = arith.constant 0 : index
    %c0_11 = arith.constant 0 : index
    %13 = vector.load %arg6[%c0_10, %c0_11] : memref<1x64xf32, #tpu.memory_space<vmem>>, vector<1x64xf32>
    %14 = vector.broadcast %13 : vector<1x64xf32> to vector<128x64xf32>
    %15 = arith.addf %12, %14 : vector<128x64xf32>
    %cst_12 = arith.constant 0.000000e+00 : f32
    %16 = vector.broadcast %cst_12 : f32 to vector<128x64xf32>
    %17 = arith.cmpf ogt, %15, %16 : vector<128x64xf32>
    %cst_13 = arith.constant 0.00999999977 : f32
    %18 = vector.broadcast %cst_13 : f32 to vector<128x64xf32>
    %19 = arith.mulf %18, %15 : vector<128x64xf32>
    %20 = arith.select %17, %15, %19 : vector<128x64xi1>, vector<128x64xf32>
    %c0_14 = arith.constant 0 : index
    %c0_15 = arith.constant 0 : index
    %21 = vector.load %arg2[%c0_14, %c0_15] : memref<128x32xf32, #tpu.memory_space<vmem>>, vector<128x32xf32>
    %c0_16 = arith.constant 0 : index
    %c0_17 = arith.constant 0 : index
    %22 = vector.load %arg7[%c0_16, %c0_17] : memref<32x32xf32, #tpu.memory_space<vmem>>, vector<32x32xf32>
    %cst_18 = arith.constant dense<0.000000e+00> : vector<128x32xf32>
    %23 = tpu.matmul %21, %22, %cst_18 {dimension_numbers = #tpu.dot_dimension_numbers<[1], [0], [0], [1], [0, 0, 1, 1], [], []>} : vector<128x32xf32>, vector<32x32xf32>, vector<128x32xf32> -> vector<128x32xf32>
    %c0_19 = arith.constant 0 : index
    %c0_20 = arith.constant 0 : index
    %24 = vector.load %arg8[%c0_19, %c0_20] : memref<1x32xf32, #tpu.memory_space<vmem>>, vector<1x32xf32>
    %25 = vector.broadcast %24 : vector<1x32xf32> to vector<128x32xf32>
    %26 = arith.addf %23, %25 : vector<128x32xf32>
    %cst_21 = arith.constant 0.000000e+00 : f32
    %27 = vector.broadcast %cst_21 : f32 to vector<128x32xf32>
    %28 = arith.cmpf ogt, %26, %27 : vector<128x32xf32>
    %cst_22 = arith.constant 0.00999999977 : f32
    %29 = vector.broadcast %cst_22 : f32 to vector<128x32xf32>
    %30 = arith.mulf %29, %26 : vector<128x32xf32>
    %31 = arith.select %28, %26, %30 : vector<128x32xi1>, vector<128x32xf32>
    %c0_23 = arith.constant 0 : index
    %c0_24 = arith.constant 0 : index
    %32 = vector.load %arg9[%c0_23, %c0_24] : memref<32x64xf32, #tpu.memory_space<vmem>>, vector<32x64xf32>
    %cst_25 = arith.constant dense<0.000000e+00> : vector<128x64xf32>
    %33 = tpu.matmul %31, %32, %cst_25 {dimension_numbers = #tpu.dot_dimension_numbers<[1], [0], [0], [1], [0, 0, 1, 1], [], []>} : vector<128x32xf32>, vector<32x64xf32>, vector<128x64xf32> -> vector<128x64xf32>
    %c0_26 = arith.constant 0 : index
    %c0_27 = arith.constant 0 : index
    %34 = vector.load %arg10[%c0_26, %c0_27] : memref<1x64xf32, #tpu.memory_space<vmem>>, vector<1x64xf32>
    %35 = vector.broadcast %34 : vector<1x64xf32> to vector<128x64xf32>
    %36 = arith.addf %33, %35 : vector<128x64xf32>
    %cst_28 = arith.constant 0.000000e+00 : f32
    %37 = vector.broadcast %cst_28 : f32 to vector<128x64xf32>
    %38 = arith.cmpf ogt, %36, %37 : vector<128x64xf32>
    %cst_29 = arith.constant 0.00999999977 : f32
    %39 = vector.broadcast %cst_29 : f32 to vector<128x64xf32>
    %40 = arith.mulf %39, %36 : vector<128x64xf32>
    %41 = arith.select %38, %36, %40 : vector<128x64xi1>, vector<128x64xf32>
    %42 = tpu.concatenate %20, %41 in 1 : vector<128x64xf32>, vector<128x64xf32> -> vector<128x128xf32>
    %c0_30 = arith.constant 0 : index
    %c0_31 = arith.constant 0 : index
    %43 = vector.load %arg11[%c0_30, %c0_31] : memref<128x128xf32, #tpu.memory_space<vmem>>, vector<128x128xf32>
    tpu.vector_store %arg11[%c0_30, %c0_31], %42 {strides = array<i32>} : memref<128x128xf32, #tpu.memory_space<vmem>>, vector<128x128xf32>,
    return
  }
  func.func @transform_0(%arg0: i32) -> (i32, i32) {
    %c0_i32 = arith.constant 0 : i32
    %c0_i32_0 = arith.constant 0 : i32
    return %arg0, %c0_i32 : i32, i32
  }
  func.func @transform_1(%arg0: i32) -> (i32, i32) {
    %c0_i32 = arith.constant 0 : i32
    %c0_i32_0 = arith.constant 0 : i32
    return %arg0, %c0_i32 : i32, i32
  }
  func.func @transform_2(%arg0: i32) -> (i32, i32) {
    %c0_i32 = arith.constant 0 : i32
    %c0_i32_0 = arith.constant 0 : i32
    %c0_i32_1 = arith.constant 0 : i32
    return %c0_i32, %c0_i32_0 : i32, i32
  }
  func.func @transform_3(%arg0: i32) -> (i32, i32) {
    %c0_i32 = arith.constant 0 : i32
    %c0_i32_0 = arith.constant 0 : i32
    %c0_i32_1 = arith.constant 0 : i32
    return %c0_i32, %c0_i32_0 : i32, i32
  }
  func.func @transform_4(%arg0: i32) -> (i32, i32) {
    %c0_i32 = arith.constant 0 : i32
    %c0_i32_0 = arith.constant 0 : i32
    %c0_i32_1 = arith.constant 0 : i32
    return %c0_i32, %c0_i32_0 : i32, i32
  }
  func.func @transform_5(%arg0: i32) -> (i32, i32) {
    %c0_i32 = arith.constant 0 : i32
    %c0_i32_0 = arith.constant 0 : i32
    %c0_i32_1 = arith.constant 0 : i32
    return %c0_i32, %c0_i32_0 : i32, i32
  }
  func.func @transform_6(%arg0: i32) -> (i32, i32) {
    %c0_i32 = arith.constant 0 : i32
    %c0_i32_0 = arith.constant 0 : i32
    %c0_i32_1 = arith.constant 0 : i32
    return %c0_i32, %c0_i32_0 : i32, i32
  }
  func.func @transform_7(%arg0: i32) -> (i32, i32) {
    %c0_i32 = arith.constant 0 : i32
    %c0_i32_0 = arith.constant 0 : i32
    %c0_i32_1 = arith.constant 0 : i32
    return %c0_i32, %c0_i32_0 : i32, i32
  }
  func.func @transform_8(%arg0: i32) -> (i32, i32) {
    %c0_i32 = arith.constant 0 : i32
    %c0_i32_0 = arith.constant 0 : i32
    %c0_i32_1 = arith.constant 0 : i32
    return %c0_i32, %c0_i32_0 : i32, i32
  }
  func.func @transform_9(%arg0: i32) -> (i32, i32) {
    %c0_i32 = arith.constant 0 : i32
    %c0_i32_0 = arith.constant 0 : i32
    %c0_i32_1 = arith.constant 0 : i32
    return %c0_i32, %c0_i32_0 : i32, i32
  }
  func.func @transform_10(%arg0: i32) -> (i32, i32) {
    %c0_i32 = arith.constant 0 : i32
    %c0_i32_0 = arith.constant 0 : i32
    return %arg0, %c0_i32 : i32, i32
  }
}

module attributes {stable_mosaic.version = 11 : i64} {
  func.func @_edge_kernel(%arg0: i32, %arg1: memref<128x32xf32, #tpu.memory_space<vmem>>, %arg2: memref<128x1xi32, #tpu.memory_space<vmem>>, %arg3: memref<128x1xi32, #tpu.memory_space<vmem>>, %arg4: memref<1x128xi32, #tpu.memory_space<vmem>>, %arg5: memref<128x128xf32, #tpu.memory_space<vmem>>, %arg6: memref<32x32xf32, #tpu.memory_space<vmem>>, %arg7: memref<1x32xf32, #tpu.memory_space<vmem>>, %arg8: memref<32x64xf32, #tpu.memory_space<vmem>>, %arg9: memref<1x64xf32, #tpu.memory_space<vmem>>, %arg10: memref<128x64xf32, #tpu.memory_space<vmem>>, %arg11: memref<128x64xf32, #tpu.memory_space<vmem>>, %arg12: memref<64x64xf32, #tpu.memory_space<vmem>>, %arg13: memref<1x64xf32, #tpu.memory_space<vmem>>, %arg14: memref<64x32xf32, #tpu.memory_space<vmem>>, %arg15: memref<1x32xf32, #tpu.memory_space<vmem>>, %arg16: memref<128x32xf32, #tpu.memory_space<vmem>>, %arg17: memref<128x64xf32, #tpu.memory_space<vmem>>) attributes {dimension_semantics = [#tpu.dimension_semantics<arbitrary>], iteration_bounds = array<i64: 1>, scalar_prefetch = 0 : i64, scratch_operands = 0 : i64, tpu.core_type = #tpu.core_type<tc>, window_params = [{transform_indices = @transform_0, window_bounds = array<i64: 128, 32>}, {transform_indices = @transform_1, window_bounds = array<i64: 128, 1>}, {transform_indices = @transform_2, window_bounds = array<i64: 128, 1>}, {transform_indices = @transform_3, window_bounds = array<i64: 1, 128>}, {pipeline_mode = #tpu.pipeline_mode<synchronous>, transform_indices = @transform_4, window_bounds = array<i64: 128, 128>}, {pipeline_mode = #tpu.pipeline_mode<synchronous>, transform_indices = @transform_5, window_bounds = array<i64: 32, 32>}, {pipeline_mode = #tpu.pipeline_mode<synchronous>, transform_indices = @transform_6, window_bounds = array<i64: 1, 32>}, {pipeline_mode = #tpu.pipeline_mode<synchronous>, transform_indices = @transform_7, window_bounds = array<i64: 32, 64>}, {pipeline_mode = #tpu.pipeline_mode<synchronous>, transform_indices = @transform_8, window_bounds = array<i64: 1, 64>}, {pipeline_mode = #tpu.pipeline_mode<synchronous>, transform_indices = @transform_9, window_bounds = array<i64: 128, 64>}, {pipeline_mode = #tpu.pipeline_mode<synchronous>, transform_indices = @transform_10, window_bounds = array<i64: 128, 64>}, {pipeline_mode = #tpu.pipeline_mode<synchronous>, transform_indices = @transform_11, window_bounds = array<i64: 64, 64>}, {pipeline_mode = #tpu.pipeline_mode<synchronous>, transform_indices = @transform_12, window_bounds = array<i64: 1, 64>}, {pipeline_mode = #tpu.pipeline_mode<synchronous>, transform_indices = @transform_13, window_bounds = array<i64: 64, 32>}, {pipeline_mode = #tpu.pipeline_mode<synchronous>, transform_indices = @transform_14, window_bounds = array<i64: 1, 32>}, {transform_indices = @transform_15, window_bounds = array<i64: 128, 32>}, {pipeline_mode = #tpu.pipeline_mode<synchronous>, transform_indices = @transform_16, window_bounds = array<i64: 128, 64>}]} {
    %c0_i32 = arith.constant 0 : i32
    %0 = arith.cmpi eq, %arg0, %c0_i32 : i32
    %1 = arith.extui %0 : i1 to i32
    %c0_i32_0 = arith.constant 0 : i32
    %2 = arith.cmpi ne, %1, %c0_i32_0 : i32
    scf.if %2 {
      %cst_53 = arith.constant 0.000000e+00 : f32
      %78 = vector.broadcast %cst_53 : f32 to vector<128x64xf32>
      %c0_54 = arith.constant 0 : index
      %c0_55 = arith.constant 0 : index
      %79 = vector.load %arg17[%c0_54, %c0_55] : memref<128x64xf32, #tpu.memory_space<vmem>>, vector<128x64xf32>
      tpu.vector_store %arg17[%c0_54, %c0_55], %78 {strides = array<i32>} : memref<128x64xf32, #tpu.memory_space<vmem>>, vector<128x64xf32>,
    } else {
    }
    %c0 = arith.constant 0 : index
    %c0_1 = arith.constant 0 : index
    %3 = vector.load %arg1[%c0, %c0_1] : memref<128x32xf32, #tpu.memory_space<vmem>>, vector<128x32xf32>
    %c0_2 = arith.constant 0 : index
    %c0_3 = arith.constant 0 : index
    %4 = vector.load %arg6[%c0_2, %c0_3] : memref<32x32xf32, #tpu.memory_space<vmem>>, vector<32x32xf32>
    %cst = arith.constant dense<0.000000e+00> : vector<128x32xf32>
    %5 = tpu.matmul %3, %4, %cst {dimension_numbers = #tpu.dot_dimension_numbers<[1], [0], [0], [1], [0, 0, 1, 1], [], []>} : vector<128x32xf32>, vector<32x32xf32>, vector<128x32xf32> -> vector<128x32xf32>
    %c0_4 = arith.constant 0 : index
    %c0_5 = arith.constant 0 : index
    %6 = vector.load %arg7[%c0_4, %c0_5] : memref<1x32xf32, #tpu.memory_space<vmem>>, vector<1x32xf32>
    %7 = vector.broadcast %6 : vector<1x32xf32> to vector<128x32xf32>
    %8 = arith.addf %5, %7 : vector<128x32xf32>
    %cst_6 = arith.constant 0.000000e+00 : f32
    %9 = vector.broadcast %cst_6 : f32 to vector<128x32xf32>
    %10 = arith.cmpf ogt, %8, %9 : vector<128x32xf32>
    %cst_7 = arith.constant 0.00999999977 : f32
    %11 = vector.broadcast %cst_7 : f32 to vector<128x32xf32>
    %12 = arith.mulf %11, %8 : vector<128x32xf32>
    %13 = arith.select %10, %8, %12 : vector<128x32xi1>, vector<128x32xf32>
    %c0_8 = arith.constant 0 : index
    %c0_9 = arith.constant 0 : index
    %14 = vector.load %arg8[%c0_8, %c0_9] : memref<32x64xf32, #tpu.memory_space<vmem>>, vector<32x64xf32>
    %cst_10 = arith.constant dense<0.000000e+00> : vector<128x64xf32>
    %15 = tpu.matmul %13, %14, %cst_10 {dimension_numbers = #tpu.dot_dimension_numbers<[1], [0], [0], [1], [0, 0, 1, 1], [], []>} : vector<128x32xf32>, vector<32x64xf32>, vector<128x64xf32> -> vector<128x64xf32>
    %c0_11 = arith.constant 0 : index
    %c0_12 = arith.constant 0 : index
    %16 = vector.load %arg9[%c0_11, %c0_12] : memref<1x64xf32, #tpu.memory_space<vmem>>, vector<1x64xf32>
    %17 = vector.broadcast %16 : vector<1x64xf32> to vector<128x64xf32>
    %18 = arith.addf %15, %17 : vector<128x64xf32>
    %cst_13 = arith.constant 0.000000e+00 : f32
    %19 = vector.broadcast %cst_13 : f32 to vector<128x64xf32>
    %20 = arith.cmpf ogt, %18, %19 : vector<128x64xf32>
    %cst_14 = arith.constant 0.00999999977 : f32
    %21 = vector.broadcast %cst_14 : f32 to vector<128x64xf32>
    %22 = arith.mulf %21, %18 : vector<128x64xf32>
    %23 = arith.select %20, %18, %22 : vector<128x64xi1>, vector<128x64xf32>
    %c0_15 = arith.constant 0 : index
    %c0_16 = arith.constant 0 : index
    %24 = vector.load %arg5[%c0_15, %c0_16] : memref<128x128xf32, #tpu.memory_space<vmem>>, vector<128x128xf32>
    %25 = tpu.iota {dimensions = array<i32: 1>} : vector<128x128xi32>
    %c0_17 = arith.constant 0 : index
    %c0_18 = arith.constant 0 : index
    %26 = vector.load %arg2[%c0_17, %c0_18] : memref<128x1xi32, #tpu.memory_space<vmem>>, vector<128x1xi32>
    %27 = vector.broadcast %26 : vector<128x1xi32> to vector<128x128xi32>
    %28 = arith.cmpi eq, %25, %27 : vector<128x128xi32>
    %29 = arith.extui %28 : vector<128x128xi1> to vector<128x128xi32>
    %30 = arith.sitofp %29 : vector<128x128xi32> to vector<128x128xf32>
    %c0_19 = arith.constant 0 : index
    %c0_20 = arith.constant 0 : index
    %31 = vector.load %arg3[%c0_19, %c0_20] : memref<128x1xi32, #tpu.memory_space<vmem>>, vector<128x1xi32>
    %32 = vector.broadcast %31 : vector<128x1xi32> to vector<128x128xi32>
    %33 = arith.cmpi eq, %25, %32 : vector<128x128xi32>
    %34 = arith.extui %33 : vector<128x128xi1> to vector<128x128xi32>
    %35 = arith.sitofp %34 : vector<128x128xi32> to vector<128x128xf32>
    %cst_21 = arith.constant dense<0.000000e+00> : vector<128x128xf32>
    %36 = tpu.matmul %30, %24, %cst_21 {dimension_numbers = #tpu.dot_dimension_numbers<[1], [0], [0], [1], [0, 0, 1, 1], [], []>} : vector<128x128xf32>, vector<128x128xf32>, vector<128x128xf32> -> vector<128x128xf32>
    %cst_22 = arith.constant dense<0.000000e+00> : vector<128x128xf32>
    %37 = tpu.matmul %35, %24, %cst_22 {dimension_numbers = #tpu.dot_dimension_numbers<[1], [0], [0], [1], [0, 0, 1, 1], [], []>} : vector<128x128xf32>, vector<128x128xf32>, vector<128x128xf32> -> vector<128x128xf32>
    %c0_23 = arith.constant 0 : index
    %c0_24 = arith.constant 0 : index
    %38 = vector.load %arg10[%c0_23, %c0_24] : memref<128x64xf32, #tpu.memory_space<vmem>>, vector<128x64xf32>
    %cst_25 = arith.constant dense<0.000000e+00> : vector<128x64xf32>
    %39 = tpu.matmul %36, %38, %cst_25 {dimension_numbers = #tpu.dot_dimension_numbers<[1], [0], [0], [1], [0, 0, 1, 1], [], []>} : vector<128x128xf32>, vector<128x64xf32>, vector<128x64xf32> -> vector<128x64xf32>
    %c0_26 = arith.constant 0 : index
    %c0_27 = arith.constant 0 : index
    %40 = vector.load %arg11[%c0_26, %c0_27] : memref<128x64xf32, #tpu.memory_space<vmem>>, vector<128x64xf32>
    %cst_28 = arith.constant dense<0.000000e+00> : vector<128x64xf32>
    %41 = tpu.matmul %37, %40, %cst_28 {dimension_numbers = #tpu.dot_dimension_numbers<[1], [0], [0], [1], [0, 0, 1, 1], [], []>} : vector<128x128xf32>, vector<128x64xf32>, vector<128x64xf32> -> vector<128x64xf32>
    %42 = arith.addf %39, %41 : vector<128x64xf32>
    %c0_29 = arith.constant 0 : index
    %c0_30 = arith.constant 0 : index
    %43 = vector.load %arg12[%c0_29, %c0_30] : memref<64x64xf32, #tpu.memory_space<vmem>>, vector<64x64xf32>
    %cst_31 = arith.constant dense<0.000000e+00> : vector<128x64xf32>
    %44 = tpu.matmul %23, %43, %cst_31 {dimension_numbers = #tpu.dot_dimension_numbers<[1], [0], [0], [1], [0, 0, 1, 1], [], []>} : vector<128x64xf32>, vector<64x64xf32>, vector<128x64xf32> -> vector<128x64xf32>
    %45 = arith.addf %42, %44 : vector<128x64xf32>
    %c0_32 = arith.constant 0 : index
    %c0_33 = arith.constant 0 : index
    %46 = vector.load %arg13[%c0_32, %c0_33] : memref<1x64xf32, #tpu.memory_space<vmem>>, vector<1x64xf32>
    %47 = vector.broadcast %46 : vector<1x64xf32> to vector<128x64xf32>
    %48 = arith.addf %45, %47 : vector<128x64xf32>
    %cst_34 = arith.constant 0.000000e+00 : f32
    %49 = vector.broadcast %cst_34 : f32 to vector<128x64xf32>
    %50 = arith.cmpf ogt, %48, %49 : vector<128x64xf32>
    %cst_35 = arith.constant 0.00999999977 : f32
    %51 = vector.broadcast %cst_35 : f32 to vector<128x64xf32>
    %52 = arith.mulf %51, %48 : vector<128x64xf32>
    %53 = arith.select %50, %48, %52 : vector<128x64xi1>, vector<128x64xf32>
    %c0_36 = arith.constant 0 : index
    %c0_37 = arith.constant 0 : index
    %54 = vector.load %arg14[%c0_36, %c0_37] : memref<64x32xf32, #tpu.memory_space<vmem>>, vector<64x32xf32>
    %cst_38 = arith.constant dense<0.000000e+00> : vector<128x32xf32>
    %55 = tpu.matmul %53, %54, %cst_38 {dimension_numbers = #tpu.dot_dimension_numbers<[1], [0], [0], [1], [0, 0, 1, 1], [], []>} : vector<128x64xf32>, vector<64x32xf32>, vector<128x32xf32> -> vector<128x32xf32>
    %c0_39 = arith.constant 0 : index
    %c0_40 = arith.constant 0 : index
    %56 = vector.load %arg15[%c0_39, %c0_40] : memref<1x32xf32, #tpu.memory_space<vmem>>, vector<1x32xf32>
    %57 = vector.broadcast %56 : vector<1x32xf32> to vector<128x32xf32>
    %58 = arith.addf %55, %57 : vector<128x32xf32>
    %cst_41 = arith.constant 0.000000e+00 : f32
    %59 = vector.broadcast %cst_41 : f32 to vector<128x32xf32>
    %60 = arith.cmpf ogt, %58, %59 : vector<128x32xf32>
    %cst_42 = arith.constant 0.00999999977 : f32
    %61 = vector.broadcast %cst_42 : f32 to vector<128x32xf32>
    %62 = arith.mulf %61, %58 : vector<128x32xf32>
    %63 = arith.select %60, %58, %62 : vector<128x32xi1>, vector<128x32xf32>
    %64 = arith.addf %63, %3 : vector<128x32xf32>
    %c0_43 = arith.constant 0 : index
    %c0_44 = arith.constant 0 : index
    %65 = vector.load %arg16[%c0_43, %c0_44] : memref<128x32xf32, #tpu.memory_space<vmem>>, vector<128x32xf32>
    tpu.vector_store %arg16[%c0_43, %c0_44], %64 {strides = array<i32>} : memref<128x32xf32, #tpu.memory_space<vmem>>, vector<128x32xf32>,
    %cst_45 = arith.constant 1.000000e+00 : f32
    %66 = vector.broadcast %cst_45 : f32 to vector<128x32xf32>
    %67 = tpu.concatenate %63, %66 in 1 : vector<128x32xf32>, vector<128x32xf32> -> vector<128x64xf32>
    %68 = tpu.iota {dimensions = array<i32: 0>} : vector<128x128xi32>
    %c0_46 = arith.constant 0 : index
    %c0_47 = arith.constant 0 : index
    %69 = vector.load %arg4[%c0_46, %c0_47] : memref<1x128xi32, #tpu.memory_space<vmem>>, vector<1x128xi32>
    %70 = vector.broadcast %69 : vector<1x128xi32> to vector<128x128xi32>
    %71 = arith.cmpi eq, %68, %70 : vector<128x128xi32>
    %72 = arith.extui %71 : vector<128x128xi1> to vector<128x128xi32>
    %73 = arith.sitofp %72 : vector<128x128xi32> to vector<128x128xf32>
    %c0_48 = arith.constant 0 : index
    %c0_49 = arith.constant 0 : index
    %74 = vector.load %arg17[%c0_48, %c0_49] : memref<128x64xf32, #tpu.memory_space<vmem>>, vector<128x64xf32>
    %cst_50 = arith.constant dense<0.000000e+00> : vector<128x64xf32>
    %75 = tpu.matmul %73, %67, %cst_50 {dimension_numbers = #tpu.dot_dimension_numbers<[1], [0], [0], [1], [0, 0, 1, 1], [], []>} : vector<128x128xf32>, vector<128x64xf32>, vector<128x64xf32> -> vector<128x64xf32>
    %76 = arith.addf %74, %75 : vector<128x64xf32>
    %c0_51 = arith.constant 0 : index
    %c0_52 = arith.constant 0 : index
    %77 = vector.load %arg17[%c0_51, %c0_52] : memref<128x64xf32, #tpu.memory_space<vmem>>, vector<128x64xf32>
    tpu.vector_store %arg17[%c0_51, %c0_52], %76 {strides = array<i32>} : memref<128x64xf32, #tpu.memory_space<vmem>>, vector<128x64xf32>,
    return
  }
  func.func @transform_0(%arg0: i32) -> (i32, i32) {
    %c0_i32 = arith.constant 0 : i32
    %c0_i32_0 = arith.constant 0 : i32
    return %arg0, %c0_i32 : i32, i32
  }
  func.func @transform_1(%arg0: i32) -> (i32, i32) {
    %c0_i32 = arith.constant 0 : i32
    %c0_i32_0 = arith.constant 0 : i32
    return %arg0, %c0_i32 : i32, i32
  }
  func.func @transform_2(%arg0: i32) -> (i32, i32) {
    %c0_i32 = arith.constant 0 : i32
    %c0_i32_0 = arith.constant 0 : i32
    return %arg0, %c0_i32 : i32, i32
  }
  func.func @transform_3(%arg0: i32) -> (i32, i32) {
    %c0_i32 = arith.constant 0 : i32
    %c0_i32_0 = arith.constant 0 : i32
    return %c0_i32, %arg0 : i32, i32
  }
  func.func @transform_4(%arg0: i32) -> (i32, i32) {
    %c0_i32 = arith.constant 0 : i32
    %c0_i32_0 = arith.constant 0 : i32
    %c0_i32_1 = arith.constant 0 : i32
    return %c0_i32, %c0_i32_0 : i32, i32
  }
  func.func @transform_5(%arg0: i32) -> (i32, i32) {
    %c0_i32 = arith.constant 0 : i32
    %c0_i32_0 = arith.constant 0 : i32
    %c0_i32_1 = arith.constant 0 : i32
    return %c0_i32, %c0_i32_0 : i32, i32
  }
  func.func @transform_6(%arg0: i32) -> (i32, i32) {
    %c0_i32 = arith.constant 0 : i32
    %c0_i32_0 = arith.constant 0 : i32
    %c0_i32_1 = arith.constant 0 : i32
    return %c0_i32, %c0_i32_0 : i32, i32
  }
  func.func @transform_7(%arg0: i32) -> (i32, i32) {
    %c0_i32 = arith.constant 0 : i32
    %c0_i32_0 = arith.constant 0 : i32
    %c0_i32_1 = arith.constant 0 : i32
    return %c0_i32, %c0_i32_0 : i32, i32
  }
  func.func @transform_8(%arg0: i32) -> (i32, i32) {
    %c0_i32 = arith.constant 0 : i32
    %c0_i32_0 = arith.constant 0 : i32
    %c0_i32_1 = arith.constant 0 : i32
    return %c0_i32, %c0_i32_0 : i32, i32
  }
  func.func @transform_9(%arg0: i32) -> (i32, i32) {
    %c0_i32 = arith.constant 0 : i32
    %c0_i32_0 = arith.constant 0 : i32
    %c0_i32_1 = arith.constant 0 : i32
    return %c0_i32, %c0_i32_0 : i32, i32
  }
  func.func @transform_10(%arg0: i32) -> (i32, i32) {
    %c0_i32 = arith.constant 0 : i32
    %c0_i32_0 = arith.constant 0 : i32
    %c0_i32_1 = arith.constant 0 : i32
    return %c0_i32, %c0_i32_0 : i32, i32
  }
  func.func @transform_11(%arg0: i32) -> (i32, i32) {
    %c0_i32 = arith.constant 0 : i32
    %c0_i32_0 = arith.constant 0 : i32
    %c0_i32_1 = arith.constant 0 : i32
    return %c0_i32, %c0_i32_0 : i32, i32
  }
  func.func @transform_12(%arg0: i32) -> (i32, i32) {
    %c0_i32 = arith.constant 0 : i32
    %c0_i32_0 = arith.constant 0 : i32
    %c0_i32_1 = arith.constant 0 : i32
    return %c0_i32, %c0_i32_0 : i32, i32
  }
  func.func @transform_13(%arg0: i32) -> (i32, i32) {
    %c0_i32 = arith.constant 0 : i32
    %c0_i32_0 = arith.constant 0 : i32
    %c0_i32_1 = arith.constant 0 : i32
    return %c0_i32, %c0_i32_0 : i32, i32
  }
  func.func @transform_14(%arg0: i32) -> (i32, i32) {
    %c0_i32 = arith.constant 0 : i32
    %c0_i32_0 = arith.constant 0 : i32
    %c0_i32_1 = arith.constant 0 : i32
    return %c0_i32, %c0_i32_0 : i32, i32
  }
  func.func @transform_15(%arg0: i32) -> (i32, i32) {
    %c0_i32 = arith.constant 0 : i32
    %c0_i32_0 = arith.constant 0 : i32
    return %arg0, %c0_i32 : i32, i32
  }
  func.func @transform_16(%arg0: i32) -> (i32, i32) {
    %c0_i32 = arith.constant 0 : i32
    %c0_i32_0 = arith.constant 0 : i32
    %c0_i32_1 = arith.constant 0 : i32
    return %c0_i32, %c0_i32_0 : i32, i32
  }
}

module attributes {stable_mosaic.version = 11 : i64} {
  func.func @_graph_kernel(%arg0: i32, %arg1: memref<8x128xf32, #tpu.memory_space<vmem>>, %arg2: memref<8x1xf32, #tpu.memory_space<vmem>>, %arg3: memref<8x1xf32, #tpu.memory_space<vmem>>, %arg4: memref<128x1xi32, #tpu.memory_space<vmem>>, %arg5: memref<128x32xf32, #tpu.memory_space<vmem>>, %arg6: memref<128x64xf32, #tpu.memory_space<vmem>>, %arg7: memref<1x64xf32, #tpu.memory_space<vmem>>, %arg8: memref<64x32xf32, #tpu.memory_space<vmem>>, %arg9: memref<1x32xf32, #tpu.memory_space<vmem>>, %arg10: memref<128x32xf32, #tpu.memory_space<vmem>>) attributes {dimension_semantics = [#tpu.dimension_semantics<parallel>], iteration_bounds = array<i64: 1>, scalar_prefetch = 0 : i64, scratch_operands = 0 : i64, tpu.core_type = #tpu.core_type<tc>, window_params = [{pipeline_mode = #tpu.pipeline_mode<synchronous>, transform_indices = @transform_0, window_bounds = array<i64: 8, 128>}, {pipeline_mode = #tpu.pipeline_mode<synchronous>, transform_indices = @transform_1, window_bounds = array<i64: 8, 1>}, {pipeline_mode = #tpu.pipeline_mode<synchronous>, transform_indices = @transform_2, window_bounds = array<i64: 8, 1>}, {transform_indices = @transform_3, window_bounds = array<i64: 128, 1>}, {transform_indices = @transform_4, window_bounds = array<i64: 128, 32>}, {pipeline_mode = #tpu.pipeline_mode<synchronous>, transform_indices = @transform_5, window_bounds = array<i64: 128, 64>}, {pipeline_mode = #tpu.pipeline_mode<synchronous>, transform_indices = @transform_6, window_bounds = array<i64: 1, 64>}, {pipeline_mode = #tpu.pipeline_mode<synchronous>, transform_indices = @transform_7, window_bounds = array<i64: 64, 32>}, {pipeline_mode = #tpu.pipeline_mode<synchronous>, transform_indices = @transform_8, window_bounds = array<i64: 1, 32>}, {transform_indices = @transform_9, window_bounds = array<i64: 128, 32>}]} {
    %c0 = arith.constant 0 : index
    %c0_0 = arith.constant 0 : index
    %0 = vector.load %arg1[%c0, %c0_0] : memref<8x128xf32, #tpu.memory_space<vmem>>, vector<8x128xf32>
    %c0_1 = arith.constant 0 : index
    %c0_2 = arith.constant 0 : index
    %1 = vector.load %arg2[%c0_1, %c0_2] : memref<8x1xf32, #tpu.memory_space<vmem>>, vector<8x1xf32>
    %cst = arith.constant 1.000000e+00 : f32
    %2 = vector.broadcast %cst : f32 to vector<8x1xf32>
    %3 = arith.maximumf %1, %2 : vector<8x1xf32>
    %4 = tpu.reciprocal %3 {approx = true} : vector<8x1xf32> -> vector<8x1xf32>
    %c0_3 = arith.constant 0 : index
    %c0_4 = arith.constant 0 : index
    %5 = vector.load %arg3[%c0_3, %c0_4] : memref<8x1xf32, #tpu.memory_space<vmem>>, vector<8x1xf32>
    %cst_5 = arith.constant 1.000000e+00 : f32
    %6 = vector.broadcast %cst_5 : f32 to vector<8x1xf32>
    %7 = arith.maximumf %5, %6 : vector<8x1xf32>
    %8 = tpu.reciprocal %7 {approx = true} : vector<8x1xf32> -> vector<8x1xf32>
    %9 = tpu.iota {dimensions = array<i32: 1>} : vector<8x128xi32>
    %c32_i32 = arith.constant 32 : i32
    %10 = vector.broadcast %c32_i32 : i32 to vector<8x128xi32>
    %11 = arith.cmpi slt, %9, %10 : vector<8x128xi32>
    %c64_i32 = arith.constant 64 : i32
    %12 = vector.broadcast %c64_i32 : i32 to vector<8x128xi32>
    %13 = arith.cmpi slt, %9, %12 : vector<8x128xi32>
    %14 = vector.shape_cast %8 : vector<8x1xf32> to vector<8x1xf32>
    %15 = vector.broadcast %14 : vector<8x1xf32> to vector<8x128xf32>
    %16 = vector.shape_cast %4 : vector<8x1xf32> to vector<8x1xf32>
    %17 = vector.broadcast %16 : vector<8x1xf32> to vector<8x128xf32>
    %18 = arith.select %13, %15, %17 : vector<8x128xi1>, vector<8x128xf32>
    %19 = vector.shape_cast %4 : vector<8x1xf32> to vector<8x1xf32>
    %20 = vector.broadcast %19 : vector<8x1xf32> to vector<8x128xf32>
    %21 = arith.select %11, %20, %18 : vector<8x128xi1>, vector<8x128xf32>
    %22 = arith.mulf %0, %21 : vector<8x128xf32>
    %c0_6 = arith.constant 0 : index
    %c0_7 = arith.constant 0 : index
    %23 = vector.load %arg6[%c0_6, %c0_7] : memref<128x64xf32, #tpu.memory_space<vmem>>, vector<128x64xf32>
    %cst_8 = arith.constant dense<0.000000e+00> : vector<8x64xf32>
    %24 = tpu.matmul %22, %23, %cst_8 {dimension_numbers = #tpu.dot_dimension_numbers<[1], [0], [0], [1], [0, 0, 1, 1], [], []>} : vector<8x128xf32>, vector<128x64xf32>, vector<8x64xf32> -> vector<8x64xf32>
    %c0_9 = arith.constant 0 : index
    %c0_10 = arith.constant 0 : index
    %25 = vector.load %arg7[%c0_9, %c0_10] : memref<1x64xf32, #tpu.memory_space<vmem>>, vector<1x64xf32>
    %26 = vector.broadcast %25 : vector<1x64xf32> to vector<8x64xf32>
    %27 = arith.addf %24, %26 : vector<8x64xf32>
    %cst_11 = arith.constant 0.000000e+00 : f32
    %28 = vector.broadcast %cst_11 : f32 to vector<8x64xf32>
    %29 = arith.cmpf ogt, %27, %28 : vector<8x64xf32>
    %cst_12 = arith.constant 0.00999999977 : f32
    %30 = vector.broadcast %cst_12 : f32 to vector<8x64xf32>
    %31 = arith.mulf %30, %27 : vector<8x64xf32>
    %32 = arith.select %29, %27, %31 : vector<8x64xi1>, vector<8x64xf32>
    %c0_13 = arith.constant 0 : index
    %c0_14 = arith.constant 0 : index
    %33 = vector.load %arg8[%c0_13, %c0_14] : memref<64x32xf32, #tpu.memory_space<vmem>>, vector<64x32xf32>
    %cst_15 = arith.constant dense<0.000000e+00> : vector<8x32xf32>
    %34 = tpu.matmul %32, %33, %cst_15 {dimension_numbers = #tpu.dot_dimension_numbers<[1], [0], [0], [1], [0, 0, 1, 1], [], []>} : vector<8x64xf32>, vector<64x32xf32>, vector<8x32xf32> -> vector<8x32xf32>
    %c0_16 = arith.constant 0 : index
    %c0_17 = arith.constant 0 : index
    %35 = vector.load %arg9[%c0_16, %c0_17] : memref<1x32xf32, #tpu.memory_space<vmem>>, vector<1x32xf32>
    %36 = vector.broadcast %35 : vector<1x32xf32> to vector<8x32xf32>
    %37 = arith.addf %34, %36 : vector<8x32xf32>
    %cst_18 = arith.constant 0.000000e+00 : f32
    %38 = vector.broadcast %cst_18 : f32 to vector<8x32xf32>
    %39 = arith.cmpf ogt, %37, %38 : vector<8x32xf32>
    %cst_19 = arith.constant 0.00999999977 : f32
    %40 = vector.broadcast %cst_19 : f32 to vector<8x32xf32>
    %41 = arith.mulf %40, %37 : vector<8x32xf32>
    %42 = arith.select %39, %37, %41 : vector<8x32xi1>, vector<8x32xf32>
    %43 = tpu.iota {dimensions = array<i32: 1>} : vector<128x8xi32>
    %c0_20 = arith.constant 0 : index
    %c0_21 = arith.constant 0 : index
    %44 = vector.load %arg4[%c0_20, %c0_21] : memref<128x1xi32, #tpu.memory_space<vmem>>, vector<128x1xi32>
    %45 = vector.broadcast %44 : vector<128x1xi32> to vector<128x8xi32>
    %46 = arith.cmpi eq, %43, %45 : vector<128x8xi32>
    %47 = arith.extui %46 : vector<128x8xi1> to vector<128x8xi32>
    %48 = arith.sitofp %47 : vector<128x8xi32> to vector<128x8xf32>
    %cst_22 = arith.constant dense<0.000000e+00> : vector<128x32xf32>
    %49 = tpu.matmul %48, %42, %cst_22 {dimension_numbers = #tpu.dot_dimension_numbers<[1], [0], [0], [1], [0, 0, 1, 1], [], []>} : vector<128x8xf32>, vector<8x32xf32>, vector<128x32xf32> -> vector<128x32xf32>
    %c0_23 = arith.constant 0 : index
    %c0_24 = arith.constant 0 : index
    %50 = vector.load %arg5[%c0_23, %c0_24] : memref<128x32xf32, #tpu.memory_space<vmem>>, vector<128x32xf32>
    %51 = arith.addf %49, %50 : vector<128x32xf32>
    %c0_25 = arith.constant 0 : index
    %c0_26 = arith.constant 0 : index
    %52 = vector.load %arg10[%c0_25, %c0_26] : memref<128x32xf32, #tpu.memory_space<vmem>>, vector<128x32xf32>
    tpu.vector_store %arg10[%c0_25, %c0_26], %51 {strides = array<i32>} : memref<128x32xf32, #tpu.memory_space<vmem>>, vector<128x32xf32>,
    return
  }
  func.func @transform_0(%arg0: i32) -> (i32, i32) {
    %c0_i32 = arith.constant 0 : i32
    %c0_i32_0 = arith.constant 0 : i32
    %c0_i32_1 = arith.constant 0 : i32
    return %c0_i32, %c0_i32_0 : i32, i32
  }
  func.func @transform_1(%arg0: i32) -> (i32, i32) {
    %c0_i32 = arith.constant 0 : i32
    %c0_i32_0 = arith.constant 0 : i32
    %c0_i32_1 = arith.constant 0 : i32
    return %c0_i32, %c0_i32_0 : i32, i32
  }
  func.func @transform_2(%arg0: i32) -> (i32, i32) {
    %c0_i32 = arith.constant 0 : i32
    %c0_i32_0 = arith.constant 0 : i32
    %c0_i32_1 = arith.constant 0 : i32
    return %c0_i32, %c0_i32_0 : i32, i32
  }
  func.func @transform_3(%arg0: i32) -> (i32, i32) {
    %c0_i32 = arith.constant 0 : i32
    %c0_i32_0 = arith.constant 0 : i32
    return %arg0, %c0_i32 : i32, i32
  }
  func.func @transform_4(%arg0: i32) -> (i32, i32) {
    %c0_i32 = arith.constant 0 : i32
    %c0_i32_0 = arith.constant 0 : i32
    return %arg0, %c0_i32 : i32, i32
  }
  func.func @transform_5(%arg0: i32) -> (i32, i32) {
    %c0_i32 = arith.constant 0 : i32
    %c0_i32_0 = arith.constant 0 : i32
    %c0_i32_1 = arith.constant 0 : i32
    return %c0_i32, %c0_i32_0 : i32, i32
  }
  func.func @transform_6(%arg0: i32) -> (i32, i32) {
    %c0_i32 = arith.constant 0 : i32
    %c0_i32_0 = arith.constant 0 : i32
    %c0_i32_1 = arith.constant 0 : i32
    return %c0_i32, %c0_i32_0 : i32, i32
  }
  func.func @transform_7(%arg0: i32) -> (i32, i32) {
    %c0_i32 = arith.constant 0 : i32
    %c0_i32_0 = arith.constant 0 : i32
    %c0_i32_1 = arith.constant 0 : i32
    return %c0_i32, %c0_i32_0 : i32, i32
  }
  func.func @transform_8(%arg0: i32) -> (i32, i32) {
    %c0_i32 = arith.constant 0 : i32
    %c0_i32_0 = arith.constant 0 : i32
    %c0_i32_1 = arith.constant 0 : i32
    return %c0_i32, %c0_i32_0 : i32, i32
  }
  func.func @transform_9(%arg0: i32) -> (i32, i32) {
    %c0_i32 = arith.constant 0 : i32
    %c0_i32_0 = arith.constant 0 : i32
    return %arg0, %c0_i32 : i32, i32
  }
}

</mosaic_0001>

<llo_original>
// kernel: megnet_layer_forward.7
$region0: #{megnet_layer_forward.7}
  #allocation0 [shape = 'u32[]', space=smem, size = 0x4, offset = 0x4, fixed_abs, tag = 'smem constant byte address 0x4 - core index']
  #allocation1 [shape = 'u32[144,128]{1,0:T(1,128)}', space=vmem, size = 0x12000, scoped, tag = 'internal scratch']
  %s0 = inlined_call_operand.vmem [shape: f32[8,128], index: 0, kind: input, shape index: {}]
  %s1 = inlined_call_operand.vmem [shape: f32[8,1], index: 1, kind: input, shape index: {}]
  %s2 = inlined_call_operand.vmem [shape: f32[8,1], index: 2, kind: input, shape index: {}]
  %s3 = inlined_call_operand.vmem [shape: s32[128,1], index: 3, kind: input, shape index: {}]
  %s4 = inlined_call_operand.vmem [shape: f32[128,32], index: 4, kind: input, shape index: {}]
  %s5 = inlined_call_operand.vmem [shape: f32[128,64], index: 5, kind: input, shape index: {}]
  %s6 = inlined_call_operand.vmem [shape: f32[1,64], index: 6, kind: input, shape index: {}]
  %s7 = inlined_call_operand.vmem [shape: f32[64,32], index: 7, kind: input, shape index: {}]
  %s8 = inlined_call_operand.vmem [shape: f32[1,32], index: 8, kind: input, shape index: {}]
  %s9 = inlined_call_operand.vmem [shape: f32[128,32], index: 9, kind: output, shape index: {}]
  %s10 = sld [smem:[#allocation0]]
  $region46: #{megnet_layer_forward.7} parent=0
    _
  %s12 = ssub.s32 1, %s10
  %s13 = scalar_select 0, %s12, %s10
  // Predicated region
  $region2: #{megnet_layer_forward.7} parent=0 // pred_check
    _
  $region3: #{megnet_layer_forward.7} parent=0 // pred_check_branch
    %15 = sbr.rel (0) target = $region5
  $region4: #{megnet_layer_forward.7} parent=0 // pred_region
    _
  $region5: #{megnet_layer_forward.7} parent=0 // pred_fallthru
    _
  // Predicated region
  $region6: #{megnet_layer_forward.7} parent=0 // pred_check
    _
  $region7: #{megnet_layer_forward.7} parent=0 // pred_check_branch
    %17 = sbr.rel (0) target = $region9
  $region8: #{megnet_layer_forward.7} parent=0 // pred_region
    _
  $region9: #{megnet_layer_forward.7} parent=0 // pred_fallthru
    _
  // Predicated region
  $region10: #{megnet_layer_forward.7} parent=0 // pred_check
    _
  $region11: #{megnet_layer_forward.7} parent=0 // pred_check_branch
    %19 = sbr.rel (0) target = $region13
  $region12: #{megnet_layer_forward.7} parent=0 // pred_region
    _
  $region13: #{megnet_layer_forward.7} parent=0 // pred_fallthru
    _
  // Predicated region
  $region14: #{megnet_layer_forward.7} parent=0 // pred_check
    _
  $region15: #{megnet_layer_forward.7} parent=0 // pred_check_branch
    %21 = sbr.rel (0) target = $region17
  $region16: #{megnet_layer_forward.7} parent=0 // pred_region
    _
  $region17: #{megnet_layer_forward.7} parent=0 // pred_fallthru
    _
  // Predicated region
  $region18: #{megnet_layer_forward.7} parent=0 // pred_check
    _
  $region19: #{megnet_layer_forward.7} parent=0 // pred_check_branch
    %23 = sbr.rel (0) target = $region21
  $region20: #{megnet_layer_forward.7} parent=0 // pred_region
    _
  $region21: #{megnet_layer_forward.7} parent=0 // pred_fallthru
    _
  // Predicated region
  $region22: #{megnet_layer_forward.7} parent=0 // pred_check
    _
  $region23: #{megnet_layer_forward.7} parent=0 // pred_check_branch
    %25 = sbr.rel (0) target = $region25
  $region24: #{megnet_layer_forward.7} parent=0 // pred_region
    _
  $region25: #{megnet_layer_forward.7} parent=0 // pred_fallthru
    _
  // Predicated region
  $region26: #{megnet_layer_forward.7} parent=0 // pred_check
    _
  $region27: #{megnet_layer_forward.7} parent=0 // pred_check_branch
    %27 = sbr.rel (0) target = $region29
  $region28: #{megnet_layer_forward.7} parent=0 // pred_region
    _
  $region29: #{megnet_layer_forward.7} parent=0 // pred_fallthru
    _
  // Predicated region
  $region30: #{megnet_layer_forward.7} parent=0 // pred_check
    _
  $region31: #{megnet_layer_forward.7} parent=0 // pred_check_branch
    %29 = sbr.rel (0) target = $region33
  $region32: #{megnet_layer_forward.7} parent=0 // pred_region
    _
  $region33: #{megnet_layer_forward.7} parent=0 // pred_fallthru
    _
  // Predicated region
  $region34: #{megnet_layer_forward.7} parent=0 // pred_check
    _
  $region35: #{megnet_layer_forward.7} parent=0 // pred_check_branch
    %31 = sbr.rel (0) target = $region37
  $region36: #{megnet_layer_forward.7} parent=0 // pred_region
    _
  $region37: #{megnet_layer_forward.7} parent=0 // pred_fallthru
    _
  %v32 = vld [vmem:[%s0] sm:$0xff]
  %v33 = vld [vmem:[%s1] sm:$0xff]
  %v34 = vmax.f32 %v33, 1.0
  %v35 = vrcp.pop %v34
  %v36 = vld [vmem:[%s2] sm:$0xff]
  %v37 = vmax.f32 %v36, 1.0
  %v38 = vrcp.pop %v37
  %v39 = vlaneseq
  %v40 = vand.u32 %v39, 127
  %vm41 = vcmp.lt.s32.totalorder %v40, 32
  %vm42 = vcmp.lt.s32.totalorder %v40, 64
  %44 = vset.pattern.permute.xlu0 0
  %45 = vperm.xlu0 %44, %v38
  %v46 = vpop.permute.xlu0 %45
  %49 = vset.pattern.permute.xlu0 0
  %50 = vperm.xlu0 %49, %v35
  %v51 = vpop.permute.xlu0 %50
  %v53 = vsel %vm42, %v46, %v51
  %v54 = vsel %vm41, %v51, %v53
  %v55 = vmul.f32 %v32, %v54
  %v56 = vld [vmem:[%s5] sm:$0xff]
  %v57 = vld [vmem:[%s5 + $0x8] sm:$0xff]
  %v58 = vld [vmem:[%s5 + $0x10] sm:$0xff]
  %v59 = vld [vmem:[%s5 + $0x18] sm:$0xff]
  %v60 = vld [vmem:[%s5 + $0x20] sm:$0xff]
  %v61 = vld [vmem:[%s5 + $0x28] sm:$0xff]
  %v62 = vld [vmem:[%s5 + $0x30] sm:$0xff]
  %v63 = vld [vmem:[%s5 + $0x38] sm:$0xff]
  %v64 = vld [vmem:[%s5 + $0x40] sm:$0xff]
  %v65 = vld [vmem:[%s5 + $0x48] sm:$0xff]
  %v66 = vld [vmem:[%s5 + $0x50] sm:$0xff]
  %v67 = vld [vmem:[%s5 + $0x58] sm:$0xff]
  %v68 = vld [vmem:[%s5 + $0x60] sm:$0xff]
  %v69 = vld [vmem:[%s5 + $0x68] sm:$0xff]
  %v70 = vld [vmem:[%s5 + $0x70] sm:$0xff]
  %v71 = vld [vmem:[%s5 + $0x78] sm:$0xff]
  %v72 = vld [vmem:[%s6] sm:$0x1]
  %v74 = vlaneseq
  %v75 = vshrl.u32 %v74, 7
  %v76 = vsub.s32 0, %v75
  %v77 = vrot.slane %v72, %v76
  %79 = vmatprep.subr.mxu0 0.0
  %80 = vmatpush1.msra.mxu0 %v56
  %81 = vmatprep.subr.mxu0 0.0
  %82 = vmatpush1.msra.mxu0 %v57
  %83 = vmatprep.subr.mxu0 0.0
  %84 = vmatpush1.msra.mxu0 %v58
  %85 = vmatprep.subr.mxu0 0.0
  %86 = vmatpush1.msra.mxu0 %v59
  %87 = vmatprep.subr.mxu0 0.0
  %88 = vmatpush1.msra.mxu0 %v60
  %89 = vmatprep.subr.mxu0 0.0
  %90 = vmatpush1.msra.mxu0 %v61
  %91 = vmatprep.subr.mxu0 0.0
  %92 = vmatpush1.msra.mxu0 %v62
  %93 = vmatprep.subr.mxu0 0.0
  %94 = vmatpush1.msra.mxu0 %v63
  %95 = vmatprep.subr.mxu0 0.0
  %96 = vmatpush1.msra.mxu0 %v64
  %97 = vmatprep.subr.mxu0 0.0
  %98 = vmatpush1.msra.mxu0 %v65
  %99 = vmatprep.subr.mxu0 0.0
  %100 = vmatpush1.msra.mxu0 %v66
  %101 = vmatprep.subr.mxu0 0.0
  %102 = vmatpush1.msra.mxu0 %v67
  %103 = vmatprep.subr.mxu0 0.0
  %104 = vmatpush1.msra.mxu0 %v68
  %105 = vmatprep.subr.mxu0 0.0
  %106 = vmatpush1.msra.mxu0 %v69
  %107 = vmatprep.subr.mxu0 0.0
  %108 = vmatpush1.msra.mxu0 %v70
  %109 = vmatprep.subr.mxu0 0.0
  %110 = vmatpush1.msra.mxu0 %v71
  %111 = vmatprep.subr.mxu0 0.0
  %112 = vmatpush1.msra.mxu0 0.0
  %113 = vmatprep.subr.mxu0 0.0
  %114 = vmatpush1.msra.mxu0 0.0
  %115 = vmatprep.subr.mxu0 0.0
  %116 = vmatpush1.msra.mxu0 0.0
  %117 = vmatprep.subr.mxu0 0.0
  %118 = vmatpush1.msra.mxu0 0.0
  %119 = vmatprep.subr.mxu0 0.0
  %120 = vmatpush1.msra.mxu0 0.0
  %121 = vmatprep.subr.mxu0 0.0
  %122 = vmatpush1.msra.mxu0 0.0
  %123 = vmatprep.subr.mxu0 0.0
  %124 = vmatpush1.msra.mxu0 0.0
  %125 = vmatprep.subr.mxu0 0.0
  %126 = vmatpush1.msra.mxu0 0.0
  %127 = vmatprep.subr.mxu0 0.0
  %128 = vmatpush1.msra.mxu0 0.0
  %129 = vmatprep.subr.mxu0 0.0
  %130 = vmatpush1.msra.mxu0 0.0
  %131 = vmatprep.subr.mxu0 0.0
  %132 = vmatpush1.msra.mxu0 0.0
  %133 = vmatprep.subr.mxu0 0.0
  %134 = vmatpush1.msra.mxu0 0.0
  %135 = vmatprep.subr.mxu0 0.0
  %136 = vmatpush1.msra.mxu0 0.0
  %137 = vmatprep.subr.mxu0 0.0
  %138 = vmatpush1.msra.mxu0 0.0
  %139 = vmatprep.subr.mxu0 0.0
  %140 = vmatpush1.msra.mxu0 0.0
  %141 = vmatprep.subr.mxu0 0.0
  %142 = vmatpush1.msra.mxu0 0.0
  %143 = vmatprep.mubr.f32.mxu0 0.0
  %144 = vmatmul.mubr.f32.gmra.mrb[0].mxu0 %v55
  %v145 = vpop.f32.mrb[0].mxu0
  %v146 = vadd.f32 %v77, %v145
  %v147 = vpop.f32.mrb[0].mxu0
  %148 = vdwg.mxu0
  %vm149 = vcmp.gt.f32.partialorder %v146, 0.0
  %v150 = vmul.f32 %v146, 0.01
  %v151 = vsel %vm149, %v146, %v150
  %v152 = vld [vmem:[%s7] sm:$0xff]
  %v153 = vld [vmem:[%s7 + $0x8] sm:$0xff]
  %v154 = vld [vmem:[%s7 + $0x10] sm:$0xff]
  %v155 = vld [vmem:[%s7 + $0x18] sm:$0xff]
  %v156 = vld [vmem:[%s7 + $0x20] sm:$0xff]
  %v157 = vld [vmem:[%s7 + $0x28] sm:$0xff]
  %v158 = vld [vmem:[%s7 + $0x30] sm:$0xff]
  %v159 = vld [vmem:[%s7 + $0x38] sm:$0xff]
  %v160 = vld [vmem:[%s8] sm:$0x1]
  %v162 = vlaneseq
  %v163 = vshrl.u32 %v162, 7
  %v164 = vsub.s32 0, %v163
  %v165 = vrot.slane %v160, %v164
  %vm167 = vcmask 523264
  %v169 = vsel %vm167, %v151, 0
  %171 = vmatprep.subr.mxu0 0.0
  %172 = vmatpush1.msra.mxu0 %v152
  %173 = vmatprep.subr.mxu0 0.0
  %174 = vmatpush1.msra.mxu0 %v153
  %175 = vmatprep.subr.mxu0 0.0
  %176 = vmatpush1.msra.mxu0 %v154
  %177 = vmatprep.subr.mxu0 0.0
  %178 = vmatpush1.msra.mxu0 %v155
  %179 = vmatprep.subr.mxu0 0.0
  %180 = vmatpush1.msra.mxu0 %v156
  %181 = vmatprep.subr.mxu0 0.0
  %182 = vmatpush1.msra.mxu0 %v157
  %183 = vmatprep.subr.mxu0 0.0
  %184 = vmatpush1.msra.mxu0 %v158
  %185 = vmatprep.subr.mxu0 0.0
  %186 = vmatpush1.msra.mxu0 %v159
  %187 = vmatprep.subr.mxu0 0.0
  %188 = vmatpush1.msra.mxu0 0.0
  %189 = vmatprep.subr.mxu0 0.0
  %190 = vmatpush1.msra.mxu0 0.0
  %191 = vmatprep.subr.mxu0 0.0
  %192 = vmatpush1.msra.mxu0 0.0
  %193 = vmatprep.subr.mxu0 0.0
  %194 = vmatpush1.msra.mxu0 0.0
  %195 = vmatprep.subr.mxu0 0.0
  %196 = vmatpush1.msra.mxu0 0.0
  %197 = vmatprep.subr.mxu0 0.0
  %198 = vmatpush1.msra.mxu0 0.0
  %199 = vmatprep.subr.mxu0 0.0
  %200 = vmatpush1.msra.mxu0 0.0
  %201 = vmatprep.subr.mxu0 0.0
  %202 = vmatpush1.msra.mxu0 0.0
  %203 = vmatprep.subr.mxu0 0.0
  %204 = vmatpush1.msra.mxu0 0.0
  %205 = vmatprep.subr.mxu0 0.0
  %206 = vmatpush1.msra.mxu0 0.0
  %207 = vmatprep.subr.mxu0 0.0
  %208 = vmatpush1.msra.mxu0 0.0
  %209 = vmatprep.subr.mxu0 0.0
  %210 = vmatpush1.msra.mxu0 0.0
  %211 = vmatprep.subr.mxu0 0.0
  %212 = vmatpush1.msra.mxu0 0.0
  %213 = vmatprep.subr.mxu0 0.0
  %214 = vmatpush1.msra.mxu0 0.0
  %215 = vmatprep.subr.mxu0 0.0
  %216 = vmatpush1.msra.mxu0 0.0
  %217 = vmatprep.subr.mxu0 0.0
  %218 = vmatpush1.msra.mxu0 0.0
  %219 = vmatprep.subr.mxu0 0.0
  %220 = vmatpush1.msra.mxu0 0.0
  %221 = vmatprep.subr.mxu0 0.0
  %222 = vmatpush1.msra.mxu0 0.0
  %223 = vmatprep.subr.mxu0 0.0
  %224 = vmatpush1.msra.mxu0 0.0
  %225 = vmatprep.subr.mxu0 0.0
  %226 = vmatpush1.msra.mxu0 0.0
  %227 = vmatprep.subr.mxu0 0.0
  %228 = vmatpush1.msra.mxu0 0.0
  %229 = vmatprep.subr.mxu0 0.0
  %230 = vmatpush1.msra.mxu0 0.0
  %231 = vmatprep.subr.mxu0 0.0
  %232 = vmatpush1.msra.mxu0 0.0
  %233 = vmatprep.subr.mxu0 0.0
  %234 = vmatpush1.msra.mxu0 0.0
  %235 = vmatprep.mubr.f32.mxu0 0.0
  %236 = vmatmul.mubr.f32.gmra.mrb[0].mxu0 %v169
  %v237 = vpop.f32.mrb[0].mxu0
  %v238 = vadd.f32 %v165, %v237
  %v239 = vpop.f32.mrb[0].mxu0
  %240 = vdwg.mxu0
  %vm241 = vcmp.gt.f32.partialorder %v238, 0.0
  %v242 = vmul.f32 %v238, 0.01
  %v243 = vsel %vm241, %v238, %v242
  %v244 = vld [vmem:[%s3] sm:$0xff]
  %v245 = vld [vmem:[%s3 + $0x8] sm:$0xff]
  %v246 = vld [vmem:[%s3 + $0x10] sm:$0xff]
  %v247 = vld [vmem:[%s3 + $0x18] sm:$0xff]
  %v248 = vld [vmem:[%s3 + $0x20] sm:$0xff]
  %v249 = vld [vmem:[%s3 + $0x28] sm:$0xff]
  %v250 = vld [vmem:[%s3 + $0x30] sm:$0xff]
  %v251 = vld [vmem:[%s3 + $0x38] sm:$0xff]
  %v252 = vld [vmem:[%s3 + $0x40] sm:$0xff]
  %v253 = vld [vmem:[%s3 + $0x48] sm:$0xff]
  %v254 = vld [vmem:[%s3 + $0x50] sm:$0xff]
  %v255 = vld [vmem:[%s3 + $0x58] sm:$0xff]
  %v256 = vld [vmem:[%s3 + $0x60] sm:$0xff]
  %v257 = vld [vmem:[%s3 + $0x68] sm:$0xff]
  %v258 = vld [vmem:[%s3 + $0x70] sm:$0xff]
  %v259 = vld [vmem:[%s3 + $0x78] sm:$0xff]
  %260 = vset.pattern.permute.xlu0 0
  %261 = vperm.xlu0 %260, %v244
  %v262 = vpop.permute.xlu0 %261
  %263 = vset.pattern.permute.xlu0 0
  %264 = vperm.xlu0 %263, %v245
  %v265 = vpop.permute.xlu0 %264
  %266 = vset.pattern.permute.xlu0 0
  %267 = vperm.xlu0 %266, %v246
  %v268 = vpop.permute.xlu0 %267
  %269 = vset.pattern.permute.xlu0 0
  %270 = vperm.xlu0 %269, %v247
  %v271 = vpop.permute.xlu0 %270
  %272 = vset.pattern.permute.xlu0 0
  %273 = vperm.xlu0 %272, %v248
  %v274 = vpop.permute.xlu0 %273
  %275 = vset.pattern.permute.xlu0 0
  %276 = vperm.xlu0 %275, %v249
  %v277 = vpop.permute.xlu0 %276
  %278 = vset.pattern.permute.xlu0 0
  %279 = vperm.xlu0 %278, %v250
  %v280 = vpop.permute.xlu0 %279
  %281 = vset.pattern.permute.xlu0 0
  %282 = vperm.xlu0 %281, %v251
  %v283 = vpop.permute.xlu0 %282
  %284 = vset.pattern.permute.xlu0 0
  %285 = vperm.xlu0 %284, %v252
  %v286 = vpop.permute.xlu0 %285
  %287 = vset.pattern.permute.xlu0 0
  %288 = vperm.xlu0 %287, %v253
  %v289 = vpop.permute.xlu0 %288
  %290 = vset.pattern.permute.xlu0 0
  %291 = vperm.xlu0 %290, %v254
  %v292 = vpop.permute.xlu0 %291
  %293 = vset.pattern.permute.xlu0 0
  %294 = vperm.xlu0 %293, %v255
  %v295 = vpop.permute.xlu0 %294
  %296 = vset.pattern.permute.xlu0 0
  %297 = vperm.xlu0 %296, %v256
  %v298 = vpop.permute.xlu0 %297
  %299 = vset.pattern.permute.xlu0 0
  %300 = vperm.xlu0 %299, %v257
  %v301 = vpop.permute.xlu0 %300
  %302 = vset.pattern.permute.xlu0 0
  %303 = vperm.xlu0 %302, %v258
  %v304 = vpop.permute.xlu0 %303
  %305 = vset.pattern.permute.xlu0 0
  %306 = vperm.xlu0 %305, %v259
  %v307 = vpop.permute.xlu0 %306
  %vm308 = vcmp.eq.s32.totalorder %v40, %v262
  %vm309 = vcmp.eq.s32.totalorder %v40, %v265
  %vm310 = vcmp.eq.s32.totalorder %v40, %v268
  %vm311 = vcmp.eq.s32.totalorder %v40, %v271
  %vm312 = vcmp.eq.s32.totalorder %v40, %v274
  %vm313 = vcmp.eq.s32.totalorder %v40, %v277
  %vm314 = vcmp.eq.s32.totalorder %v40, %v280
  %vm315 = vcmp.eq.s32.totalorder %v40, %v283
  %vm316 = vcmp.eq.s32.totalorder %v40, %v286
  %vm317 = vcmp.eq.s32.totalorder %v40, %v289
  %vm318 = vcmp.eq.s32.totalorder %v40, %v292
  %vm319 = vcmp.eq.s32.totalorder %v40, %v295
  %vm320 = vcmp.eq.s32.totalorder %v40, %v298
  %vm321 = vcmp.eq.s32.totalorder %v40, %v301
  %vm322 = vcmp.eq.s32.totalorder %v40, %v304
  %vm323 = vcmp.eq.s32.totalorder %v40, %v307
  %v324 = vsel %vm308, 1, 0
  %v325 = vsel %vm309, 1, 0
  %v326 = vsel %vm310, 1, 0
  %v327 = vsel %vm311, 1, 0
  %v328 = vsel %vm312, 1, 0
  %v329 = vsel %vm313, 1, 0
  %v330 = vsel %vm314, 1, 0
  %v331 = vsel %vm315, 1, 0
  %v332 = vsel %vm316, 1, 0
  %v333 = vsel %vm317, 1, 0
  %v334 = vsel %vm318, 1, 0
  %v335 = vsel %vm319, 1, 0
  %v336 = vsel %vm320, 1, 0
  %v337 = vsel %vm321, 1, 0
  %v338 = vsel %vm322, 1, 0
  %v339 = vsel %vm323, 1, 0
  %v340 = vcvt.s32.f32 %v324
  %v341 = vcvt.s32.f32 %v325
  %v342 = vcvt.s32.f32 %v326
  %v343 = vcvt.s32.f32 %v327
  %v344 = vcvt.s32.f32 %v328
  %v345 = vcvt.s32.f32 %v329
  %v346 = vcvt.s32.f32 %v330
  %v347 = vcvt.s32.f32 %v331
  %v348 = vcvt.s32.f32 %v332
  %v349 = vcvt.s32.f32 %v333
  %v350 = vcvt.s32.f32 %v334
  %v351 = vcvt.s32.f32 %v335
  %v352 = vcvt.s32.f32 %v336
  %v353 = vcvt.s32.f32 %v337
  %v354 = vcvt.s32.f32 %v338
  %v355 = vcvt.s32.f32 %v339
  %v356 = vld [vmem:[%s4] sm:$0xff]
  %v357 = vld [vmem:[%s4 + $0x8] sm:$0xff]
  %v358 = vld [vmem:[%s4 + $0x10] sm:$0xff]
  %v359 = vld [vmem:[%s4 + $0x18] sm:$0xff]
  %v360 = vld [vmem:[%s4 + $0x20] sm:$0xff]
  %v361 = vld [vmem:[%s4 + $0x28] sm:$0xff]
  %v362 = vld [vmem:[%s4 + $0x30] sm:$0xff]
  %v363 = vld [vmem:[%s4 + $0x38] sm:$0xff]
  %v364 = vld [vmem:[%s4 + $0x40] sm:$0xff]
  %v365 = vld [vmem:[%s4 + $0x48] sm:$0xff]
  %v366 = vld [vmem:[%s4 + $0x50] sm:$0xff]
  %v367 = vld [vmem:[%s4 + $0x58] sm:$0xff]
  %v368 = vld [vmem:[%s4 + $0x60] sm:$0xff]
  %v369 = vld [vmem:[%s4 + $0x68] sm:$0xff]
  %v370 = vld [vmem:[%s4 + $0x70] sm:$0xff]
  %v371 = vld [vmem:[%s4 + $0x78] sm:$0xff]
  %vm372 = vcmask 64512
  %v374 = vsel %vm372, %v340, 0
  %v377 = vsel %vm372, %v341, 0
  %v380 = vsel %vm372, %v342, 0
  %v383 = vsel %vm372, %v343, 0
  %v386 = vsel %vm372, %v344, 0
  %v389 = vsel %vm372, %v345, 0
  %v392 = vsel %vm372, %v346, 0
  %v395 = vsel %vm372, %v347, 0
  %v398 = vsel %vm372, %v348, 0
  %v401 = vsel %vm372, %v349, 0
  %v404 = vsel %vm372, %v350, 0
  %v407 = vsel %vm372, %v351, 0
  %v410 = vsel %vm372, %v352, 0
  %v413 = vsel %vm372, %v353, 0
  %v416 = vsel %vm372, %v354, 0
  %v419 = vsel %vm372, %v355, 0
  %421 = vmatprep.subr.mxu0 0.0
  %422 = vmatpush1.msra.mxu0 %v243
  %423 = vmatprep.subr.mxu0 0.0
  %424 = vmatpush1.msra.mxu0 0.0
  %425 = vmatprep.subr.mxu0 0.0
  %426 = vmatpush1.msra.mxu0 0.0
  %427 = vmatprep.subr.mxu0 0.0
  %428 = vmatpush1.msra.mxu0 0.0
  %429 = vmatprep.subr.mxu0 0.0
  %430 = vmatpush1.msra.mxu0 0.0
  %431 = vmatprep.subr.mxu0 0.0
  %432 = vmatpush1.msra.mxu0 0.0
  %433 = vmatprep.subr.mxu0 0.0
  %434 = vmatpush1.msra.mxu0 0.0
  %435 = vmatprep.subr.mxu0 0.0
  %436 = vmatpush1.msra.mxu0 0.0
  %437 = vmatprep.subr.mxu0 0.0
  %438 = vmatpush1.msra.mxu0 0.0
  %439 = vmatprep.subr.mxu0 0.0
  %440 = vmatpush1.msra.mxu0 0.0
  %441 = vmatprep.subr.mxu0 0.0
  %442 = vmatpush1.msra.mxu0 0.0
  %443 = vmatprep.subr.mxu0 0.0
  %444 = vmatpush1.msra.mxu0 0.0
  %445 = vmatprep.subr.mxu0 0.0
  %446 = vmatpush1.msra.mxu0 0.0
  %447 = vmatprep.subr.mxu0 0.0
  %448 = vmatpush1.msra.mxu0 0.0
  %449 = vmatprep.subr.mxu0 0.0
  %450 = vmatpush1.msra.mxu0 0.0
  %451 = vmatprep.subr.mxu0 0.0
  %452 = vmatpush1.msra.mxu0 0.0
  %453 = vmatprep.subr.mxu0 0.0
  %454 = vmatpush1.msra.mxu0 0.0
  %455 = vmatprep.subr.mxu0 0.0
  %456 = vmatpush1.msra.mxu0 0.0
  %457 = vmatprep.subr.mxu0 0.0
  %458 = vmatpush1.msra.mxu0 0.0
  %459 = vmatprep.subr.mxu0 0.0
  %460 = vmatpush1.msra.mxu0 0.0
  %461 = vmatprep.subr.mxu0 0.0
  %462 = vmatpush1.msra.mxu0 0.0
  %463 = vmatprep.subr.mxu0 0.0
  %464 = vmatpush1.msra.mxu0 0.0
  %465 = vmatprep.subr.mxu0 0.0
  %466 = vmatpush1.msra.mxu0 0.0
  %467 = vmatprep.subr.mxu0 0.0
  %468 = vmatpush1.msra.mxu0 0.0
  %469 = vmatprep.subr.mxu0 0.0
  %470 = vmatpush1.msra.mxu0 0.0
  %471 = vmatprep.subr.mxu0 0.0
  %472 = vmatpush1.msra.mxu0 0.0
  %473 = vmatprep.subr.mxu0 0.0
  %474 = vmatpush1.msra.mxu0 0.0
  %475 = vmatprep.subr.mxu0 0.0
  %476 = vmatpush1.msra.mxu0 0.0
  %477 = vmatprep.subr.mxu0 0.0
  %478 = vmatpush1.msra.mxu0 0.0
  %479 = vmatprep.subr.mxu0 0.0
  %480 = vmatpush1.msra.mxu0 0.0
  %481 = vmatprep.subr.mxu0 0.0
  %482 = vmatpush1.msra.mxu0 0.0
  %483 = vmatprep.subr.mxu0 0.0
  %484 = vmatpush1.msra.mxu0 0.0
  %485 = vmatprep.mubr.f32.mxu0 0.0
  %486 = vmatmul.mubr.f32.gmra.mrb[0].mxu0 %v374
  %v487 = vpop.f32.mrb[0].mxu0
  %v488 = vadd.f32 %v356, %v487
  %v489 = vpop.f32.mrb[0].mxu0
  %490 = vmatprep.mubr.f32.mxu0 0.0
  %491 = vmatmul.mubr.f32.gmra.mrb[0].mxu0 %v377
  %v492 = vpop.f32.mrb[0].mxu0
  %v493 = vadd.f32 %v357, %v492
  %v494 = vpop.f32.mrb[0].mxu0
  %495 = vmatprep.mubr.f32.mxu0 0.0
  %496 = vmatmul.mubr.f32.gmra.mrb[0].mxu0 %v380
  %v497 = vpop.f32.mrb[0].mxu0
  %v498 = vadd.f32 %v358, %v497
  %v499 = vpop.f32.mrb[0].mxu0
  %500 = vmatprep.mubr.f32.mxu0 0.0
  %501 = vmatmul.mubr.f32.gmra.mrb[0].mxu0 %v383
  %v502 = vpop.f32.mrb[0].mxu0
  %v503 = vadd.f32 %v359, %v502
  %v504 = vpop.f32.mrb[0].mxu0
  %505 = vmatprep.mubr.f32.mxu0 0.0
  %506 = vmatmul.mubr.f32.gmra.mrb[0].mxu0 %v386
  %v507 = vpop.f32.mrb[0].mxu0
  %v508 = vadd.f32 %v360, %v507
  %v509 = vpop.f32.mrb[0].mxu0
  %510 = vmatprep.mubr.f32.mxu0 0.0
  %511 = vmatmul.mubr.f32.gmra.mrb[0].mxu0 %v389
  %v512 = vpop.f32.mrb[0].mxu0
  %v513 = vadd.f32 %v361, %v512
  %v514 = vpop.f32.mrb[0].mxu0
  %515 = vmatprep.mubr.f32.mxu0 0.0
  %516 = vmatmul.mubr.f32.gmra.mrb[0].mxu0 %v392
  %v517 = vpop.f32.mrb[0].mxu0
  %v518 = vadd.f32 %v362, %v517
  %v519 = vpop.f32.mrb[0].mxu0
  %520 = vmatprep.mubr.f32.mxu0 0.0
  %521 = vmatmul.mubr.f32.gmra.mrb[0].mxu0 %v395
  %v522 = vpop.f32.mrb[0].mxu0
  %v523 = vadd.f32 %v363, %v522
  %v524 = vpop.f32.mrb[0].mxu0
  %525 = vmatprep.mubr.f32.mxu0 0.0
  %526 = vmatmul.mubr.f32.gmra.mrb[0].mxu0 %v398
  %v527 = vpop.f32.mrb[0].mxu0
  %v528 = vadd.f32 %v364, %v527
  %v529 = vpop.f32.mrb[0].mxu0
  %530 = vmatprep.mubr.f32.mxu0 0.0
  %531 = vmatmul.mubr.f32.gmra.mrb[0].mxu0 %v401
  %v532 = vpop.f32.mrb[0].mxu0
  %v533 = vadd.f32 %v365, %v532
  %v534 = vpop.f32.mrb[0].mxu0
  %535 = vmatprep.mubr.f32.mxu0 0.0
  %536 = vmatmul.mubr.f32.gmra.mrb[0].mxu0 %v404
  %v537 = vpop.f32.mrb[0].mxu0
  %v538 = vadd.f32 %v366, %v537
  %v539 = vpop.f32.mrb[0].mxu0
  %540 = vmatprep.mubr.f32.mxu0 0.0
  %541 = vmatmul.mubr.f32.gmra.mrb[0].mxu0 %v407
  %v542 = vpop.f32.mrb[0].mxu0
  %v543 = vadd.f32 %v367, %v542
  %v544 = vpop.f32.mrb[0].mxu0
  %545 = vmatprep.mubr.f32.mxu0 0.0
  %546 = vmatmul.mubr.f32.gmra.mrb[0].mxu0 %v410
  %v547 = vpop.f32.mrb[0].mxu0
  %v548 = vadd.f32 %v368, %v547
  %v549 = vpop.f32.mrb[0].mxu0
  %550 = vmatprep.mubr.f32.mxu0 0.0
  %551 = vmatmul.mubr.f32.gmra.mrb[0].mxu0 %v413
  %v552 = vpop.f32.mrb[0].mxu0
  %v553 = vadd.f32 %v369, %v552
  %v554 = vpop.f32.mrb[0].mxu0
  %555 = vmatprep.mubr.f32.mxu0 0.0
  %556 = vmatmul.mubr.f32.gmra.mrb[0].mxu0 %v416
  %v557 = vpop.f32.mrb[0].mxu0
  %v558 = vadd.f32 %v370, %v557
  %v559 = vpop.f32.mrb[0].mxu0
  %560 = vmatprep.mubr.f32.mxu0 0.0
  %561 = vmatmul.mubr.f32.gmra.mrb[0].mxu0 %v419
  %v562 = vpop.f32.mrb[0].mxu0
  %v563 = vadd.f32 %v371, %v562
  %v564 = vpop.f32.mrb[0].mxu0
  %565 = vdwg.mxu0
  %vm566 = vcmask 261120
  %567 = vst.msk [vmem:[%s9] sm:$0xff] %vm566, %v488
  %568 = vst.msk [vmem:[%s9 + $0x8] sm:$0xff] %vm566, %v493
  %569 = vst.msk [vmem:[%s9 + $0x10] sm:$0xff] %vm566, %v498
  %570 = vst.msk [vmem:[%s9 + $0x18] sm:$0xff] %vm566, %v503
  %571 = vst.msk [vmem:[%s9 + $0x20] sm:$0xff] %vm566, %v508
  %572 = vst.msk [vmem:[%s9 + $0x28] sm:$0xff] %vm566, %v513
  %573 = vst.msk [vmem:[%s9 + $0x30] sm:$0xff] %vm566, %v518
  %574 = vst.msk [vmem:[%s9 + $0x38] sm:$0xff] %vm566, %v523
  %575 = vst.msk [vmem:[%s9 + $0x40] sm:$0xff] %vm566, %v528
  %576 = vst.msk [vmem:[%s9 + $0x48] sm:$0xff] %vm566, %v533
  %577 = vst.msk [vmem:[%s9 + $0x50] sm:$0xff] %vm566, %v538
  %578 = vst.msk [vmem:[%s9 + $0x58] sm:$0xff] %vm566, %v543
  %579 = vst.msk [vmem:[%s9 + $0x60] sm:$0xff] %vm566, %v548
  %580 = vst.msk [vmem:[%s9 + $0x68] sm:$0xff] %vm566, %v553
  %581 = vst.msk [vmem:[%s9 + $0x70] sm:$0xff] %vm566, %v558
  %582 = vst.msk [vmem:[%s9 + $0x78] sm:$0xff] %vm566, %v563
  // Predicated region
  $region38: #{megnet_layer_forward.7} parent=0 // pred_check
    _
  $region39: #{megnet_layer_forward.7} parent=0 // pred_check_branch
    %584 = sbr.rel (0) target = $region41
  $region40: #{megnet_layer_forward.7} parent=0 // pred_region
    _
  $region41: #{megnet_layer_forward.7} parent=0 // pred_fallthru
    _
  // Predicated region
  $region42: #{megnet_layer_forward.7} parent=0 // pred_check
    _
  $region43: #{megnet_layer_forward.7} parent=0 // pred_check_branch
    %586 = sbr.rel (0) target = $region45
  $region44: #{megnet_layer_forward.7} parent=0 // pred_region
    _
  $region45: #{megnet_layer_forward.7} parent=0 // pred_fallthru
    _

// kernel: megnet_layer_forward.6
$region0: #{megnet_layer_forward.6}
  #allocation0 [shape = 'u32[]', space=smem, size = 0x4, offset = 0x4, fixed_abs, tag = 'smem constant byte address 0x4 - core index']
  #allocation1 [shape = 'u32[144,128]{1,0:T(1,128)}', space=vmem, size = 0x12000, scoped, tag = 'internal scratch']
  %s0 = inlined_call_operand.vmem [shape: f32[128,128], index: 0, kind: input, shape index: {}]
  %s1 = inlined_call_operand.vmem [shape: f32[128,64], index: 1, kind: input, shape index: {}]
  %s2 = inlined_call_operand.vmem [shape: f32[128,32], index: 2, kind: input, shape index: {}]
  %s3 = inlined_call_operand.vmem [shape: s32[1,128], index: 3, kind: input, shape index: {}]
  %s4 = inlined_call_operand.vmem [shape: f32[128,64], index: 4, kind: input, shape index: {}]
  %s5 = inlined_call_operand.vmem [shape: f32[32,64], index: 5, kind: input, shape index: {}]
  %s6 = inlined_call_operand.vmem [shape: f32[1,64], index: 6, kind: input, shape index: {}]
  %s7 = inlined_call_operand.vmem [shape: f32[64,32], index: 7, kind: input, shape index: {}]
  %s8 = inlined_call_operand.vmem [shape: f32[1,32], index: 8, kind: input, shape index: {}]
  %s9 = inlined_call_operand.vmem [shape: f32[128,32], index: 9, kind: output, shape index: {0}]
  %s10 = inlined_call_operand.vmem [shape: f32[8,128], index: 10, kind: output, shape index: {1}]
  %11 = xla_tuple %s9, %s10
  %s12 = sld [smem:[#allocation0]]
  $region58: #{megnet_layer_forward.6} parent=0
    _
  %s14 = ssub.s32 1, %s12
  %s15 = scalar_select 0, %s14, %s12
  // Predicated region
  $region2: #{megnet_layer_forward.6} parent=0 // pred_check
    _
  $region3: #{megnet_layer_forward.6} parent=0 // pred_check_branch
    %17 = sbr.rel (0) target = $region5
  $region4: #{megnet_layer_forward.6} parent=0 // pred_region
    _
  $region5: #{megnet_layer_forward.6} parent=0 // pred_fallthru
    _
  // Predicated region
  $region6: #{megnet_layer_forward.6} parent=0 // pred_check
    _
  $region7: #{megnet_layer_forward.6} parent=0 // pred_check_branch
    %19 = sbr.rel (0) target = $region9
  $region8: #{megnet_layer_forward.6} parent=0 // pred_region
    _
  $region9: #{megnet_layer_forward.6} parent=0 // pred_fallthru
    _
  // Predicated region
  $region10: #{megnet_layer_forward.6} parent=0 // pred_check
    _
  $region11: #{megnet_layer_forward.6} parent=0 // pred_check_branch
    %21 = sbr.rel (0) target = $region13
  $region12: #{megnet_layer_forward.6} parent=0 // pred_region
    _
  $region13: #{megnet_layer_forward.6} parent=0 // pred_fallthru
    _
  // Predicated region
  $region14: #{megnet_layer_forward.6} parent=0 // pred_check
    _
  $region15: #{megnet_layer_forward.6} parent=0 // pred_check_branch
    %23 = sbr.rel (0) target = $region17
  $region16: #{megnet_layer_forward.6} parent=0 // pred_region
    _
  $region17: #{megnet_layer_forward.6} parent=0 // pred_fallthru
    _
  // Predicated region
  $region18: #{megnet_layer_forward.6} parent=0 // pred_check
    _
  $region19: #{megnet_layer_forward.6} parent=0 // pred_check_branch
    %25 = sbr.rel (0) target = $region21
  $region20: #{megnet_layer_forward.6} parent=0 // pred_region
    _
  $region21: #{megnet_layer_forward.6} parent=0 // pred_fallthru
    _
  // Predicated region
  $region22: #{megnet_layer_forward.6} parent=0 // pred_check
    _
  $region23: #{megnet_layer_forward.6} parent=0 // pred_check_branch
    %27 = sbr.rel (0) target = $region25
  $region24: #{megnet_layer_forward.6} parent=0 // pred_region
    _
  $region25: #{megnet_layer_forward.6} parent=0 // pred_fallthru
    _
  // Predicated region
  $region26: #{megnet_layer_forward.6} parent=0 // pred_check
    _
  $region27: #{megnet_layer_forward.6} parent=0 // pred_check_branch
    %29 = sbr.rel (0) target = $region29
  $region28: #{megnet_layer_forward.6} parent=0 // pred_region
    _
  $region29: #{megnet_layer_forward.6} parent=0 // pred_fallthru
    _
  // Predicated region
  $region30: #{megnet_layer_forward.6} parent=0 // pred_check
    _
  $region31: #{megnet_layer_forward.6} parent=0 // pred_check_branch
    %31 = sbr.rel (0) target = $region33
  $region32: #{megnet_layer_forward.6} parent=0 // pred_region
    _
  $region33: #{megnet_layer_forward.6} parent=0 // pred_fallthru
    _
  // Predicated region
  $region34: #{megnet_layer_forward.6} parent=0 // pred_check
    _
  $region35: #{megnet_layer_forward.6} parent=0 // pred_check_branch
    %33 = sbr.rel (0) target = $region37
  $region36: #{megnet_layer_forward.6} parent=0 // pred_region
    _
  $region37: #{megnet_layer_forward.6} parent=0 // pred_fallthru
    _
  %p34 = scmp.eq.s32.totalorder 0, 0
  // Predicated region
  $region38: #{megnet_layer_forward.6} parent=0 // pred_check
    %p35 = pneg %p34
  $region39: #{megnet_layer_forward.6} parent=0 // pred_check_branch
    %37 = sbr.rel (%p35) target = $region41
  $region40: #{megnet_layer_forward.6} parent=0 // pred_region
    %38 = vst [vmem:[%s10] sm:$0xff] 0.0
  $region41: #{megnet_layer_forward.6} parent=0 // pred_fallthru
    _
  %v39 = vld [vmem:[%s0] sm:$0xff]
  %v40 = vld [vmem:[%s0 + $0x8] sm:$0xff]
  %v41 = vld [vmem:[%s0 + $0x10] sm:$0xff]
  %v42 = vld [vmem:[%s0 + $0x18] sm:$0xff]
  %v43 = vld [vmem:[%s0 + $0x20] sm:$0xff]
  %v44 = vld [vmem:[%s0 + $0x28] sm:$0xff]
  %v45 = vld [vmem:[%s0 + $0x30] sm:$0xff]
  %v46 = vld [vmem:[%s0 + $0x38] sm:$0xff]
  %v47 = vld [vmem:[%s0 + $0x40] sm:$0xff]
  %v48 = vld [vmem:[%s0 + $0x48] sm:$0xff]
  %v49 = vld [vmem:[%s0 + $0x50] sm:$0xff]
  %v50 = vld [vmem:[%s0 + $0x58] sm:$0xff]
  %v51 = vld [vmem:[%s0 + $0x60] sm:$0xff]
  %v52 = vld [vmem:[%s0 + $0x68] sm:$0xff]
  %v53 = vld [vmem:[%s0 + $0x70] sm:$0xff]
  %v54 = vld [vmem:[%s0 + $0x78] sm:$0xff]
  %v55 = vld [vmem:[%s1] sm:$0xff]
  %v56 = vld [vmem:[%s1 + $0x8] sm:$0xff]
  %v57 = vld [vmem:[%s1 + $0x10] sm:$0xff]
  %v58 = vld [vmem:[%s1 + $0x18] sm:$0xff]
  %v59 = vld [vmem:[%s1 + $0x20] sm:$0xff]
  %v60 = vld [vmem:[%s1 + $0x28] sm:$0xff]
  %v61 = vld [vmem:[%s1 + $0x30] sm:$0xff]
  %v62 = vld [vmem:[%s1 + $0x38] sm:$0xff]
  %v63 = vld [vmem:[%s1 + $0x40] sm:$0xff]
  %v64 = vld [vmem:[%s1 + $0x48] sm:$0xff]
  %v65 = vld [vmem:[%s1 + $0x50] sm:$0xff]
  %v66 = vld [vmem:[%s1 + $0x58] sm:$0xff]
  %v67 = vld [vmem:[%s1 + $0x60] sm:$0xff]
  %v68 = vld [vmem:[%s1 + $0x68] sm:$0xff]
  %v69 = vld [vmem:[%s1 + $0x70] sm:$0xff]
  %v70 = vld [vmem:[%s1 + $0x78] sm:$0xff]
  %v71 = vmax.f32 %v55, 1.0
  %v72 = vmax.f32 %v56, 1.0
  %v73 = vmax.f32 %v57, 1.0
  %v74 = vmax.f32 %v58, 1.0
  %v75 = vmax.f32 %v59, 1.0
  %v76 = vmax.f32 %v60, 1.0
  %v77 = vmax.f32 %v61, 1.0
  %v78 = vmax.f32 %v62, 1.0
  %v79 = vmax.f32 %v63, 1.0
  %v80 = vmax.f32 %v64, 1.0
  %v81 = vmax.f32 %v65, 1.0
  %v82 = vmax.f32 %v66, 1.0
  %v83 = vmax.f32 %v67, 1.0
  %v84 = vmax.f32 %v68, 1.0
  %v85 = vmax.f32 %v69, 1.0
  %v86 = vmax.f32 %v70, 1.0
  %v87 = vrcp.pop %v71
  %v88 = vrcp.pop %v72
  %v89 = vrcp.pop %v73
  %v90 = vrcp.pop %v74
  %v91 = vrcp.pop %v75
  %v92 = vrcp.pop %v76
  %v93 = vrcp.pop %v77
  %v94 = vrcp.pop %v78
  %v95 = vrcp.pop %v79
  %v96 = vrcp.pop %v80
  %v97 = vrcp.pop %v81
  %v98 = vrcp.pop %v82
  %v99 = vrcp.pop %v83
  %v100 = vrcp.pop %v84
  %v101 = vrcp.pop %v85
  %v102 = vrcp.pop %v86
  %119 = vrot.lane.b32.xlu0 %v87, 96
  %v120 = vpop.permute.xlu0 %119
  %121 = vrot.lane.b32.xlu0 %v88, 96
  %v122 = vpop.permute.xlu0 %121
  %123 = vrot.lane.b32.xlu0 %v89, 96
  %v124 = vpop.permute.xlu0 %123
  %125 = vrot.lane.b32.xlu0 %v90, 96
  %v126 = vpop.permute.xlu0 %125
  %127 = vrot.lane.b32.xlu0 %v91, 96
  %v128 = vpop.permute.xlu0 %127
  %129 = vrot.lane.b32.xlu0 %v92, 96
  %v130 = vpop.permute.xlu0 %129
  %131 = vrot.lane.b32.xlu0 %v93, 96
  %v132 = vpop.permute.xlu0 %131
  %133 = vrot.lane.b32.xlu0 %v94, 96
  %v134 = vpop.permute.xlu0 %133
  %135 = vrot.lane.b32.xlu0 %v95, 96
  %v136 = vpop.permute.xlu0 %135
  %137 = vrot.lane.b32.xlu0 %v96, 96
  %v138 = vpop.permute.xlu0 %137
  %139 = vrot.lane.b32.xlu0 %v97, 96
  %v140 = vpop.permute.xlu0 %139
  %141 = vrot.lane.b32.xlu0 %v98, 96
  %v142 = vpop.permute.xlu0 %141
  %143 = vrot.lane.b32.xlu0 %v99, 96
  %v144 = vpop.permute.xlu0 %143
  %145 = vrot.lane.b32.xlu0 %v100, 96
  %v146 = vpop.permute.xlu0 %145
  %147 = vrot.lane.b32.xlu0 %v101, 96
  %v148 = vpop.permute.xlu0 %147
  %149 = vrot.lane.b32.xlu0 %v102, 96
  %v150 = vpop.permute.xlu0 %149
  %v167 = vmul.f32 %v55, %v120
  %v168 = vmul.f32 %v56, %v122
  %v169 = vmul.f32 %v57, %v124
  %v170 = vmul.f32 %v58, %v126
  %v171 = vmul.f32 %v59, %v128
  %v172 = vmul.f32 %v60, %v130
  %v173 = vmul.f32 %v61, %v132
  %v174 = vmul.f32 %v62, %v134
  %v175 = vmul.f32 %v63, %v136
  %v176 = vmul.f32 %v64, %v138
  %v177 = vmul.f32 %v65, %v140
  %v178 = vmul.f32 %v66, %v142
  %v179 = vmul.f32 %v67, %v144
  %v180 = vmul.f32 %v68, %v146
  %v181 = vmul.f32 %v69, %v148
  %v182 = vmul.f32 %v70, %v150
  %v183 = vld [vmem:[%s4] sm:$0xff]
  %v184 = vld [vmem:[%s4 + $0x8] sm:$0xff]
  %v185 = vld [vmem:[%s4 + $0x10] sm:$0xff]
  %v186 = vld [vmem:[%s4 + $0x18] sm:$0xff]
  %v187 = vld [vmem:[%s4 + $0x20] sm:$0xff]
  %v188 = vld [vmem:[%s4 + $0x28] sm:$0xff]
  %v189 = vld [vmem:[%s4 + $0x30] sm:$0xff]
  %v190 = vld [vmem:[%s4 + $0x38] sm:$0xff]
  %v191 = vld [vmem:[%s4 + $0x40] sm:$0xff]
  %v192 = vld [vmem:[%s4 + $0x48] sm:$0xff]
  %v193 = vld [vmem:[%s4 + $0x50] sm:$0xff]
  %v194 = vld [vmem:[%s4 + $0x58] sm:$0xff]
  %v195 = vld [vmem:[%s4 + $0x60] sm:$0xff]
  %v196 = vld [vmem:[%s4 + $0x68] sm:$0xff]
  %v197 = vld [vmem:[%s4 + $0x70] sm:$0xff]
  %v198 = vld [vmem:[%s4 + $0x78] sm:$0xff]
  %v199 = vld [vmem:[%s5] sm:$0xff]
  %v200 = vld [vmem:[%s5 + $0x8] sm:$0xff]
  %v201 = vld [vmem:[%s5 + $0x10] sm:$0xff]
  %v202 = vld [vmem:[%s5 + $0x18] sm:$0xff]
  %vm203 = vcmask 261120
  %v205 = vsel %vm203, %v167, 0
  %v208 = vsel %vm203, %v168, 0
  %v211 = vsel %vm203, %v169, 0
  %v214 = vsel %vm203, %v170, 0
  %v217 = vsel %vm203, %v171, 0
  %v220 = vsel %vm203, %v172, 0
  %v223 = vsel %vm203, %v173, 0
  %v226 = vsel %vm203, %v174, 0
  %v229 = vsel %vm203, %v175, 0
  %v232 = vsel %vm203, %v176, 0
  %v235 = vsel %vm203, %v177, 0
  %v238 = vsel %vm203, %v178, 0
  %v241 = vsel %vm203, %v179, 0
  %v244 = vsel %vm203, %v180, 0
  %v247 = vsel %vm203, %v181, 0
  %v250 = vsel %vm203, %v182, 0
  %252 = vmatprep.subr.mxu0 0.0
  %253 = vmatpush1.msra.mxu0 %v199
  %254 = vmatprep.subr.mxu0 0.0
  %255 = vmatpush1.msra.mxu0 %v200
  %256 = vmatprep.subr.mxu0 0.0
  %257 = vmatpush1.msra.mxu0 %v201
  %258 = vmatprep.subr.mxu0 0.0
  %259 = vmatpush1.msra.mxu0 %v202
  %260 = vmatprep.subr.mxu0 0.0
  %261 = vmatpush1.msra.mxu0 0.0
  %262 = vmatprep.subr.mxu0 0.0
  %263 = vmatpush1.msra.mxu0 0.0
  %264 = vmatprep.subr.mxu0 0.0
  %265 = vmatpush1.msra.mxu0 0.0
  %266 = vmatprep.subr.mxu0 0.0
  %267 = vmatpush1.msra.mxu0 0.0
  %268 = vmatprep.subr.mxu0 0.0
  %269 = vmatpush1.msra.mxu0 0.0
  %270 = vmatprep.subr.mxu0 0.0
  %271 = vmatpush1.msra.mxu0 0.0
  %272 = vmatprep.subr.mxu0 0.0
  %273 = vmatpush1.msra.mxu0 0.0
  %274 = vmatprep.subr.mxu0 0.0
  %275 = vmatpush1.msra.mxu0 0.0
  %276 = vmatprep.subr.mxu0 0.0
  %277 = vmatpush1.msra.mxu0 0.0
  %278 = vmatprep.subr.mxu0 0.0
  %279 = vmatpush1.msra.mxu0 0.0
  %280 = vmatprep.subr.mxu0 0.0
  %281 = vmatpush1.msra.mxu0 0.0
  %282 = vmatprep.subr.mxu0 0.0
  %283 = vmatpush1.msra.mxu0 0.0
  %284 = vmatprep.subr.mxu0 0.0
  %285 = vmatpush1.msra.mxu0 0.0
  %286 = vmatprep.subr.mxu0 0.0
  %287 = vmatpush1.msra.mxu0 0.0
  %288 = vmatprep.subr.mxu0 0.0
  %289 = vmatpush1.msra.mxu0 0.0
  %290 = vmatprep.subr.mxu0 0.0
  %291 = vmatpush1.msra.mxu0 0.0
  %292 = vmatprep.subr.mxu0 0.0
  %293 = vmatpush1.msra.mxu0 0.0
  %294 = vmatprep.subr.mxu0 0.0
  %295 = vmatpush1.msra.mxu0 0.0
  %296 = vmatprep.subr.mxu0 0.0
  %297 = vmatpush1.msra.mxu0 0.0
  %298 = vmatprep.subr.mxu0 0.0
  %299 = vmatpush1.msra.mxu0 0.0
  %300 = vmatprep.subr.mxu0 0.0
  %301 = vmatpush1.msra.mxu0 0.0
  %302 = vmatprep.subr.mxu0 0.0
  %303 = vmatpush1.msra.mxu0 0.0
  %304 = vmatprep.subr.mxu0 0.0
  %305 = vmatpush1.msra.mxu0 0.0
  %306 = vmatprep.subr.mxu0 0.0
  %307 = vmatpush1.msra.mxu0 0.0
  %308 = vmatprep.subr.mxu0 0.0
  %309 = vmatpush1.msra.mxu0 0.0
  %310 = vmatprep.subr.mxu0 0.0
  %311 = vmatpush1.msra.mxu0 0.0
  %312 = vmatprep.subr.mxu0 0.0
  %313 = vmatpush1.msra.mxu0 0.0
  %314 = vmatprep.subr.mxu0 0.0
  %315 = vmatpush1.msra.mxu0 0.0
  %316 = vmatprep.mubr.f32.mxu0 0.0
  %317 = vmatmul.mubr.f32.gmra.mrb[0].mxu0 %v205
  %v318 = vpop.f32.mrb[0].mxu0
  %v319 = vadd.f32 0.0, %v318
  %v320 = vpop.f32.mrb[0].mxu0
  %321 = vmatprep.mubr.f32.mxu0 0.0
  %322 = vmatmul.mubr.f32.gmra.mrb[0].mxu0 %v208
  %v323 = vpop.f32.mrb[0].mxu0
  %v324 = vadd.f32 0.0, %v323
  %v325 = vpop.f32.mrb[0].mxu0
  %326 = vmatprep.mubr.f32.mxu0 0.0
  %327 = vmatmul.mubr.f32.gmra.mrb[0].mxu0 %v211
  %v328 = vpop.f32.mrb[0].mxu0
  %v329 = vadd.f32 0.0, %v328
  %v330 = vpop.f32.mrb[0].mxu0
  %331 = vmatprep.mubr.f32.mxu0 0.0
  %332 = vmatmul.mubr.f32.gmra.mrb[0].mxu0 %v214
  %v333 = vpop.f32.mrb[0].mxu0
  %v334 = vadd.f32 0.0, %v333
  %v335 = vpop.f32.mrb[0].mxu0
  %336 = vmatprep.mubr.f32.mxu0 0.0
  %337 = vmatmul.mubr.f32.gmra.mrb[0].mxu0 %v217
  %v338 = vpop.f32.mrb[0].mxu0
  %v339 = vadd.f32 0.0, %v338
  %v340 = vpop.f32.mrb[0].mxu0
  %341 = vmatprep.mubr.f32.mxu0 0.0
  %342 = vmatmul.mubr.f32.gmra.mrb[0].mxu0 %v220
  %v343 = vpop.f32.mrb[0].mxu0
  %v344 = vadd.f32 0.0, %v343
  %v345 = vpop.f32.mrb[0].mxu0
  %346 = vmatprep.mubr.f32.mxu0 0.0
  %347 = vmatmul.mubr.f32.gmra.mrb[0].mxu0 %v223
  %v348 = vpop.f32.mrb[0].mxu0
  %v349 = vadd.f32 0.0, %v348
  %v350 = vpop.f32.mrb[0].mxu0
  %351 = vmatprep.mubr.f32.mxu0 0.0
  %352 = vmatmul.mubr.f32.gmra.mrb[0].mxu0 %v226
  %v353 = vpop.f32.mrb[0].mxu0
  %v354 = vadd.f32 0.0, %v353
  %v355 = vpop.f32.mrb[0].mxu0
  %356 = vmatprep.mubr.f32.mxu0 0.0
  %357 = vmatmul.mubr.f32.gmra.mrb[0].mxu0 %v229
  %v358 = vpop.f32.mrb[0].mxu0
  %v359 = vadd.f32 0.0, %v358
  %v360 = vpop.f32.mrb[0].mxu0
  %361 = vmatprep.mubr.f32.mxu0 0.0
  %362 = vmatmul.mubr.f32.gmra.mrb[0].mxu0 %v232
  %v363 = vpop.f32.mrb[0].mxu0
  %v364 = vadd.f32 0.0, %v363
  %v365 = vpop.f32.mrb[0].mxu0
  %366 = vmatprep.mubr.f32.mxu0 0.0
  %367 = vmatmul.mubr.f32.gmra.mrb[0].mxu0 %v235
  %v368 = vpop.f32.mrb[0].mxu0
  %v369 = vadd.f32 0.0, %v368
  %v370 = vpop.f32.mrb[0].mxu0
  %371 = vmatprep.mubr.f32.mxu0 0.0
  %372 = vmatmul.mubr.f32.gmra.mrb[0].mxu0 %v238
  %v373 = vpop.f32.mrb[0].mxu0
  %v374 = vadd.f32 0.0, %v373
  %v375 = vpop.f32.mrb[0].mxu0
  %376 = vmatprep.mubr.f32.mxu0 0.0
  %377 = vmatmul.mubr.f32.gmra.mrb[0].mxu0 %v241
  %v378 = vpop.f32.mrb[0].mxu0
  %v379 = vadd.f32 0.0, %v378
  %v380 = vpop.f32.mrb[0].mxu0
  %381 = vmatprep.mubr.f32.mxu0 0.0
  %382 = vmatmul.mubr.f32.gmra.mrb[0].mxu0 %v244
  %v383 = vpop.f32.mrb[0].mxu0
  %v384 = vadd.f32 0.0, %v383
  %v385 = vpop.f32.mrb[0].mxu0
  %386 = vmatprep.mubr.f32.mxu0 0.0
  %387 = vmatmul.mubr.f32.gmra.mrb[0].mxu0 %v247
  %v388 = vpop.f32.mrb[0].mxu0
  %v389 = vadd.f32 0.0, %v388
  %v390 = vpop.f32.mrb[0].mxu0
  %391 = vmatprep.mubr.f32.mxu0 0.0
  %392 = vmatmul.mubr.f32.gmra.mrb[0].mxu0 %v250
  %v393 = vpop.f32.mrb[0].mxu0
  %v394 = vadd.f32 0.0, %v393
  %v395 = vpop.f32.mrb[0].mxu0
  %396 = vdwg.mxu0
  %397 = vmatprep.subr.mxu0 0.0
  %398 = vmatpush1.msra.mxu0 %v183
  %399 = vmatprep.subr.mxu0 0.0
  %400 = vmatpush1.msra.mxu0 %v184
  %401 = vmatprep.subr.mxu0 0.0
  %402 = vmatpush1.msra.mxu0 %v185
  %403 = vmatprep.subr.mxu0 0.0
  %404 = vmatpush1.msra.mxu0 %v186
  %405 = vmatprep.subr.mxu0 0.0
  %406 = vmatpush1.msra.mxu0 %v187
  %407 = vmatprep.subr.mxu0 0.0
  %408 = vmatpush1.msra.mxu0 %v188
  %409 = vmatprep.subr.mxu0 0.0
  %410 = vmatpush1.msra.mxu0 %v189
  %411 = vmatprep.subr.mxu0 0.0
  %412 = vmatpush1.msra.mxu0 %v190
  %413 = vmatprep.subr.mxu0 0.0
  %414 = vmatpush1.msra.mxu0 %v191
  %415 = vmatprep.subr.mxu0 0.0
  %416 = vmatpush1.msra.mxu0 %v192
  %417 = vmatprep.subr.mxu0 0.0
  %418 = vmatpush1.msra.mxu0 %v193
  %419 = vmatprep.subr.mxu0 0.0
  %420 = vmatpush1.msra.mxu0 %v194
  %421 = vmatprep.subr.mxu0 0.0
  %422 = vmatpush1.msra.mxu0 %v195
  %423 = vmatprep.subr.mxu0 0.0
  %424 = vmatpush1.msra.mxu0 %v196
  %425 = vmatprep.subr.mxu0 0.0
  %426 = vmatpush1.msra.mxu0 %v197
  %427 = vmatprep.subr.mxu0 0.0
  %428 = vmatpush1.msra.mxu0 %v198
  %429 = vmatprep.subr.mxu0 0.0
  %430 = vmatpush1.msra.mxu0 0.0
  %431 = vmatprep.subr.mxu0 0.0
  %432 = vmatpush1.msra.mxu0 0.0
  %433 = vmatprep.subr.mxu0 0.0
  %434 = vmatpush1.msra.mxu0 0.0
  %435 = vmatprep.subr.mxu0 0.0
  %436 = vmatpush1.msra.mxu0 0.0
  %437 = vmatprep.subr.mxu0 0.0
  %438 = vmatpush1.msra.mxu0 0.0
  %439 = vmatprep.subr.mxu0 0.0
  %440 = vmatpush1.msra.mxu0 0.0
  %441 = vmatprep.subr.mxu0 0.0
  %442 = vmatpush1.msra.mxu0 0.0
  %443 = vmatprep.subr.mxu0 0.0
  %444 = vmatpush1.msra.mxu0 0.0
  %445 = vmatprep.subr.mxu0 0.0
  %446 = vmatpush1.msra.mxu0 0.0
  %447 = vmatprep.subr.mxu0 0.0
  %448 = vmatpush1.msra.mxu0 0.0
  %449 = vmatprep.subr.mxu0 0.0
  %450 = vmatpush1.msra.mxu0 0.0
  %451 = vmatprep.subr.mxu0 0.0
  %452 = vmatpush1.msra.mxu0 0.0
  %453 = vmatprep.subr.mxu0 0.0
  %454 = vmatpush1.msra.mxu0 0.0
  %455 = vmatprep.subr.mxu0 0.0
  %456 = vmatpush1.msra.mxu0 0.0
  %457 = vmatprep.subr.mxu0 0.0
  %458 = vmatpush1.msra.mxu0 0.0
  %459 = vmatprep.subr.mxu0 0.0
  %460 = vmatpush1.msra.mxu0 0.0
  %461 = vmatprep.mubr.f32.mxu0 0.0
  %462 = vmatmul.mubr.f32.gmra.mrb[0].mxu0 %v39
  %v463 = vpop.f32.mrb[0].mxu0
  %v464 = vadd.f32 %v319, %v463
  %v465 = vpop.f32.mrb[0].mxu0
  %466 = vmatprep.mubr.f32.mxu0 0.0
  %467 = vmatmul.mubr.f32.gmra.mrb[0].mxu0 %v40
  %v468 = vpop.f32.mrb[0].mxu0
  %v469 = vadd.f32 %v324, %v468
  %v470 = vpop.f32.mrb[0].mxu0
  %471 = vmatprep.mubr.f32.mxu0 0.0
  %472 = vmatmul.mubr.f32.gmra.mrb[0].mxu0 %v41
  %v473 = vpop.f32.mrb[0].mxu0
  %v474 = vadd.f32 %v329, %v473
  %v475 = vpop.f32.mrb[0].mxu0
  %476 = vmatprep.mubr.f32.mxu0 0.0
  %477 = vmatmul.mubr.f32.gmra.mrb[0].mxu0 %v42
  %v478 = vpop.f32.mrb[0].mxu0
  %v479 = vadd.f32 %v334, %v478
  %v480 = vpop.f32.mrb[0].mxu0
  %481 = vmatprep.mubr.f32.mxu0 0.0
  %482 = vmatmul.mubr.f32.gmra.mrb[0].mxu0 %v43
  %v483 = vpop.f32.mrb[0].mxu0
  %v484 = vadd.f32 %v339, %v483
  %v485 = vpop.f32.mrb[0].mxu0
  %486 = vmatprep.mubr.f32.mxu0 0.0
  %487 = vmatmul.mubr.f32.gmra.mrb[0].mxu0 %v44
  %v488 = vpop.f32.mrb[0].mxu0
  %v489 = vadd.f32 %v344, %v488
  %v490 = vpop.f32.mrb[0].mxu0
  %491 = vmatprep.mubr.f32.mxu0 0.0
  %492 = vmatmul.mubr.f32.gmra.mrb[0].mxu0 %v45
  %v493 = vpop.f32.mrb[0].mxu0
  %v494 = vadd.f32 %v349, %v493
  %v495 = vpop.f32.mrb[0].mxu0
  %496 = vmatprep.mubr.f32.mxu0 0.0
  %497 = vmatmul.mubr.f32.gmra.mrb[0].mxu0 %v46
  %v498 = vpop.f32.mrb[0].mxu0
  %v499 = vadd.f32 %v354, %v498
  %v500 = vpop.f32.mrb[0].mxu0
  %501 = vmatprep.mubr.f32.mxu0 0.0
  %502 = vmatmul.mubr.f32.gmra.mrb[0].mxu0 %v47
  %v503 = vpop.f32.mrb[0].mxu0
  %v504 = vadd.f32 %v359, %v503
  %v505 = vpop.f32.mrb[0].mxu0
  %506 = vmatprep.mubr.f32.mxu0 0.0
  %507 = vmatmul.mubr.f32.gmra.mrb[0].mxu0 %v48
  %v508 = vpop.f32.mrb[0].mxu0
  %v509 = vadd.f32 %v364, %v508
  %v510 = vpop.f32.mrb[0].mxu0
  %511 = vmatprep.mubr.f32.mxu0 0.0
  %512 = vmatmul.mubr.f32.gmra.mrb[0].mxu0 %v49
  %v513 = vpop.f32.mrb[0].mxu0
  %v514 = vadd.f32 %v369, %v513
  %v515 = vpop.f32.mrb[0].mxu0
  %516 = vmatprep.mubr.f32.mxu0 0.0
  %517 = vmatmul.mubr.f32.gmra.mrb[0].mxu0 %v50
  %v518 = vpop.f32.mrb[0].mxu0
  %v519 = vadd.f32 %v374, %v518
  %v520 = vpop.f32.mrb[0].mxu0
  %521 = vmatprep.mubr.f32.mxu0 0.0
  %522 = vmatmul.mubr.f32.gmra.mrb[0].mxu0 %v51
  %v523 = vpop.f32.mrb[0].mxu0
  %v524 = vadd.f32 %v379, %v523
  %v525 = vpop.f32.mrb[0].mxu0
  %526 = vmatprep.mubr.f32.mxu0 0.0
  %527 = vmatmul.mubr.f32.gmra.mrb[0].mxu0 %v52
  %v528 = vpop.f32.mrb[0].mxu0
  %v529 = vadd.f32 %v384, %v528
  %v530 = vpop.f32.mrb[0].mxu0
  %531 = vmatprep.mubr.f32.mxu0 0.0
  %532 = vmatmul.mubr.f32.gmra.mrb[0].mxu0 %v53
  %v533 = vpop.f32.mrb[0].mxu0
  %v534 = vadd.f32 %v389, %v533
  %v535 = vpop.f32.mrb[0].mxu0
  %536 = vmatprep.mubr.f32.mxu0 0.0
  %537 = vmatmul.mubr.f32.gmra.mrb[0].mxu0 %v54
  %v538 = vpop.f32.mrb[0].mxu0
  %v539 = vadd.f32 %v394, %v538
  %v540 = vpop.f32.mrb[0].mxu0
  %541 = vdwg.mxu0
  %v542 = vld [vmem:[%s6] sm:$0x1]
  %v544 = vlaneseq
  %v545 = vshrl.u32 %v544, 7
  %v546 = vsub.s32 0, %v545
  %v547 = vrot.slane %v542, %v546
  %v549 = vadd.f32 %v464, %v547
  %v550 = vadd.f32 %v469, %v547
  %v551 = vadd.f32 %v474, %v547
  %v552 = vadd.f32 %v479, %v547
  %v553 = vadd.f32 %v484, %v547
  %v554 = vadd.f32 %v489, %v547
  %v555 = vadd.f32 %v494, %v547
  %v556 = vadd.f32 %v499, %v547
  %v557 = vadd.f32 %v504, %v547
  %v558 = vadd.f32 %v509, %v547
  %v559 = vadd.f32 %v514, %v547
  %v560 = vadd.f32 %v519, %v547
  %v561 = vadd.f32 %v524, %v547
  %v562 = vadd.f32 %v529, %v547
  %v563 = vadd.f32 %v534, %v547
  %v564 = vadd.f32 %v539, %v547
  %vm565 = vcmp.gt.f32.partialorder %v549, 0.0
  %vm566 = vcmp.gt.f32.partialorder %v550, 0.0
  %vm567 = vcmp.gt.f32.partialorder %v551, 0.0
  %vm568 = vcmp.gt.f32.partialorder %v552, 0.0
  %vm569 = vcmp.gt.f32.partialorder %v553, 0.0
  %vm570 = vcmp.gt.f32.partialorder %v554, 0.0
  %vm571 = vcmp.gt.f32.partialorder %v555, 0.0
  %vm572 = vcmp.gt.f32.partialorder %v556, 0.0
  %vm573 = vcmp.gt.f32.partialorder %v557, 0.0
  %vm574 = vcmp.gt.f32.partialorder %v558, 0.0
  %vm575 = vcmp.gt.f32.partialorder %v559, 0.0
  %vm576 = vcmp.gt.f32.partialorder %v560, 0.0
  %vm577 = vcmp.gt.f32.partialorder %v561, 0.0
  %vm578 = vcmp.gt.f32.partialorder %v562, 0.0
  %vm579 = vcmp.gt.f32.partialorder %v563, 0.0
  %vm580 = vcmp.gt.f32.partialorder %v564, 0.0
  %v581 = vmul.f32 %v549, 0.01
  %v582 = vmul.f32 %v550, 0.01
  %v583 = vmul.f32 %v551, 0.01
  %v584 = vmul.f32 %v552, 0.01
  %v585 = vmul.f32 %v553, 0.01
  %v586 = vmul.f32 %v554, 0.01
  %v587 = vmul.f32 %v555, 0.01
  %v588 = vmul.f32 %v556, 0.01
  %v589 = vmul.f32 %v557, 0.01
  %v590 = vmul.f32 %v558, 0.01
  %v591 = vmul.f32 %v559, 0.01
  %v592 = vmul.f32 %v560, 0.01
  %v593 = vmul.f32 %v561, 0.01
  %v594 = vmul.f32 %v562, 0.01
  %v595 = vmul.f32 %v563, 0.01
  %v596 = vmul.f32 %v564, 0.01
  %v597 = vsel %vm565, %v549, %v581
  %v598 = vsel %vm566, %v550, %v582
  %v599 = vsel %vm567, %v551, %v583
  %v600 = vsel %vm568, %v552, %v584
  %v601 = vsel %vm569, %v553, %v585
  %v602 = vsel %vm570, %v554, %v586
  %v603 = vsel %vm571, %v555, %v587
  %v604 = vsel %vm572, %v556, %v588
  %v605 = vsel %vm573, %v557, %v589
  %v606 = vsel %vm574, %v558, %v590
  %v607 = vsel %vm575, %v559, %v591
  %v608 = vsel %vm576, %v560, %v592
  %v609 = vsel %vm577, %v561, %v593
  %v610 = vsel %vm578, %v562, %v594
  %v611 = vsel %vm579, %v563, %v595
  %v612 = vsel %vm580, %v564, %v596
  %v613 = vld [vmem:[%s7] sm:$0xff]
  %v614 = vld [vmem:[%s7 + $0x8] sm:$0xff]
  %v615 = vld [vmem:[%s7 + $0x10] sm:$0xff]
  %v616 = vld [vmem:[%s7 + $0x18] sm:$0xff]
  %v617 = vld [vmem:[%s7 + $0x20] sm:$0xff]
  %v618 = vld [vmem:[%s7 + $0x28] sm:$0xff]
  %v619 = vld [vmem:[%s7 + $0x30] sm:$0xff]
  %v620 = vld [vmem:[%s7 + $0x38] sm:$0xff]
  %v621 = vld [vmem:[%s8] sm:$0x1]
  %v623 = vlaneseq
  %v624 = vshrl.u32 %v623, 7
  %v625 = vsub.s32 0, %v624
  %v626 = vrot.slane %v621, %v625
  %vm628 = vcmask 523264
  %v630 = vsel %vm628, %v597, 0
  %v633 = vsel %vm628, %v598, 0
  %v636 = vsel %vm628, %v599, 0
  %v639 = vsel %vm628, %v600, 0
  %v642 = vsel %vm628, %v601, 0
  %v645 = vsel %vm628, %v602, 0
  %v648 = vsel %vm628, %v603, 0
  %v651 = vsel %vm628, %v604, 0
  %v654 = vsel %vm628, %v605, 0
  %v657 = vsel %vm628, %v606, 0
  %v660 = vsel %vm628, %v607, 0
  %v663 = vsel %vm628, %v608, 0
  %v666 = vsel %vm628, %v609, 0
  %v669 = vsel %vm628, %v610, 0
  %v672 = vsel %vm628, %v611, 0
  %v675 = vsel %vm628, %v612, 0
  %677 = vmatprep.subr.mxu0 0.0
  %678 = vmatpush1.msra.mxu0 %v613
  %679 = vmatprep.subr.mxu0 0.0
  %680 = vmatpush1.msra.mxu0 %v614
  %681 = vmatprep.subr.mxu0 0.0
  %682 = vmatpush1.msra.mxu0 %v615
  %683 = vmatprep.subr.mxu0 0.0
  %684 = vmatpush1.msra.mxu0 %v616
  %685 = vmatprep.subr.mxu0 0.0
  %686 = vmatpush1.msra.mxu0 %v617
  %687 = vmatprep.subr.mxu0 0.0
  %688 = vmatpush1.msra.mxu0 %v618
  %689 = vmatprep.subr.mxu0 0.0
  %690 = vmatpush1.msra.mxu0 %v619
  %691 = vmatprep.subr.mxu0 0.0
  %692 = vmatpush1.msra.mxu0 %v620
  %693 = vmatprep.subr.mxu0 0.0
  %694 = vmatpush1.msra.mxu0 0.0
  %695 = vmatprep.subr.mxu0 0.0
  %696 = vmatpush1.msra.mxu0 0.0
  %697 = vmatprep.subr.mxu0 0.0
  %698 = vmatpush1.msra.mxu0 0.0
  %699 = vmatprep.subr.mxu0 0.0
  %700 = vmatpush1.msra.mxu0 0.0
  %701 = vmatprep.subr.mxu0 0.0
  %702 = vmatpush1.msra.mxu0 0.0
  %703 = vmatprep.subr.mxu0 0.0
  %704 = vmatpush1.msra.mxu0 0.0
  %705 = vmatprep.subr.mxu0 0.0
  %706 = vmatpush1.msra.mxu0 0.0
  %707 = vmatprep.subr.mxu0 0.0
  %708 = vmatpush1.msra.mxu0 0.0
  %709 = vmatprep.subr.mxu0 0.0
  %710 = vmatpush1.msra.mxu0 0.0
  %711 = vmatprep.subr.mxu0 0.0
  %712 = vmatpush1.msra.mxu0 0.0
  %713 = vmatprep.subr.mxu0 0.0
  %714 = vmatpush1.msra.mxu0 0.0
  %715 = vmatprep.subr.mxu0 0.0
  %716 = vmatpush1.msra.mxu0 0.0
  %717 = vmatprep.subr.mxu0 0.0
  %718 = vmatpush1.msra.mxu0 0.0
  %719 = vmatprep.subr.mxu0 0.0
  %720 = vmatpush1.msra.mxu0 0.0
  %721 = vmatprep.subr.mxu0 0.0
  %722 = vmatpush1.msra.mxu0 0.0
  %723 = vmatprep.subr.mxu0 0.0
  %724 = vmatpush1.msra.mxu0 0.0
  %725 = vmatprep.subr.mxu0 0.0
  %726 = vmatpush1.msra.mxu0 0.0
  %727 = vmatprep.subr.mxu0 0.0
  %728 = vmatpush1.msra.mxu0 0.0
  %729 = vmatprep.subr.mxu0 0.0
  %730 = vmatpush1.msra.mxu0 0.0
  %731 = vmatprep.subr.mxu0 0.0
  %732 = vmatpush1.msra.mxu0 0.0
  %733 = vmatprep.subr.mxu0 0.0
  %734 = vmatpush1.msra.mxu0 0.0
  %735 = vmatprep.subr.mxu0 0.0
  %736 = vmatpush1.msra.mxu0 0.0
  %737 = vmatprep.subr.mxu0 0.0
  %738 = vmatpush1.msra.mxu0 0.0
  %739 = vmatprep.subr.mxu0 0.0
  %740 = vmatpush1.msra.mxu0 0.0
  %741 = vmatprep.mubr.f32.mxu0 0.0
  %742 = vmatmul.mubr.f32.gmra.mrb[0].mxu0 %v630
  %v743 = vpop.f32.mrb[0].mxu0
  %v744 = vadd.f32 %v626, %v743
  %v745 = vpop.f32.mrb[0].mxu0
  %746 = vmatprep.mubr.f32.mxu0 0.0
  %747 = vmatmul.mubr.f32.gmra.mrb[0].mxu0 %v633
  %v748 = vpop.f32.mrb[0].mxu0
  %v749 = vadd.f32 %v626, %v748
  %v750 = vpop.f32.mrb[0].mxu0
  %751 = vmatprep.mubr.f32.mxu0 0.0
  %752 = vmatmul.mubr.f32.gmra.mrb[0].mxu0 %v636
  %v753 = vpop.f32.mrb[0].mxu0
  %v754 = vadd.f32 %v626, %v753
  %v755 = vpop.f32.mrb[0].mxu0
  %756 = vmatprep.mubr.f32.mxu0 0.0
  %757 = vmatmul.mubr.f32.gmra.mrb[0].mxu0 %v639
  %v758 = vpop.f32.mrb[0].mxu0
  %v759 = vadd.f32 %v626, %v758
  %v760 = vpop.f32.mrb[0].mxu0
  %761 = vmatprep.mubr.f32.mxu0 0.0
  %762 = vmatmul.mubr.f32.gmra.mrb[0].mxu0 %v642
  %v763 = vpop.f32.mrb[0].mxu0
  %v764 = vadd.f32 %v626, %v763
  %v765 = vpop.f32.mrb[0].mxu0
  %766 = vmatprep.mubr.f32.mxu0 0.0
  %767 = vmatmul.mubr.f32.gmra.mrb[0].mxu0 %v645
  %v768 = vpop.f32.mrb[0].mxu0
  %v769 = vadd.f32 %v626, %v768
  %v770 = vpop.f32.mrb[0].mxu0
  %771 = vmatprep.mubr.f32.mxu0 0.0
  %772 = vmatmul.mubr.f32.gmra.mrb[0].mxu0 %v648
  %v773 = vpop.f32.mrb[0].mxu0
  %v774 = vadd.f32 %v626, %v773
  %v775 = vpop.f32.mrb[0].mxu0
  %776 = vmatprep.mubr.f32.mxu0 0.0
  %777 = vmatmul.mubr.f32.gmra.mrb[0].mxu0 %v651
  %v778 = vpop.f32.mrb[0].mxu0
  %v779 = vadd.f32 %v626, %v778
  %v780 = vpop.f32.mrb[0].mxu0
  %781 = vmatprep.mubr.f32.mxu0 0.0
  %782 = vmatmul.mubr.f32.gmra.mrb[0].mxu0 %v654
  %v783 = vpop.f32.mrb[0].mxu0
  %v784 = vadd.f32 %v626, %v783
  %v785 = vpop.f32.mrb[0].mxu0
  %786 = vmatprep.mubr.f32.mxu0 0.0
  %787 = vmatmul.mubr.f32.gmra.mrb[0].mxu0 %v657
  %v788 = vpop.f32.mrb[0].mxu0
  %v789 = vadd.f32 %v626, %v788
  %v790 = vpop.f32.mrb[0].mxu0
  %791 = vmatprep.mubr.f32.mxu0 0.0
  %792 = vmatmul.mubr.f32.gmra.mrb[0].mxu0 %v660
  %v793 = vpop.f32.mrb[0].mxu0
  %v794 = vadd.f32 %v626, %v793
  %v795 = vpop.f32.mrb[0].mxu0
  %796 = vmatprep.mubr.f32.mxu0 0.0
  %797 = vmatmul.mubr.f32.gmra.mrb[0].mxu0 %v663
  %v798 = vpop.f32.mrb[0].mxu0
  %v799 = vadd.f32 %v626, %v798
  %v800 = vpop.f32.mrb[0].mxu0
  %801 = vmatprep.mubr.f32.mxu0 0.0
  %802 = vmatmul.mubr.f32.gmra.mrb[0].mxu0 %v666
  %v803 = vpop.f32.mrb[0].mxu0
  %v804 = vadd.f32 %v626, %v803
  %v805 = vpop.f32.mrb[0].mxu0
  %806 = vmatprep.mubr.f32.mxu0 0.0
  %807 = vmatmul.mubr.f32.gmra.mrb[0].mxu0 %v669
  %v808 = vpop.f32.mrb[0].mxu0
  %v809 = vadd.f32 %v626, %v808
  %v810 = vpop.f32.mrb[0].mxu0
  %811 = vmatprep.mubr.f32.mxu0 0.0
  %812 = vmatmul.mubr.f32.gmra.mrb[0].mxu0 %v672
  %v813 = vpop.f32.mrb[0].mxu0
  %v814 = vadd.f32 %v626, %v813
  %v815 = vpop.f32.mrb[0].mxu0
  %816 = vmatprep.mubr.f32.mxu0 0.0
  %817 = vmatmul.mubr.f32.gmra.mrb[0].mxu0 %v675
  %v818 = vpop.f32.mrb[0].mxu0
  %v819 = vadd.f32 %v626, %v818
  %v820 = vpop.f32.mrb[0].mxu0
  %821 = vdwg.mxu0
  %vm822 = vcmp.gt.f32.partialorder %v744, 0.0
  %vm823 = vcmp.gt.f32.partialorder %v749, 0.0
  %vm824 = vcmp.gt.f32.partialorder %v754, 0.0
  %vm825 = vcmp.gt.f32.partialorder %v759, 0.0
  %vm826 = vcmp.gt.f32.partialorder %v764, 0.0
  %vm827 = vcmp.gt.f32.partialorder %v769, 0.0
  %vm828 = vcmp.gt.f32.partialorder %v774, 0.0
  %vm829 = vcmp.gt.f32.partialorder %v779, 0.0
  %vm830 = vcmp.gt.f32.partialorder %v784, 0.0
  %vm831 = vcmp.gt.f32.partialorder %v789, 0.0
  %vm832 = vcmp.gt.f32.partialorder %v794, 0.0
  %vm833 = vcmp.gt.f32.partialorder %v799, 0.0
  %vm834 = vcmp.gt.f32.partialorder %v804, 0.0
  %vm835 = vcmp.gt.f32.partialorder %v809, 0.0
  %vm836 = vcmp.gt.f32.partialorder %v814, 0.0
  %vm837 = vcmp.gt.f32.partialorder %v819, 0.0
  %v838 = vmul.f32 %v744, 0.01
  %v839 = vmul.f32 %v749, 0.01
  %v840 = vmul.f32 %v754, 0.01
  %v841 = vmul.f32 %v759, 0.01
  %v842 = vmul.f32 %v764, 0.01
  %v843 = vmul.f32 %v769, 0.01
  %v844 = vmul.f32 %v774, 0.01
  %v845 = vmul.f32 %v779, 0.01
  %v846 = vmul.f32 %v784, 0.01
  %v847 = vmul.f32 %v789, 0.01
  %v848 = vmul.f32 %v794, 0.01
  %v849 = vmul.f32 %v799, 0.01
  %v850 = vmul.f32 %v804, 0.01
  %v851 = vmul.f32 %v809, 0.01
  %v852 = vmul.f32 %v814, 0.01
  %v853 = vmul.f32 %v819, 0.01
  %v854 = vsel %vm822, %v744, %v838
  %v855 = vsel %vm823, %v749, %v839
  %v856 = vsel %vm824, %v754, %v840
  %v857 = vsel %vm825, %v759, %v841
  %v858 = vsel %vm826, %v764, %v842
  %v859 = vsel %vm827, %v769, %v843
  %v860 = vsel %vm828, %v774, %v844
  %v861 = vsel %vm829, %v779, %v845
  %v862 = vsel %vm830, %v784, %v846
  %v863 = vsel %vm831, %v789, %v847
  %v864 = vsel %vm832, %v794, %v848
  %v865 = vsel %vm833, %v799, %v849
  %v866 = vsel %vm834, %v804, %v850
  %v867 = vsel %vm835, %v809, %v851
  %v868 = vsel %vm836, %v814, %v852
  %v869 = vsel %vm837, %v819, %v853
  %v870 = vld [vmem:[%s2] sm:$0xff]
  %v871 = vld [vmem:[%s2 + $0x8] sm:$0xff]
  %v872 = vld [vmem:[%s2 + $0x10] sm:$0xff]
  %v873 = vld [vmem:[%s2 + $0x18] sm:$0xff]
  %v874 = vld [vmem:[%s2 + $0x20] sm:$0xff]
  %v875 = vld [vmem:[%s2 + $0x28] sm:$0xff]
  %v876 = vld [vmem:[%s2 + $0x30] sm:$0xff]
  %v877 = vld [vmem:[%s2 + $0x38] sm:$0xff]
  %v878 = vld [vmem:[%s2 + $0x40] sm:$0xff]
  %v879 = vld [vmem:[%s2 + $0x48] sm:$0xff]
  %v880 = vld [vmem:[%s2 + $0x50] sm:$0xff]
  %v881 = vld [vmem:[%s2 + $0x58] sm:$0xff]
  %v882 = vld [vmem:[%s2 + $0x60] sm:$0xff]
  %v883 = vld [vmem:[%s2 + $0x68] sm:$0xff]
  %v884 = vld [vmem:[%s2 + $0x70] sm:$0xff]
  %v885 = vld [vmem:[%s2 + $0x78] sm:$0xff]
  %v886 = vadd.f32 %v854, %v870
  %v887 = vadd.f32 %v855, %v871
  %v888 = vadd.f32 %v856, %v872
  %v889 = vadd.f32 %v857, %v873
  %v890 = vadd.f32 %v858, %v874
  %v891 = vadd.f32 %v859, %v875
  %v892 = vadd.f32 %v860, %v876
  %v893 = vadd.f32 %v861, %v877
  %v894 = vadd.f32 %v862, %v878
  %v895 = vadd.f32 %v863, %v879
  %v896 = vadd.f32 %v864, %v880
  %v897 = vadd.f32 %v865, %v881
  %v898 = vadd.f32 %v866, %v882
  %v899 = vadd.f32 %v867, %v883
  %v900 = vadd.f32 %v868, %v884
  %v901 = vadd.f32 %v869, %v885
  %902 = vst.msk [vmem:[%s9] sm:$0xff] %vm203, %v886
  %903 = vst.msk [vmem:[%s9 + $0x8] sm:$0xff] %vm203, %v887
  %904 = vst.msk [vmem:[%s9 + $0x10] sm:$0xff] %vm203, %v888
  %905 = vst.msk [vmem:[%s9 + $0x18] sm:$0xff] %vm203, %v889
  %906 = vst.msk [vmem:[%s9 + $0x20] sm:$0xff] %vm203, %v890
  %907 = vst.msk [vmem:[%s9 + $0x28] sm:$0xff] %vm203, %v891
  %908 = vst.msk [vmem:[%s9 + $0x30] sm:$0xff] %vm203, %v892
  %909 = vst.msk [vmem:[%s9 + $0x38] sm:$0xff] %vm203, %v893
  %910 = vst.msk [vmem:[%s9 + $0x40] sm:$0xff] %vm203, %v894
  %911 = vst.msk [vmem:[%s9 + $0x48] sm:$0xff] %vm203, %v895
  %912 = vst.msk [vmem:[%s9 + $0x50] sm:$0xff] %vm203, %v896
  %913 = vst.msk [vmem:[%s9 + $0x58] sm:$0xff] %vm203, %v897
  %914 = vst.msk [vmem:[%s9 + $0x60] sm:$0xff] %vm203, %v898
  %915 = vst.msk [vmem:[%s9 + $0x68] sm:$0xff] %vm203, %v899
  %916 = vst.msk [vmem:[%s9 + $0x70] sm:$0xff] %vm203, %v900
  %917 = vst.msk [vmem:[%s9 + $0x78] sm:$0xff] %vm203, %v901
  %934 = vrot.lane.b32.xlu0 %v55, 32
  %v935 = vpop.permute.xlu0 %934
  %936 = vrot.lane.b32.xlu0 %v56, 32
  %v937 = vpop.permute.xlu0 %936
  %938 = vrot.lane.b32.xlu0 %v57, 32
  %v939 = vpop.permute.xlu0 %938
  %940 = vrot.lane.b32.xlu0 %v58, 32
  %v941 = vpop.permute.xlu0 %940
  %942 = vrot.lane.b32.xlu0 %v59, 32
  %v943 = vpop.permute.xlu0 %942
  %944 = vrot.lane.b32.xlu0 %v60, 32
  %v945 = vpop.permute.xlu0 %944
  %946 = vrot.lane.b32.xlu0 %v61, 32
  %v947 = vpop.permute.xlu0 %946
  %948 = vrot.lane.b32.xlu0 %v62, 32
  %v949 = vpop.permute.xlu0 %948
  %950 = vrot.lane.b32.xlu0 %v63, 32
  %v951 = vpop.permute.xlu0 %950
  %952 = vrot.lane.b32.xlu0 %v64, 32
  %v953 = vpop.permute.xlu0 %952
  %954 = vrot.lane.b32.xlu0 %v65, 32
  %v955 = vpop.permute.xlu0 %954
  %956 = vrot.lane.b32.xlu0 %v66, 32
  %v957 = vpop.permute.xlu0 %956
  %958 = vrot.lane.b32.xlu0 %v67, 32
  %v959 = vpop.permute.xlu0 %958
  %960 = vrot.lane.b32.xlu0 %v68, 32
  %v961 = vpop.permute.xlu0 %960
  %962 = vrot.lane.b32.xlu0 %v69, 32
  %v963 = vpop.permute.xlu0 %962
  %964 = vrot.lane.b32.xlu0 %v70, 32
  %v965 = vpop.permute.xlu0 %964
  %v982 = vsel %vm203, %v854, %v935
  %v983 = vsel %vm203, %v855, %v937
  %v984 = vsel %vm203, %v856, %v939
  %v985 = vsel %vm203, %v857, %v941
  %v986 = vsel %vm203, %v858, %v943
  %v987 = vsel %vm203, %v859, %v945
  %v988 = vsel %vm203, %v860, %v947
  %v989 = vsel %vm203, %v861, %v949
  %v990 = vsel %vm203, %v862, %v951
  %v991 = vsel %vm203, %v863, %v953
  %v992 = vsel %vm203, %v864, %v955
  %v993 = vsel %vm203, %v865, %v957
  %v994 = vsel %vm203, %v866, %v959
  %v995 = vsel %vm203, %v867, %v961
  %v996 = vsel %vm203, %v868, %v963
  %v997 = vsel %vm203, %v869, %v965
  %v998 = vsel %vm628, %v982, %v39
  %v999 = vsel %vm628, %v983, %v40
  %v1000 = vsel %vm628, %v984, %v41
  %v1001 = vsel %vm628, %v985, %v42
  %v1002 = vsel %vm628, %v986, %v43
  %v1003 = vsel %vm628, %v987, %v44
  %v1004 = vsel %vm628, %v988, %v45
  %v1005 = vsel %vm628, %v989, %v46
  %v1006 = vsel %vm628, %v990, %v47
  %v1007 = vsel %vm628, %v991, %v48
  %v1008 = vsel %vm628, %v992, %v49
  %v1009 = vsel %vm628, %v993, %v50
  %v1010 = vsel %vm628, %v994, %v51
  %v1011 = vsel %vm628, %v995, %v52
  %v1012 = vsel %vm628, %v996, %v53
  %v1013 = vsel %vm628, %v997, %v54
  %v1014 = vlaneseq
  %v1015 = vshrl.u32 %v1014, 7
  %v1016 = vld [vmem:[%s3] sm:$0x1]
  %v1017 = vlaneseq
  %v1018 = vshrl.u32 %v1017, 7
  %v1019 = vsub.s32 0, %v1018
  %v1020 = vrot.slane %v1016, %v1019
  %vm1021 = vcmp.eq.s32.totalorder %v1015, %v1020
  %v1022 = vsel %vm1021, 1, 0
  %v1023 = vcvt.s32.f32 %v1022
  %v1024 = vld [vmem:[%s10] sm:$0xff]
  %1025 = vmatprep.subr.mxu0 0.0
  %1026 = vmatpush1.msra.mxu0 %v998
  %1027 = vmatprep.subr.mxu0 0.0
  %1028 = vmatpush1.msra.mxu0 %v999
  %1029 = vmatprep.subr.mxu0 0.0
  %1030 = vmatpush1.msra.mxu0 %v1000
  %1031 = vmatprep.subr.mxu0 0.0
  %1032 = vmatpush1.msra.mxu0 %v1001
  %1033 = vmatprep.subr.mxu0 0.0
  %1034 = vmatpush1.msra.mxu0 %v1002
  %1035 = vmatprep.subr.mxu0 0.0
  %1036 = vmatpush1.msra.mxu0 %v1003
  %1037 = vmatprep.subr.mxu0 0.0
  %1038 = vmatpush1.msra.mxu0 %v1004
  %1039 = vmatprep.subr.mxu0 0.0
  %1040 = vmatpush1.msra.mxu0 %v1005
  %1041 = vmatprep.subr.mxu0 0.0
  %1042 = vmatpush1.msra.mxu0 %v1006
  %1043 = vmatprep.subr.mxu0 0.0
  %1044 = vmatpush1.msra.mxu0 %v1007
  %1045 = vmatprep.subr.mxu0 0.0
  %1046 = vmatpush1.msra.mxu0 %v1008
  %1047 = vmatprep.subr.mxu0 0.0
  %1048 = vmatpush1.msra.mxu0 %v1009
  %1049 = vmatprep.subr.mxu0 0.0
  %1050 = vmatpush1.msra.mxu0 %v1010
  %1051 = vmatprep.subr.mxu0 0.0
  %1052 = vmatpush1.msra.mxu0 %v1011
  %1053 = vmatprep.subr.mxu0 0.0
  %1054 = vmatpush1.msra.mxu0 %v1012
  %1055 = vmatprep.subr.mxu0 0.0
  %1056 = vmatpush1.msra.mxu0 %v1013
  %1057 = vmatprep.subr.mxu0 0.0
  %1058 = vmatpush1.msra.mxu0 0.0
  %1059 = vmatprep.subr.mxu0 0.0
  %1060 = vmatpush1.msra.mxu0 0.0
  %1061 = vmatprep.subr.mxu0 0.0
  %1062 = vmatpush1.msra.mxu0 0.0
  %1063 = vmatprep.subr.mxu0 0.0
  %1064 = vmatpush1.msra.mxu0 0.0
  %1065 = vmatprep.subr.mxu0 0.0
  %1066 = vmatpush1.msra.mxu0 0.0
  %1067 = vmatprep.subr.mxu0 0.0
  %1068 = vmatpush1.msra.mxu0 0.0
  %1069 = vmatprep.subr.mxu0 0.0
  %1070 = vmatpush1.msra.mxu0 0.0
  %1071 = vmatprep.subr.mxu0 0.0
  %1072 = vmatpush1.msra.mxu0 0.0
  %1073 = vmatprep.subr.mxu0 0.0
  %1074 = vmatpush1.msra.mxu0 0.0
  %1075 = vmatprep.subr.mxu0 0.0
  %1076 = vmatpush1.msra.mxu0 0.0
  %1077 = vmatprep.subr.mxu0 0.0
  %1078 = vmatpush1.msra.mxu0 0.0
  %1079 = vmatprep.subr.mxu0 0.0
  %1080 = vmatpush1.msra.mxu0 0.0
  %1081 = vmatprep.subr.mxu0 0.0
  %1082 = vmatpush1.msra.mxu0 0.0
  %1083 = vmatprep.subr.mxu0 0.0
  %1084 = vmatpush1.msra.mxu0 0.0
  %1085 = vmatprep.subr.mxu0 0.0
  %1086 = vmatpush1.msra.mxu0 0.0
  %1087 = vmatprep.subr.mxu0 0.0
  %1088 = vmatpush1.msra.mxu0 0.0
  %1089 = vmatprep.mubr.f32.mxu0 0.0
  %1090 = vmatmul.mubr.f32.gmra.mrb[0].mxu0 %v1023
  %v1091 = vpop.f32.mrb[0].mxu0
  %v1092 = vadd.f32 0.0, %v1091
  %v1093 = vpop.f32.mrb[0].mxu0
  %1094 = vdwg.mxu0
  %v1095 = vadd.f32 %v1024, %v1092
  %1096 = vst [vmem:[%s10] sm:$0xff] %v1095
  // Predicated region
  $region42: #{megnet_layer_forward.6} parent=0 // pred_check
    _
  $region43: #{megnet_layer_forward.6} parent=0 // pred_check_branch
    %1098 = sbr.rel (0) target = $region45
  $region44: #{megnet_layer_forward.6} parent=0 // pred_region
    _
  $region45: #{megnet_layer_forward.6} parent=0 // pred_fallthru
    _
  // Predicated region
  $region46: #{megnet_layer_forward.6} parent=0 // pred_check
    _
  $region47: #{megnet_layer_forward.6} parent=0 // pred_check_branch
    %1100 = sbr.rel (0) target = $region49
  $region48: #{megnet_layer_forward.6} parent=0 // pred_region
    _
  $region49: #{megnet_layer_forward.6} parent=0 // pred_fallthru
    _
  // Predicated region
  $region50: #{megnet_layer_forward.6} parent=0 // pred_check
    _
  $region51: #{megnet_layer_forward.6} parent=0 // pred_check_branch
    %1102 = sbr.rel (0) target = $region53
  $region52: #{megnet_layer_forward.6} parent=0 // pred_region
    _
  $region53: #{megnet_layer_forward.6} parent=0 // pred_fallthru
    _
  // Predicated region
  $region54: #{megnet_layer_forward.6} parent=0 // pred_check
    _
  $region55: #{megnet_layer_forward.6} parent=0 // pred_check_branch
    %1104 = sbr.rel (0) target = $region57
  $region56: #{megnet_layer_forward.6} parent=0 // pred_region
    _
  $region57: #{megnet_layer_forward.6} parent=0 // pred_fallthru
    _

// kernel: megnet_layer_forward.4
$region0: #{megnet_layer_forward.4}
  #allocation0 [shape = 'u32[]', space=smem, size = 0x4, offset = 0x4, fixed_abs, tag = 'smem constant byte address 0x4 - core index']
  #allocation1 [shape = 'u32[144,128]{1,0:T(1,128)}', space=vmem, size = 0x12000, scoped, tag = 'internal scratch']
  %s0 = inlined_call_operand.vmem [shape: f32[128,32], index: 0, kind: input, shape index: {}]
  %s1 = inlined_call_operand.vmem [shape: f32[128,32], index: 1, kind: input, shape index: {}]
  %s2 = inlined_call_operand.vmem [shape: f32[32,32], index: 2, kind: input, shape index: {}]
  %s3 = inlined_call_operand.vmem [shape: f32[1,32], index: 3, kind: input, shape index: {}]
  %s4 = inlined_call_operand.vmem [shape: f32[32,64], index: 4, kind: input, shape index: {}]
  %s5 = inlined_call_operand.vmem [shape: f32[1,64], index: 5, kind: input, shape index: {}]
  %s6 = inlined_call_operand.vmem [shape: f32[32,32], index: 6, kind: input, shape index: {}]
  %s7 = inlined_call_operand.vmem [shape: f32[1,32], index: 7, kind: input, shape index: {}]
  %s8 = inlined_call_operand.vmem [shape: f32[32,64], index: 8, kind: input, shape index: {}]
  %s9 = inlined_call_operand.vmem [shape: f32[1,64], index: 9, kind: input, shape index: {}]
  %s10 = inlined_call_operand.vmem [shape: f32[128,128], index: 10, kind: output, shape index: {}]
  %s11 = sld [smem:[#allocation0]]
  $region50: #{megnet_layer_forward.4} parent=0
    _
  %s13 = ssub.s32 1, %s11
  %s14 = scalar_select 0, %s13, %s11
  // Predicated region
  $region2: #{megnet_layer_forward.4} parent=0 // pred_check
    _
  $region3: #{megnet_layer_forward.4} parent=0 // pred_check_branch
    %16 = sbr.rel (0) target = $region5
  $region4: #{megnet_layer_forward.4} parent=0 // pred_region
    _
  $region5: #{megnet_layer_forward.4} parent=0 // pred_fallthru
    _
  // Predicated region
  $region6: #{megnet_layer_forward.4} parent=0 // pred_check
    _
  $region7: #{megnet_layer_forward.4} parent=0 // pred_check_branch
    %18 = sbr.rel (0) target = $region9
  $region8: #{megnet_layer_forward.4} parent=0 // pred_region
    _
  $region9: #{megnet_layer_forward.4} parent=0 // pred_fallthru
    _
  // Predicated region
  $region10: #{megnet_layer_forward.4} parent=0 // pred_check
    _
  $region11: #{megnet_layer_forward.4} parent=0 // pred_check_branch
    %20 = sbr.rel (0) target = $region13
  $region12: #{megnet_layer_forward.4} parent=0 // pred_region
    _
  $region13: #{megnet_layer_forward.4} parent=0 // pred_fallthru
    _
  // Predicated region
  $region14: #{megnet_layer_forward.4} parent=0 // pred_check
    _
  $region15: #{megnet_layer_forward.4} parent=0 // pred_check_branch
    %22 = sbr.rel (0) target = $region17
  $region16: #{megnet_layer_forward.4} parent=0 // pred_region
    _
  $region17: #{megnet_layer_forward.4} parent=0 // pred_fallthru
    _
  // Predicated region
  $region18: #{megnet_layer_forward.4} parent=0 // pred_check
    _
  $region19: #{megnet_layer_forward.4} parent=0 // pred_check_branch
    %24 = sbr.rel (0) target = $region21
  $region20: #{megnet_layer_forward.4} parent=0 // pred_region
    _
  $region21: #{megnet_layer_forward.4} parent=0 // pred_fallthru
    _
  // Predicated region
  $region22: #{megnet_layer_forward.4} parent=0 // pred_check
    _
  $region23: #{megnet_layer_forward.4} parent=0 // pred_check_branch
    %26 = sbr.rel (0) target = $region25
  $region24: #{megnet_layer_forward.4} parent=0 // pred_region
    _
  $region25: #{megnet_layer_forward.4} parent=0 // pred_fallthru
    _
  // Predicated region
  $region26: #{megnet_layer_forward.4} parent=0 // pred_check
    _
  $region27: #{megnet_layer_forward.4} parent=0 // pred_check_branch
    %28 = sbr.rel (0) target = $region29
  $region28: #{megnet_layer_forward.4} parent=0 // pred_region
    _
  $region29: #{megnet_layer_forward.4} parent=0 // pred_fallthru
    _
  // Predicated region
  $region30: #{megnet_layer_forward.4} parent=0 // pred_check
    _
  $region31: #{megnet_layer_forward.4} parent=0 // pred_check_branch
    %30 = sbr.rel (0) target = $region33
  $region32: #{megnet_layer_forward.4} parent=0 // pred_region
    _
  $region33: #{megnet_layer_forward.4} parent=0 // pred_fallthru
    _
  // Predicated region
  $region34: #{megnet_layer_forward.4} parent=0 // pred_check
    _
  $region35: #{megnet_layer_forward.4} parent=0 // pred_check_branch
    %32 = sbr.rel (0) target = $region37
  $region36: #{megnet_layer_forward.4} parent=0 // pred_region
    _
  $region37: #{megnet_layer_forward.4} parent=0 // pred_fallthru
    _
  // Predicated region
  $region38: #{megnet_layer_forward.4} parent=0 // pred_check
    _
  $region39: #{megnet_layer_forward.4} parent=0 // pred_check_branch
    %34 = sbr.rel (0) target = $region41
  $region40: #{megnet_layer_forward.4} parent=0 // pred_region
    _
  $region41: #{megnet_layer_forward.4} parent=0 // pred_fallthru
    _
  %v35 = vld [vmem:[%s0] sm:$0xff]
  %v36 = vld [vmem:[%s0 + $0x8] sm:$0xff]
  %v37 = vld [vmem:[%s0 + $0x10] sm:$0xff]
  %v38 = vld [vmem:[%s0 + $0x18] sm:$0xff]
  %v39 = vld [vmem:[%s0 + $0x20] sm:$0xff]
  %v40 = vld [vmem:[%s0 + $0x28] sm:$0xff]
  %v41 = vld [vmem:[%s0 + $0x30] sm:$0xff]
  %v42 = vld [vmem:[%s0 + $0x38] sm:$0xff]
  %v43 = vld [vmem:[%s0 + $0x40] sm:$0xff]
  %v44 = vld [vmem:[%s0 + $0x48] sm:$0xff]
  %v45 = vld [vmem:[%s0 + $0x50] sm:$0xff]
  %v46 = vld [vmem:[%s0 + $0x58] sm:$0xff]
  %v47 = vld [vmem:[%s0 + $0x60] sm:$0xff]
  %v48 = vld [vmem:[%s0 + $0x68] sm:$0xff]
  %v49 = vld [vmem:[%s0 + $0x70] sm:$0xff]
  %v50 = vld [vmem:[%s0 + $0x78] sm:$0xff]
  %v51 = vld [vmem:[%s2] sm:$0xff]
  %v52 = vld [vmem:[%s2 + $0x8] sm:$0xff]
  %v53 = vld [vmem:[%s2 + $0x10] sm:$0xff]
  %v54 = vld [vmem:[%s2 + $0x18] sm:$0xff]
  %v55 = vld [vmem:[%s3] sm:$0x1]
  %v57 = vlaneseq
  %v58 = vshrl.u32 %v57, 7
  %v59 = vsub.s32 0, %v58
  %v60 = vrot.slane %v55, %v59
  %vm62 = vcmask 261120
  %v64 = vsel %vm62, %v35, 0
  %v67 = vsel %vm62, %v36, 0
  %v70 = vsel %vm62, %v37, 0
  %v73 = vsel %vm62, %v38, 0
  %v76 = vsel %vm62, %v39, 0
  %v79 = vsel %vm62, %v40, 0
  %v82 = vsel %vm62, %v41, 0
  %v85 = vsel %vm62, %v42, 0
  %v88 = vsel %vm62, %v43, 0
  %v91 = vsel %vm62, %v44, 0
  %v94 = vsel %vm62, %v45, 0
  %v97 = vsel %vm62, %v46, 0
  %v100 = vsel %vm62, %v47, 0
  %v103 = vsel %vm62, %v48, 0
  %v106 = vsel %vm62, %v49, 0
  %v109 = vsel %vm62, %v50, 0
  %111 = vmatprep.subr.mxu0 0.0
  %112 = vmatpush1.msra.mxu0 %v51
  %113 = vmatprep.subr.mxu0 0.0
  %114 = vmatpush1.msra.mxu0 %v52
  %115 = vmatprep.subr.mxu0 0.0
  %116 = vmatpush1.msra.mxu0 %v53
  %117 = vmatprep.subr.mxu0 0.0
  %118 = vmatpush1.msra.mxu0 %v54
  %119 = vmatprep.subr.mxu0 0.0
  %120 = vmatpush1.msra.mxu0 0.0
  %121 = vmatprep.subr.mxu0 0.0
  %122 = vmatpush1.msra.mxu0 0.0
  %123 = vmatprep.subr.mxu0 0.0
  %124 = vmatpush1.msra.mxu0 0.0
  %125 = vmatprep.subr.mxu0 0.0
  %126 = vmatpush1.msra.mxu0 0.0
  %127 = vmatprep.subr.mxu0 0.0
  %128 = vmatpush1.msra.mxu0 0.0
  %129 = vmatprep.subr.mxu0 0.0
  %130 = vmatpush1.msra.mxu0 0.0
  %131 = vmatprep.subr.mxu0 0.0
  %132 = vmatpush1.msra.mxu0 0.0
  %133 = vmatprep.subr.mxu0 0.0
  %134 = vmatpush1.msra.mxu0 0.0
  %135 = vmatprep.subr.mxu0 0.0
  %136 = vmatpush1.msra.mxu0 0.0
  %137 = vmatprep.subr.mxu0 0.0
  %138 = vmatpush1.msra.mxu0 0.0
  %139 = vmatprep.subr.mxu0 0.0
  %140 = vmatpush1.msra.mxu0 0.0
  %141 = vmatprep.subr.mxu0 0.0
  %142 = vmatpush1.msra.mxu0 0.0
  %143 = vmatprep.subr.mxu0 0.0
  %144 = vmatpush1.msra.mxu0 0.0
  %145 = vmatprep.subr.mxu0 0.0
  %146 = vmatpush1.msra.mxu0 0.0
  %147 = vmatprep.subr.mxu0 0.0
  %148 = vmatpush1.msra.mxu0 0.0
  %149 = vmatprep.subr.mxu0 0.0
  %150 = vmatpush1.msra.mxu0 0.0
  %151 = vmatprep.subr.mxu0 0.0
  %152 = vmatpush1.msra.mxu0 0.0
  %153 = vmatprep.subr.mxu0 0.0
  %154 = vmatpush1.msra.mxu0 0.0
  %155 = vmatprep.subr.mxu0 0.0
  %156 = vmatpush1.msra.mxu0 0.0
  %157 = vmatprep.subr.mxu0 0.0
  %158 = vmatpush1.msra.mxu0 0.0
  %159 = vmatprep.subr.mxu0 0.0
  %160 = vmatpush1.msra.mxu0 0.0
  %161 = vmatprep.subr.mxu0 0.0
  %162 = vmatpush1.msra.mxu0 0.0
  %163 = vmatprep.subr.mxu0 0.0
  %164 = vmatpush1.msra.mxu0 0.0
  %165 = vmatprep.subr.mxu0 0.0
  %166 = vmatpush1.msra.mxu0 0.0
  %167 = vmatprep.subr.mxu0 0.0
  %168 = vmatpush1.msra.mxu0 0.0
  %169 = vmatprep.subr.mxu0 0.0
  %170 = vmatpush1.msra.mxu0 0.0
  %171 = vmatprep.subr.mxu0 0.0
  %172 = vmatpush1.msra.mxu0 0.0
  %173 = vmatprep.subr.mxu0 0.0
  %174 = vmatpush1.msra.mxu0 0.0
  %175 = vmatprep.mubr.f32.mxu0 0.0
  %176 = vmatmul.mubr.f32.gmra.mrb[0].mxu0 %v64
  %v177 = vpop.f32.mrb[0].mxu0
  %v178 = vadd.f32 %v60, %v177
  %v179 = vpop.f32.mrb[0].mxu0
  %180 = vmatprep.mubr.f32.mxu0 0.0
  %181 = vmatmul.mubr.f32.gmra.mrb[0].mxu0 %v67
  %v182 = vpop.f32.mrb[0].mxu0
  %v183 = vadd.f32 %v60, %v182
  %v184 = vpop.f32.mrb[0].mxu0
  %185 = vmatprep.mubr.f32.mxu0 0.0
  %186 = vmatmul.mubr.f32.gmra.mrb[0].mxu0 %v70
  %v187 = vpop.f32.mrb[0].mxu0
  %v188 = vadd.f32 %v60, %v187
  %v189 = vpop.f32.mrb[0].mxu0
  %190 = vmatprep.mubr.f32.mxu0 0.0
  %191 = vmatmul.mubr.f32.gmra.mrb[0].mxu0 %v73
  %v192 = vpop.f32.mrb[0].mxu0
  %v193 = vadd.f32 %v60, %v192
  %v194 = vpop.f32.mrb[0].mxu0
  %195 = vmatprep.mubr.f32.mxu0 0.0
  %196 = vmatmul.mubr.f32.gmra.mrb[0].mxu0 %v76
  %v197 = vpop.f32.mrb[0].mxu0
  %v198 = vadd.f32 %v60, %v197
  %v199 = vpop.f32.mrb[0].mxu0
  %200 = vmatprep.mubr.f32.mxu0 0.0
  %201 = vmatmul.mubr.f32.gmra.mrb[0].mxu0 %v79
  %v202 = vpop.f32.mrb[0].mxu0
  %v203 = vadd.f32 %v60, %v202
  %v204 = vpop.f32.mrb[0].mxu0
  %205 = vmatprep.mubr.f32.mxu0 0.0
  %206 = vmatmul.mubr.f32.gmra.mrb[0].mxu0 %v82
  %v207 = vpop.f32.mrb[0].mxu0
  %v208 = vadd.f32 %v60, %v207
  %v209 = vpop.f32.mrb[0].mxu0
  %210 = vmatprep.mubr.f32.mxu0 0.0
  %211 = vmatmul.mubr.f32.gmra.mrb[0].mxu0 %v85
  %v212 = vpop.f32.mrb[0].mxu0
  %v213 = vadd.f32 %v60, %v212
  %v214 = vpop.f32.mrb[0].mxu0
  %215 = vmatprep.mubr.f32.mxu0 0.0
  %216 = vmatmul.mubr.f32.gmra.mrb[0].mxu0 %v88
  %v217 = vpop.f32.mrb[0].mxu0
  %v218 = vadd.f32 %v60, %v217
  %v219 = vpop.f32.mrb[0].mxu0
  %220 = vmatprep.mubr.f32.mxu0 0.0
  %221 = vmatmul.mubr.f32.gmra.mrb[0].mxu0 %v91
  %v222 = vpop.f32.mrb[0].mxu0
  %v223 = vadd.f32 %v60, %v222
  %v224 = vpop.f32.mrb[0].mxu0
  %225 = vmatprep.mubr.f32.mxu0 0.0
  %226 = vmatmul.mubr.f32.gmra.mrb[0].mxu0 %v94
  %v227 = vpop.f32.mrb[0].mxu0
  %v228 = vadd.f32 %v60, %v227
  %v229 = vpop.f32.mrb[0].mxu0
  %230 = vmatprep.mubr.f32.mxu0 0.0
  %231 = vmatmul.mubr.f32.gmra.mrb[0].mxu0 %v97
  %v232 = vpop.f32.mrb[0].mxu0
  %v233 = vadd.f32 %v60, %v232
  %v234 = vpop.f32.mrb[0].mxu0
  %235 = vmatprep.mubr.f32.mxu0 0.0
  %236 = vmatmul.mubr.f32.gmra.mrb[0].mxu0 %v100
  %v237 = vpop.f32.mrb[0].mxu0
  %v238 = vadd.f32 %v60, %v237
  %v239 = vpop.f32.mrb[0].mxu0
  %240 = vmatprep.mubr.f32.mxu0 0.0
  %241 = vmatmul.mubr.f32.gmra.mrb[0].mxu0 %v103
  %v242 = vpop.f32.mrb[0].mxu0
  %v243 = vadd.f32 %v60, %v242
  %v244 = vpop.f32.mrb[0].mxu0
  %245 = vmatprep.mubr.f32.mxu0 0.0
  %246 = vmatmul.mubr.f32.gmra.mrb[0].mxu0 %v106
  %v247 = vpop.f32.mrb[0].mxu0
  %v248 = vadd.f32 %v60, %v247
  %v249 = vpop.f32.mrb[0].mxu0
  %250 = vmatprep.mubr.f32.mxu0 0.0
  %251 = vmatmul.mubr.f32.gmra.mrb[0].mxu0 %v109
  %v252 = vpop.f32.mrb[0].mxu0
  %v253 = vadd.f32 %v60, %v252
  %v254 = vpop.f32.mrb[0].mxu0
  %255 = vdwg.mxu0
  %vm256 = vcmp.gt.f32.partialorder %v178, 0.0
  %vm257 = vcmp.gt.f32.partialorder %v183, 0.0
  %vm258 = vcmp.gt.f32.partialorder %v188, 0.0
  %vm259 = vcmp.gt.f32.partialorder %v193, 0.0
  %vm260 = vcmp.gt.f32.partialorder %v198, 0.0
  %vm261 = vcmp.gt.f32.partialorder %v203, 0.0
  %vm262 = vcmp.gt.f32.partialorder %v208, 0.0
  %vm263 = vcmp.gt.f32.partialorder %v213, 0.0
  %vm264 = vcmp.gt.f32.partialorder %v218, 0.0
  %vm265 = vcmp.gt.f32.partialorder %v223, 0.0
  %vm266 = vcmp.gt.f32.partialorder %v228, 0.0
  %vm267 = vcmp.gt.f32.partialorder %v233, 0.0
  %vm268 = vcmp.gt.f32.partialorder %v238, 0.0
  %vm269 = vcmp.gt.f32.partialorder %v243, 0.0
  %vm270 = vcmp.gt.f32.partialorder %v248, 0.0
  %vm271 = vcmp.gt.f32.partialorder %v253, 0.0
  %v272 = vmul.f32 %v178, 0.01
  %v273 = vmul.f32 %v183, 0.01
  %v274 = vmul.f32 %v188, 0.01
  %v275 = vmul.f32 %v193, 0.01
  %v276 = vmul.f32 %v198, 0.01
  %v277 = vmul.f32 %v203, 0.01
  %v278 = vmul.f32 %v208, 0.01
  %v279 = vmul.f32 %v213, 0.01
  %v280 = vmul.f32 %v218, 0.01
  %v281 = vmul.f32 %v223, 0.01
  %v282 = vmul.f32 %v228, 0.01
  %v283 = vmul.f32 %v233, 0.01
  %v284 = vmul.f32 %v238, 0.01
  %v285 = vmul.f32 %v243, 0.01
  %v286 = vmul.f32 %v248, 0.01
  %v287 = vmul.f32 %v253, 0.01
  %v288 = vsel %vm256, %v178, %v272
  %v289 = vsel %vm257, %v183, %v273
  %v290 = vsel %vm258, %v188, %v274
  %v291 = vsel %vm259, %v193, %v275
  %v292 = vsel %vm260, %v198, %v276
  %v293 = vsel %vm261, %v203, %v277
  %v294 = vsel %vm262, %v208, %v278
  %v295 = vsel %vm263, %v213, %v279
  %v296 = vsel %vm264, %v218, %v280
  %v297 = vsel %vm265, %v223, %v281
  %v298 = vsel %vm266, %v228, %v282
  %v299 = vsel %vm267, %v233, %v283
  %v300 = vsel %vm268, %v238, %v284
  %v301 = vsel %vm269, %v243, %v285
  %v302 = vsel %vm270, %v248, %v286
  %v303 = vsel %vm271, %v253, %v287
  %v304 = vld [vmem:[%s4] sm:$0xff]
  %v305 = vld [vmem:[%s4 + $0x8] sm:$0xff]
  %v306 = vld [vmem:[%s4 + $0x10] sm:$0xff]
  %v307 = vld [vmem:[%s4 + $0x18] sm:$0xff]
  %v308 = vld [vmem:[%s5] sm:$0x1]
  %v310 = vlaneseq
  %v311 = vshrl.u32 %v310, 7
  %v312 = vsub.s32 0, %v311
  %v313 = vrot.slane %v308, %v312
  %v316 = vsel %vm62, %v288, 0
  %v319 = vsel %vm62, %v289, 0
  %v322 = vsel %vm62, %v290, 0
  %v325 = vsel %vm62, %v291, 0
  %v328 = vsel %vm62, %v292, 0
  %v331 = vsel %vm62, %v293, 0
  %v334 = vsel %vm62, %v294, 0
  %v337 = vsel %vm62, %v295, 0
  %v340 = vsel %vm62, %v296, 0
  %v343 = vsel %vm62, %v297, 0
  %v346 = vsel %vm62, %v298, 0
  %v349 = vsel %vm62, %v299, 0
  %v352 = vsel %vm62, %v300, 0
  %v355 = vsel %vm62, %v301, 0
  %v358 = vsel %vm62, %v302, 0
  %v361 = vsel %vm62, %v303, 0
  %363 = vmatprep.subr.mxu0 0.0
  %364 = vmatpush1.msra.mxu0 %v304
  %365 = vmatprep.subr.mxu0 0.0
  %366 = vmatpush1.msra.mxu0 %v305
  %367 = vmatprep.subr.mxu0 0.0
  %368 = vmatpush1.msra.mxu0 %v306
  %369 = vmatprep.subr.mxu0 0.0
  %370 = vmatpush1.msra.mxu0 %v307
  %371 = vmatprep.subr.mxu0 0.0
  %372 = vmatpush1.msra.mxu0 0.0
  %373 = vmatprep.subr.mxu0 0.0
  %374 = vmatpush1.msra.mxu0 0.0
  %375 = vmatprep.subr.mxu0 0.0
  %376 = vmatpush1.msra.mxu0 0.0
  %377 = vmatprep.subr.mxu0 0.0
  %378 = vmatpush1.msra.mxu0 0.0
  %379 = vmatprep.subr.mxu0 0.0
  %380 = vmatpush1.msra.mxu0 0.0
  %381 = vmatprep.subr.mxu0 0.0
  %382 = vmatpush1.msra.mxu0 0.0
  %383 = vmatprep.subr.mxu0 0.0
  %384 = vmatpush1.msra.mxu0 0.0
  %385 = vmatprep.subr.mxu0 0.0
  %386 = vmatpush1.msra.mxu0 0.0
  %387 = vmatprep.subr.mxu0 0.0
  %388 = vmatpush1.msra.mxu0 0.0
  %389 = vmatprep.subr.mxu0 0.0
  %390 = vmatpush1.msra.mxu0 0.0
  %391 = vmatprep.subr.mxu0 0.0
  %392 = vmatpush1.msra.mxu0 0.0
  %393 = vmatprep.subr.mxu0 0.0
  %394 = vmatpush1.msra.mxu0 0.0
  %395 = vmatprep.subr.mxu0 0.0
  %396 = vmatpush1.msra.mxu0 0.0
  %397 = vmatprep.subr.mxu0 0.0
  %398 = vmatpush1.msra.mxu0 0.0
  %399 = vmatprep.subr.mxu0 0.0
  %400 = vmatpush1.msra.mxu0 0.0
  %401 = vmatprep.subr.mxu0 0.0
  %402 = vmatpush1.msra.mxu0 0.0
  %403 = vmatprep.subr.mxu0 0.0
  %404 = vmatpush1.msra.mxu0 0.0
  %405 = vmatprep.subr.mxu0 0.0
  %406 = vmatpush1.msra.mxu0 0.0
  %407 = vmatprep.subr.mxu0 0.0
  %408 = vmatpush1.msra.mxu0 0.0
  %409 = vmatprep.subr.mxu0 0.0
  %410 = vmatpush1.msra.mxu0 0.0
  %411 = vmatprep.subr.mxu0 0.0
  %412 = vmatpush1.msra.mxu0 0.0
  %413 = vmatprep.subr.mxu0 0.0
  %414 = vmatpush1.msra.mxu0 0.0
  %415 = vmatprep.subr.mxu0 0.0
  %416 = vmatpush1.msra.mxu0 0.0
  %417 = vmatprep.subr.mxu0 0.0
  %418 = vmatpush1.msra.mxu0 0.0
  %419 = vmatprep.subr.mxu0 0.0
  %420 = vmatpush1.msra.mxu0 0.0
  %421 = vmatprep.subr.mxu0 0.0
  %422 = vmatpush1.msra.mxu0 0.0
  %423 = vmatprep.subr.mxu0 0.0
  %424 = vmatpush1.msra.mxu0 0.0
  %425 = vmatprep.subr.mxu0 0.0
  %426 = vmatpush1.msra.mxu0 0.0
  %427 = vmatprep.mubr.f32.mxu0 0.0
  %428 = vmatmul.mubr.f32.gmra.mrb[0].mxu0 %v316
  %v429 = vpop.f32.mrb[0].mxu0
  %v430 = vadd.f32 %v313, %v429
  %v431 = vpop.f32.mrb[0].mxu0
  %432 = vmatprep.mubr.f32.mxu0 0.0
  %433 = vmatmul.mubr.f32.gmra.mrb[0].mxu0 %v319
  %v434 = vpop.f32.mrb[0].mxu0
  %v435 = vadd.f32 %v313, %v434
  %v436 = vpop.f32.mrb[0].mxu0
  %437 = vmatprep.mubr.f32.mxu0 0.0
  %438 = vmatmul.mubr.f32.gmra.mrb[0].mxu0 %v322
  %v439 = vpop.f32.mrb[0].mxu0
  %v440 = vadd.f32 %v313, %v439
  %v441 = vpop.f32.mrb[0].mxu0
  %442 = vmatprep.mubr.f32.mxu0 0.0
  %443 = vmatmul.mubr.f32.gmra.mrb[0].mxu0 %v325
  %v444 = vpop.f32.mrb[0].mxu0
  %v445 = vadd.f32 %v313, %v444
  %v446 = vpop.f32.mrb[0].mxu0
  %447 = vmatprep.mubr.f32.mxu0 0.0
  %448 = vmatmul.mubr.f32.gmra.mrb[0].mxu0 %v328
  %v449 = vpop.f32.mrb[0].mxu0
  %v450 = vadd.f32 %v313, %v449
  %v451 = vpop.f32.mrb[0].mxu0
  %452 = vmatprep.mubr.f32.mxu0 0.0
  %453 = vmatmul.mubr.f32.gmra.mrb[0].mxu0 %v331
  %v454 = vpop.f32.mrb[0].mxu0
  %v455 = vadd.f32 %v313, %v454
  %v456 = vpop.f32.mrb[0].mxu0
  %457 = vmatprep.mubr.f32.mxu0 0.0
  %458 = vmatmul.mubr.f32.gmra.mrb[0].mxu0 %v334
  %v459 = vpop.f32.mrb[0].mxu0
  %v460 = vadd.f32 %v313, %v459
  %v461 = vpop.f32.mrb[0].mxu0
  %462 = vmatprep.mubr.f32.mxu0 0.0
  %463 = vmatmul.mubr.f32.gmra.mrb[0].mxu0 %v337
  %v464 = vpop.f32.mrb[0].mxu0
  %v465 = vadd.f32 %v313, %v464
  %v466 = vpop.f32.mrb[0].mxu0
  %467 = vmatprep.mubr.f32.mxu0 0.0
  %468 = vmatmul.mubr.f32.gmra.mrb[0].mxu0 %v340
  %v469 = vpop.f32.mrb[0].mxu0
  %v470 = vadd.f32 %v313, %v469
  %v471 = vpop.f32.mrb[0].mxu0
  %472 = vmatprep.mubr.f32.mxu0 0.0
  %473 = vmatmul.mubr.f32.gmra.mrb[0].mxu0 %v343
  %v474 = vpop.f32.mrb[0].mxu0
  %v475 = vadd.f32 %v313, %v474
  %v476 = vpop.f32.mrb[0].mxu0
  %477 = vmatprep.mubr.f32.mxu0 0.0
  %478 = vmatmul.mubr.f32.gmra.mrb[0].mxu0 %v346
  %v479 = vpop.f32.mrb[0].mxu0
  %v480 = vadd.f32 %v313, %v479
  %v481 = vpop.f32.mrb[0].mxu0
  %482 = vmatprep.mubr.f32.mxu0 0.0
  %483 = vmatmul.mubr.f32.gmra.mrb[0].mxu0 %v349
  %v484 = vpop.f32.mrb[0].mxu0
  %v485 = vadd.f32 %v313, %v484
  %v486 = vpop.f32.mrb[0].mxu0
  %487 = vmatprep.mubr.f32.mxu0 0.0
  %488 = vmatmul.mubr.f32.gmra.mrb[0].mxu0 %v352
  %v489 = vpop.f32.mrb[0].mxu0
  %v490 = vadd.f32 %v313, %v489
  %v491 = vpop.f32.mrb[0].mxu0
  %492 = vmatprep.mubr.f32.mxu0 0.0
  %493 = vmatmul.mubr.f32.gmra.mrb[0].mxu0 %v355
  %v494 = vpop.f32.mrb[0].mxu0
  %v495 = vadd.f32 %v313, %v494
  %v496 = vpop.f32.mrb[0].mxu0
  %497 = vmatprep.mubr.f32.mxu0 0.0
  %498 = vmatmul.mubr.f32.gmra.mrb[0].mxu0 %v358
  %v499 = vpop.f32.mrb[0].mxu0
  %v500 = vadd.f32 %v313, %v499
  %v501 = vpop.f32.mrb[0].mxu0
  %502 = vmatprep.mubr.f32.mxu0 0.0
  %503 = vmatmul.mubr.f32.gmra.mrb[0].mxu0 %v361
  %v504 = vpop.f32.mrb[0].mxu0
  %v505 = vadd.f32 %v313, %v504
  %v506 = vpop.f32.mrb[0].mxu0
  %507 = vdwg.mxu0
  %vm508 = vcmp.gt.f32.partialorder %v430, 0.0
  %vm509 = vcmp.gt.f32.partialorder %v435, 0.0
  %vm510 = vcmp.gt.f32.partialorder %v440, 0.0
  %vm511 = vcmp.gt.f32.partialorder %v445, 0.0
  %vm512 = vcmp.gt.f32.partialorder %v450, 0.0
  %vm513 = vcmp.gt.f32.partialorder %v455, 0.0
  %vm514 = vcmp.gt.f32.partialorder %v460, 0.0
  %vm515 = vcmp.gt.f32.partialorder %v465, 0.0
  %vm516 = vcmp.gt.f32.partialorder %v470, 0.0
  %vm517 = vcmp.gt.f32.partialorder %v475, 0.0
  %vm518 = vcmp.gt.f32.partialorder %v480, 0.0
  %vm519 = vcmp.gt.f32.partialorder %v485, 0.0
  %vm520 = vcmp.gt.f32.partialorder %v490, 0.0
  %vm521 = vcmp.gt.f32.partialorder %v495, 0.0
  %vm522 = vcmp.gt.f32.partialorder %v500, 0.0
  %vm523 = vcmp.gt.f32.partialorder %v505, 0.0
  %v524 = vmul.f32 %v430, 0.01
  %v525 = vmul.f32 %v435, 0.01
  %v526 = vmul.f32 %v440, 0.01
  %v527 = vmul.f32 %v445, 0.01
  %v528 = vmul.f32 %v450, 0.01
  %v529 = vmul.f32 %v455, 0.01
  %v530 = vmul.f32 %v460, 0.01
  %v531 = vmul.f32 %v465, 0.01
  %v532 = vmul.f32 %v470, 0.01
  %v533 = vmul.f32 %v475, 0.01
  %v534 = vmul.f32 %v480, 0.01
  %v535 = vmul.f32 %v485, 0.01
  %v536 = vmul.f32 %v490, 0.01
  %v537 = vmul.f32 %v495, 0.01
  %v538 = vmul.f32 %v500, 0.01
  %v539 = vmul.f32 %v505, 0.01
  %v540 = vsel %vm508, %v430, %v524
  %v541 = vsel %vm509, %v435, %v525
  %v542 = vsel %vm510, %v440, %v526
  %v543 = vsel %vm511, %v445, %v527
  %v544 = vsel %vm512, %v450, %v528
  %v545 = vsel %vm513, %v455, %v529
  %v546 = vsel %vm514, %v460, %v530
  %v547 = vsel %vm515, %v465, %v531
  %v548 = vsel %vm516, %v470, %v532
  %v549 = vsel %vm517, %v475, %v533
  %v550 = vsel %vm518, %v480, %v534
  %v551 = vsel %vm519, %v485, %v535
  %v552 = vsel %vm520, %v490, %v536
  %v553 = vsel %vm521, %v495, %v537
  %v554 = vsel %vm522, %v500, %v538
  %v555 = vsel %vm523, %v505, %v539
  %v556 = vld [vmem:[%s1] sm:$0xff]
  %v557 = vld [vmem:[%s1 + $0x8] sm:$0xff]
  %v558 = vld [vmem:[%s1 + $0x10] sm:$0xff]
  %v559 = vld [vmem:[%s1 + $0x18] sm:$0xff]
  %v560 = vld [vmem:[%s1 + $0x20] sm:$0xff]
  %v561 = vld [vmem:[%s1 + $0x28] sm:$0xff]
  %v562 = vld [vmem:[%s1 + $0x30] sm:$0xff]
  %v563 = vld [vmem:[%s1 + $0x38] sm:$0xff]
  %v564 = vld [vmem:[%s1 + $0x40] sm:$0xff]
  %v565 = vld [vmem:[%s1 + $0x48] sm:$0xff]
  %v566 = vld [vmem:[%s1 + $0x50] sm:$0xff]
  %v567 = vld [vmem:[%s1 + $0x58] sm:$0xff]
  %v568 = vld [vmem:[%s1 + $0x60] sm:$0xff]
  %v569 = vld [vmem:[%s1 + $0x68] sm:$0xff]
  %v570 = vld [vmem:[%s1 + $0x70] sm:$0xff]
  %v571 = vld [vmem:[%s1 + $0x78] sm:$0xff]
  %v572 = vld [vmem:[%s6] sm:$0xff]
  %v573 = vld [vmem:[%s6 + $0x8] sm:$0xff]
  %v574 = vld [vmem:[%s6 + $0x10] sm:$0xff]
  %v575 = vld [vmem:[%s6 + $0x18] sm:$0xff]
  %v576 = vld [vmem:[%s7] sm:$0x1]
  %v578 = vlaneseq
  %v579 = vshrl.u32 %v578, 7
  %v580 = vsub.s32 0, %v579
  %v581 = vrot.slane %v576, %v580
  %v584 = vsel %vm62, %v556, 0
  %v587 = vsel %vm62, %v557, 0
  %v590 = vsel %vm62, %v558, 0
  %v593 = vsel %vm62, %v559, 0
  %v596 = vsel %vm62, %v560, 0
  %v599 = vsel %vm62, %v561, 0
  %v602 = vsel %vm62, %v562, 0
  %v605 = vsel %vm62, %v563, 0
  %v608 = vsel %vm62, %v564, 0
  %v611 = vsel %vm62, %v565, 0
  %v614 = vsel %vm62, %v566, 0
  %v617 = vsel %vm62, %v567, 0
  %v620 = vsel %vm62, %v568, 0
  %v623 = vsel %vm62, %v569, 0
  %v626 = vsel %vm62, %v570, 0
  %v629 = vsel %vm62, %v571, 0
  %631 = vmatprep.subr.mxu0 0.0
  %632 = vmatpush1.msra.mxu0 %v572
  %633 = vmatprep.subr.mxu0 0.0
  %634 = vmatpush1.msra.mxu0 %v573
  %635 = vmatprep.subr.mxu0 0.0
  %636 = vmatpush1.msra.mxu0 %v574
  %637 = vmatprep.subr.mxu0 0.0
  %638 = vmatpush1.msra.mxu0 %v575
  %639 = vmatprep.subr.mxu0 0.0
  %640 = vmatpush1.msra.mxu0 0.0
  %641 = vmatprep.subr.mxu0 0.0
  %642 = vmatpush1.msra.mxu0 0.0
  %643 = vmatprep.subr.mxu0 0.0
  %644 = vmatpush1.msra.mxu0 0.0
  %645 = vmatprep.subr.mxu0 0.0
  %646 = vmatpush1.msra.mxu0 0.0
  %647 = vmatprep.subr.mxu0 0.0
  %648 = vmatpush1.msra.mxu0 0.0
  %649 = vmatprep.subr.mxu0 0.0
  %650 = vmatpush1.msra.mxu0 0.0
  %651 = vmatprep.subr.mxu0 0.0
  %652 = vmatpush1.msra.mxu0 0.0
  %653 = vmatprep.subr.mxu0 0.0
  %654 = vmatpush1.msra.mxu0 0.0
  %655 = vmatprep.subr.mxu0 0.0
  %656 = vmatpush1.msra.mxu0 0.0
  %657 = vmatprep.subr.mxu0 0.0
  %658 = vmatpush1.msra.mxu0 0.0
  %659 = vmatprep.subr.mxu0 0.0
  %660 = vmatpush1.msra.mxu0 0.0
  %661 = vmatprep.subr.mxu0 0.0
  %662 = vmatpush1.msra.mxu0 0.0
  %663 = vmatprep.subr.mxu0 0.0
  %664 = vmatpush1.msra.mxu0 0.0
  %665 = vmatprep.subr.mxu0 0.0
  %666 = vmatpush1.msra.mxu0 0.0
  %667 = vmatprep.subr.mxu0 0.0
  %668 = vmatpush1.msra.mxu0 0.0
  %669 = vmatprep.subr.mxu0 0.0
  %670 = vmatpush1.msra.mxu0 0.0
  %671 = vmatprep.subr.mxu0 0.0
  %672 = vmatpush1.msra.mxu0 0.0
  %673 = vmatprep.subr.mxu0 0.0
  %674 = vmatpush1.msra.mxu0 0.0
  %675 = vmatprep.subr.mxu0 0.0
  %676 = vmatpush1.msra.mxu0 0.0
  %677 = vmatprep.subr.mxu0 0.0
  %678 = vmatpush1.msra.mxu0 0.0
  %679 = vmatprep.subr.mxu0 0.0
  %680 = vmatpush1.msra.mxu0 0.0
  %681 = vmatprep.subr.mxu0 0.0
  %682 = vmatpush1.msra.mxu0 0.0
  %683 = vmatprep.subr.mxu0 0.0
  %684 = vmatpush1.msra.mxu0 0.0
  %685 = vmatprep.subr.mxu0 0.0
  %686 = vmatpush1.msra.mxu0 0.0
  %687 = vmatprep.subr.mxu0 0.0
  %688 = vmatpush1.msra.mxu0 0.0
  %689 = vmatprep.subr.mxu0 0.0
  %690 = vmatpush1.msra.mxu0 0.0
  %691 = vmatprep.subr.mxu0 0.0
  %692 = vmatpush1.msra.mxu0 0.0
  %693 = vmatprep.subr.mxu0 0.0
  %694 = vmatpush1.msra.mxu0 0.0
  %695 = vmatprep.mubr.f32.mxu0 0.0
  %696 = vmatmul.mubr.f32.gmra.mrb[0].mxu0 %v584
  %v697 = vpop.f32.mrb[0].mxu0
  %v698 = vadd.f32 %v581, %v697
  %v699 = vpop.f32.mrb[0].mxu0
  %700 = vmatprep.mubr.f32.mxu0 0.0
  %701 = vmatmul.mubr.f32.gmra.mrb[0].mxu0 %v587
  %v702 = vpop.f32.mrb[0].mxu0
  %v703 = vadd.f32 %v581, %v702
  %v704 = vpop.f32.mrb[0].mxu0
  %705 = vmatprep.mubr.f32.mxu0 0.0
  %706 = vmatmul.mubr.f32.gmra.mrb[0].mxu0 %v590
  %v707 = vpop.f32.mrb[0].mxu0
  %v708 = vadd.f32 %v581, %v707
  %v709 = vpop.f32.mrb[0].mxu0
  %710 = vmatprep.mubr.f32.mxu0 0.0
  %711 = vmatmul.mubr.f32.gmra.mrb[0].mxu0 %v593
  %v712 = vpop.f32.mrb[0].mxu0
  %v713 = vadd.f32 %v581, %v712
  %v714 = vpop.f32.mrb[0].mxu0
  %715 = vmatprep.mubr.f32.mxu0 0.0
  %716 = vmatmul.mubr.f32.gmra.mrb[0].mxu0 %v596
  %v717 = vpop.f32.mrb[0].mxu0
  %v718 = vadd.f32 %v581, %v717
  %v719 = vpop.f32.mrb[0].mxu0
  %720 = vmatprep.mubr.f32.mxu0 0.0
  %721 = vmatmul.mubr.f32.gmra.mrb[0].mxu0 %v599
  %v722 = vpop.f32.mrb[0].mxu0
  %v723 = vadd.f32 %v581, %v722
  %v724 = vpop.f32.mrb[0].mxu0
  %725 = vmatprep.mubr.f32.mxu0 0.0
  %726 = vmatmul.mubr.f32.gmra.mrb[0].mxu0 %v602
  %v727 = vpop.f32.mrb[0].mxu0
  %v728 = vadd.f32 %v581, %v727
  %v729 = vpop.f32.mrb[0].mxu0
  %730 = vmatprep.mubr.f32.mxu0 0.0
  %731 = vmatmul.mubr.f32.gmra.mrb[0].mxu0 %v605
  %v732 = vpop.f32.mrb[0].mxu0
  %v733 = vadd.f32 %v581, %v732
  %v734 = vpop.f32.mrb[0].mxu0
  %735 = vmatprep.mubr.f32.mxu0 0.0
  %736 = vmatmul.mubr.f32.gmra.mrb[0].mxu0 %v608
  %v737 = vpop.f32.mrb[0].mxu0
  %v738 = vadd.f32 %v581, %v737
  %v739 = vpop.f32.mrb[0].mxu0
  %740 = vmatprep.mubr.f32.mxu0 0.0
  %741 = vmatmul.mubr.f32.gmra.mrb[0].mxu0 %v611
  %v742 = vpop.f32.mrb[0].mxu0
  %v743 = vadd.f32 %v581, %v742
  %v744 = vpop.f32.mrb[0].mxu0
  %745 = vmatprep.mubr.f32.mxu0 0.0
  %746 = vmatmul.mubr.f32.gmra.mrb[0].mxu0 %v614
  %v747 = vpop.f32.mrb[0].mxu0
  %v748 = vadd.f32 %v581, %v747
  %v749 = vpop.f32.mrb[0].mxu0
  %750 = vmatprep.mubr.f32.mxu0 0.0
  %751 = vmatmul.mubr.f32.gmra.mrb[0].mxu0 %v617
  %v752 = vpop.f32.mrb[0].mxu0
  %v753 = vadd.f32 %v581, %v752
  %v754 = vpop.f32.mrb[0].mxu0
  %755 = vmatprep.mubr.f32.mxu0 0.0
  %756 = vmatmul.mubr.f32.gmra.mrb[0].mxu0 %v620
  %v757 = vpop.f32.mrb[0].mxu0
  %v758 = vadd.f32 %v581, %v757
  %v759 = vpop.f32.mrb[0].mxu0
  %760 = vmatprep.mubr.f32.mxu0 0.0
  %761 = vmatmul.mubr.f32.gmra.mrb[0].mxu0 %v623
  %v762 = vpop.f32.mrb[0].mxu0
  %v763 = vadd.f32 %v581, %v762
  %v764 = vpop.f32.mrb[0].mxu0
  %765 = vmatprep.mubr.f32.mxu0 0.0
  %766 = vmatmul.mubr.f32.gmra.mrb[0].mxu0 %v626
  %v767 = vpop.f32.mrb[0].mxu0
  %v768 = vadd.f32 %v581, %v767
  %v769 = vpop.f32.mrb[0].mxu0
  %770 = vmatprep.mubr.f32.mxu0 0.0
  %771 = vmatmul.mubr.f32.gmra.mrb[0].mxu0 %v629
  %v772 = vpop.f32.mrb[0].mxu0
  %v773 = vadd.f32 %v581, %v772
  %v774 = vpop.f32.mrb[0].mxu0
  %775 = vdwg.mxu0
  %vm776 = vcmp.gt.f32.partialorder %v698, 0.0
  %vm777 = vcmp.gt.f32.partialorder %v703, 0.0
  %vm778 = vcmp.gt.f32.partialorder %v708, 0.0
  %vm779 = vcmp.gt.f32.partialorder %v713, 0.0
  %vm780 = vcmp.gt.f32.partialorder %v718, 0.0
  %vm781 = vcmp.gt.f32.partialorder %v723, 0.0
  %vm782 = vcmp.gt.f32.partialorder %v728, 0.0
  %vm783 = vcmp.gt.f32.partialorder %v733, 0.0
  %vm784 = vcmp.gt.f32.partialorder %v738, 0.0
  %vm785 = vcmp.gt.f32.partialorder %v743, 0.0
  %vm786 = vcmp.gt.f32.partialorder %v748, 0.0
  %vm787 = vcmp.gt.f32.partialorder %v753, 0.0
  %vm788 = vcmp.gt.f32.partialorder %v758, 0.0
  %vm789 = vcmp.gt.f32.partialorder %v763, 0.0
  %vm790 = vcmp.gt.f32.partialorder %v768, 0.0
  %vm791 = vcmp.gt.f32.partialorder %v773, 0.0
  %v792 = vmul.f32 %v698, 0.01
  %v793 = vmul.f32 %v703, 0.01
  %v794 = vmul.f32 %v708, 0.01
  %v795 = vmul.f32 %v713, 0.01
  %v796 = vmul.f32 %v718, 0.01
  %v797 = vmul.f32 %v723, 0.01
  %v798 = vmul.f32 %v728, 0.01
  %v799 = vmul.f32 %v733, 0.01
  %v800 = vmul.f32 %v738, 0.01
  %v801 = vmul.f32 %v743, 0.01
  %v802 = vmul.f32 %v748, 0.01
  %v803 = vmul.f32 %v753, 0.01
  %v804 = vmul.f32 %v758, 0.01
  %v805 = vmul.f32 %v763, 0.01
  %v806 = vmul.f32 %v768, 0.01
  %v807 = vmul.f32 %v773, 0.01
  %v808 = vsel %vm776, %v698, %v792
  %v809 = vsel %vm777, %v703, %v793
  %v810 = vsel %vm778, %v708, %v794
  %v811 = vsel %vm779, %v713, %v795
  %v812 = vsel %vm780, %v718, %v796
  %v813 = vsel %vm781, %v723, %v797
  %v814 = vsel %vm782, %v728, %v798
  %v815 = vsel %vm783, %v733, %v799
  %v816 = vsel %vm784, %v738, %v800
  %v817 = vsel %vm785, %v743, %v801
  %v818 = vsel %vm786, %v748, %v802
  %v819 = vsel %vm787, %v753, %v803
  %v820 = vsel %vm788, %v758, %v804
  %v821 = vsel %vm789, %v763, %v805
  %v822 = vsel %vm790, %v768, %v806
  %v823 = vsel %vm791, %v773, %v807
  %v824 = vld [vmem:[%s8] sm:$0xff]
  %v825 = vld [vmem:[%s8 + $0x8] sm:$0xff]
  %v826 = vld [vmem:[%s8 + $0x10] sm:$0xff]
  %v827 = vld [vmem:[%s8 + $0x18] sm:$0xff]
  %v828 = vld [vmem:[%s9] sm:$0x1]
  %v830 = vlaneseq
  %v831 = vshrl.u32 %v830, 7
  %v832 = vsub.s32 0, %v831
  %v833 = vrot.slane %v828, %v832
  %v836 = vsel %vm62, %v808, 0
  %v839 = vsel %vm62, %v809, 0
  %v842 = vsel %vm62, %v810, 0
  %v845 = vsel %vm62, %v811, 0
  %v848 = vsel %vm62, %v812, 0
  %v851 = vsel %vm62, %v813, 0
  %v854 = vsel %vm62, %v814, 0
  %v857 = vsel %vm62, %v815, 0
  %v860 = vsel %vm62, %v816, 0
  %v863 = vsel %vm62, %v817, 0
  %v866 = vsel %vm62, %v818, 0
  %v869 = vsel %vm62, %v819, 0
  %v872 = vsel %vm62, %v820, 0
  %v875 = vsel %vm62, %v821, 0
  %v878 = vsel %vm62, %v822, 0
  %v881 = vsel %vm62, %v823, 0
  %883 = vmatprep.subr.mxu0 0.0
  %884 = vmatpush1.msra.mxu0 %v824
  %885 = vmatprep.subr.mxu0 0.0
  %886 = vmatpush1.msra.mxu0 %v825
  %887 = vmatprep.subr.mxu0 0.0
  %888 = vmatpush1.msra.mxu0 %v826
  %889 = vmatprep.subr.mxu0 0.0
  %890 = vmatpush1.msra.mxu0 %v827
  %891 = vmatprep.subr.mxu0 0.0
  %892 = vmatpush1.msra.mxu0 0.0
  %893 = vmatprep.subr.mxu0 0.0
  %894 = vmatpush1.msra.mxu0 0.0
  %895 = vmatprep.subr.mxu0 0.0
  %896 = vmatpush1.msra.mxu0 0.0
  %897 = vmatprep.subr.mxu0 0.0
  %898 = vmatpush1.msra.mxu0 0.0
  %899 = vmatprep.subr.mxu0 0.0
  %900 = vmatpush1.msra.mxu0 0.0
  %901 = vmatprep.subr.mxu0 0.0
  %902 = vmatpush1.msra.mxu0 0.0
  %903 = vmatprep.subr.mxu0 0.0
  %904 = vmatpush1.msra.mxu0 0.0
  %905 = vmatprep.subr.mxu0 0.0
  %906 = vmatpush1.msra.mxu0 0.0
  %907 = vmatprep.subr.mxu0 0.0
  %908 = vmatpush1.msra.mxu0 0.0
  %909 = vmatprep.subr.mxu0 0.0
  %910 = vmatpush1.msra.mxu0 0.0
  %911 = vmatprep.subr.mxu0 0.0
  %912 = vmatpush1.msra.mxu0 0.0
  %913 = vmatprep.subr.mxu0 0.0
  %914 = vmatpush1.msra.mxu0 0.0
  %915 = vmatprep.subr.mxu0 0.0
  %916 = vmatpush1.msra.mxu0 0.0
  %917 = vmatprep.subr.mxu0 0.0
  %918 = vmatpush1.msra.mxu0 0.0
  %919 = vmatprep.subr.mxu0 0.0
  %920 = vmatpush1.msra.mxu0 0.0
  %921 = vmatprep.subr.mxu0 0.0
  %922 = vmatpush1.msra.mxu0 0.0
  %923 = vmatprep.subr.mxu0 0.0
  %924 = vmatpush1.msra.mxu0 0.0
  %925 = vmatprep.subr.mxu0 0.0
  %926 = vmatpush1.msra.mxu0 0.0
  %927 = vmatprep.subr.mxu0 0.0
  %928 = vmatpush1.msra.mxu0 0.0
  %929 = vmatprep.subr.mxu0 0.0
  %930 = vmatpush1.msra.mxu0 0.0
  %931 = vmatprep.subr.mxu0 0.0
  %932 = vmatpush1.msra.mxu0 0.0
  %933 = vmatprep.subr.mxu0 0.0
  %934 = vmatpush1.msra.mxu0 0.0
  %935 = vmatprep.subr.mxu0 0.0
  %936 = vmatpush1.msra.mxu0 0.0
  %937 = vmatprep.subr.mxu0 0.0
  %938 = vmatpush1.msra.mxu0 0.0
  %939 = vmatprep.subr.mxu0 0.0
  %940 = vmatpush1.msra.mxu0 0.0
  %941 = vmatprep.subr.mxu0 0.0
  %942 = vmatpush1.msra.mxu0 0.0
  %943 = vmatprep.subr.mxu0 0.0
  %944 = vmatpush1.msra.mxu0 0.0
  %945 = vmatprep.subr.mxu0 0.0
  %946 = vmatpush1.msra.mxu0 0.0
  %947 = vmatprep.mubr.f32.mxu0 0.0
  %948 = vmatmul.mubr.f32.gmra.mrb[0].mxu0 %v836
  %v949 = vpop.f32.mrb[0].mxu0
  %v950 = vadd.f32 %v833, %v949
  %v951 = vpop.f32.mrb[0].mxu0
  %952 = vmatprep.mubr.f32.mxu0 0.0
  %953 = vmatmul.mubr.f32.gmra.mrb[0].mxu0 %v839
  %v954 = vpop.f32.mrb[0].mxu0
  %v955 = vadd.f32 %v833, %v954
  %v956 = vpop.f32.mrb[0].mxu0
  %957 = vmatprep.mubr.f32.mxu0 0.0
  %958 = vmatmul.mubr.f32.gmra.mrb[0].mxu0 %v842
  %v959 = vpop.f32.mrb[0].mxu0
  %v960 = vadd.f32 %v833, %v959
  %v961 = vpop.f32.mrb[0].mxu0
  %962 = vmatprep.mubr.f32.mxu0 0.0
  %963 = vmatmul.mubr.f32.gmra.mrb[0].mxu0 %v845
  %v964 = vpop.f32.mrb[0].mxu0
  %v965 = vadd.f32 %v833, %v964
  %v966 = vpop.f32.mrb[0].mxu0
  %967 = vmatprep.mubr.f32.mxu0 0.0
  %968 = vmatmul.mubr.f32.gmra.mrb[0].mxu0 %v848
  %v969 = vpop.f32.mrb[0].mxu0
  %v970 = vadd.f32 %v833, %v969
  %v971 = vpop.f32.mrb[0].mxu0
  %972 = vmatprep.mubr.f32.mxu0 0.0
  %973 = vmatmul.mubr.f32.gmra.mrb[0].mxu0 %v851
  %v974 = vpop.f32.mrb[0].mxu0
  %v975 = vadd.f32 %v833, %v974
  %v976 = vpop.f32.mrb[0].mxu0
  %977 = vmatprep.mubr.f32.mxu0 0.0
  %978 = vmatmul.mubr.f32.gmra.mrb[0].mxu0 %v854
  %v979 = vpop.f32.mrb[0].mxu0
  %v980 = vadd.f32 %v833, %v979
  %v981 = vpop.f32.mrb[0].mxu0
  %982 = vmatprep.mubr.f32.mxu0 0.0
  %983 = vmatmul.mubr.f32.gmra.mrb[0].mxu0 %v857
  %v984 = vpop.f32.mrb[0].mxu0
  %v985 = vadd.f32 %v833, %v984
  %v986 = vpop.f32.mrb[0].mxu0
  %987 = vmatprep.mubr.f32.mxu0 0.0
  %988 = vmatmul.mubr.f32.gmra.mrb[0].mxu0 %v860
  %v989 = vpop.f32.mrb[0].mxu0
  %v990 = vadd.f32 %v833, %v989
  %v991 = vpop.f32.mrb[0].mxu0
  %992 = vmatprep.mubr.f32.mxu0 0.0
  %993 = vmatmul.mubr.f32.gmra.mrb[0].mxu0 %v863
  %v994 = vpop.f32.mrb[0].mxu0
  %v995 = vadd.f32 %v833, %v994
  %v996 = vpop.f32.mrb[0].mxu0
  %997 = vmatprep.mubr.f32.mxu0 0.0
  %998 = vmatmul.mubr.f32.gmra.mrb[0].mxu0 %v866
  %v999 = vpop.f32.mrb[0].mxu0
  %v1000 = vadd.f32 %v833, %v999
  %v1001 = vpop.f32.mrb[0].mxu0
  %1002 = vmatprep.mubr.f32.mxu0 0.0
  %1003 = vmatmul.mubr.f32.gmra.mrb[0].mxu0 %v869
  %v1004 = vpop.f32.mrb[0].mxu0
  %v1005 = vadd.f32 %v833, %v1004
  %v1006 = vpop.f32.mrb[0].mxu0
  %1007 = vmatprep.mubr.f32.mxu0 0.0
  %1008 = vmatmul.mubr.f32.gmra.mrb[0].mxu0 %v872
  %v1009 = vpop.f32.mrb[0].mxu0
  %v1010 = vadd.f32 %v833, %v1009
  %v1011 = vpop.f32.mrb[0].mxu0
  %1012 = vmatprep.mubr.f32.mxu0 0.0
  %1013 = vmatmul.mubr.f32.gmra.mrb[0].mxu0 %v875
  %v1014 = vpop.f32.mrb[0].mxu0
  %v1015 = vadd.f32 %v833, %v1014
  %v1016 = vpop.f32.mrb[0].mxu0
  %1017 = vmatprep.mubr.f32.mxu0 0.0
  %1018 = vmatmul.mubr.f32.gmra.mrb[0].mxu0 %v878
  %v1019 = vpop.f32.mrb[0].mxu0
  %v1020 = vadd.f32 %v833, %v1019
  %v1021 = vpop.f32.mrb[0].mxu0
  %1022 = vmatprep.mubr.f32.mxu0 0.0
  %1023 = vmatmul.mubr.f32.gmra.mrb[0].mxu0 %v881
  %v1024 = vpop.f32.mrb[0].mxu0
  %v1025 = vadd.f32 %v833, %v1024
  %v1026 = vpop.f32.mrb[0].mxu0
  %1027 = vdwg.mxu0
  %vm1028 = vcmp.gt.f32.partialorder %v950, 0.0
  %vm1029 = vcmp.gt.f32.partialorder %v955, 0.0
  %vm1030 = vcmp.gt.f32.partialorder %v960, 0.0
  %vm1031 = vcmp.gt.f32.partialorder %v965, 0.0
  %vm1032 = vcmp.gt.f32.partialorder %v970, 0.0
  %vm1033 = vcmp.gt.f32.partialorder %v975, 0.0
  %vm1034 = vcmp.gt.f32.partialorder %v980, 0.0
  %vm1035 = vcmp.gt.f32.partialorder %v985, 0.0
  %vm1036 = vcmp.gt.f32.partialorder %v990, 0.0
  %vm1037 = vcmp.gt.f32.partialorder %v995, 0.0
  %vm1038 = vcmp.gt.f32.partialorder %v1000, 0.0
  %vm1039 = vcmp.gt.f32.partialorder %v1005, 0.0
  %vm1040 = vcmp.gt.f32.partialorder %v1010, 0.0
  %vm1041 = vcmp.gt.f32.partialorder %v1015, 0.0
  %vm1042 = vcmp.gt.f32.partialorder %v1020, 0.0
  %vm1043 = vcmp.gt.f32.partialorder %v1025, 0.0
  %v1044 = vmul.f32 %v950, 0.01
  %v1045 = vmul.f32 %v955, 0.01
  %v1046 = vmul.f32 %v960, 0.01
  %v1047 = vmul.f32 %v965, 0.01
  %v1048 = vmul.f32 %v970, 0.01
  %v1049 = vmul.f32 %v975, 0.01
  %v1050 = vmul.f32 %v980, 0.01
  %v1051 = vmul.f32 %v985, 0.01
  %v1052 = vmul.f32 %v990, 0.01
  %v1053 = vmul.f32 %v995, 0.01
  %v1054 = vmul.f32 %v1000, 0.01
  %v1055 = vmul.f32 %v1005, 0.01
  %v1056 = vmul.f32 %v1010, 0.01
  %v1057 = vmul.f32 %v1015, 0.01
  %v1058 = vmul.f32 %v1020, 0.01
  %v1059 = vmul.f32 %v1025, 0.01
  %v1060 = vsel %vm1028, %v950, %v1044
  %v1061 = vsel %vm1029, %v955, %v1045
  %v1062 = vsel %vm1030, %v960, %v1046
  %v1063 = vsel %vm1031, %v965, %v1047
  %v1064 = vsel %vm1032, %v970, %v1048
  %v1065 = vsel %vm1033, %v975, %v1049
  %v1066 = vsel %vm1034, %v980, %v1050
  %v1067 = vsel %vm1035, %v985, %v1051
  %v1068 = vsel %vm1036, %v990, %v1052
  %v1069 = vsel %vm1037, %v995, %v1053
  %v1070 = vsel %vm1038, %v1000, %v1054
  %v1071 = vsel %vm1039, %v1005, %v1055
  %v1072 = vsel %vm1040, %v1010, %v1056
  %v1073 = vsel %vm1041, %v1015, %v1057
  %v1074 = vsel %vm1042, %v1020, %v1058
  %v1075 = vsel %vm1043, %v1025, %v1059
  %1092 = vrot.lane.b32.xlu0 %v1060, 64
  %v1093 = vpop.permute.xlu0 %1092
  %1094 = vrot.lane.b32.xlu0 %v1061, 64
  %v1095 = vpop.permute.xlu0 %1094
  %1096 = vrot.lane.b32.xlu0 %v1062, 64
  %v1097 = vpop.permute.xlu0 %1096
  %1098 = vrot.lane.b32.xlu0 %v1063, 64
  %v1099 = vpop.permute.xlu0 %1098
  %1100 = vrot.lane.b32.xlu0 %v1064, 64
  %v1101 = vpop.permute.xlu0 %1100
  %1102 = vrot.lane.b32.xlu0 %v1065, 64
  %v1103 = vpop.permute.xlu0 %1102
  %1104 = vrot.lane.b32.xlu0 %v1066, 64
  %v1105 = vpop.permute.xlu0 %1104
  %1106 = vrot.lane.b32.xlu0 %v1067, 64
  %v1107 = vpop.permute.xlu0 %1106
  %1108 = vrot.lane.b32.xlu0 %v1068, 64
  %v1109 = vpop.permute.xlu0 %1108
  %1110 = vrot.lane.b32.xlu0 %v1069, 64
  %v1111 = vpop.permute.xlu0 %1110
  %1112 = vrot.lane.b32.xlu0 %v1070, 64
  %v1113 = vpop.permute.xlu0 %1112
  %1114 = vrot.lane.b32.xlu0 %v1071, 64
  %v1115 = vpop.permute.xlu0 %1114
  %1116 = vrot.lane.b32.xlu0 %v1072, 64
  %v1117 = vpop.permute.xlu0 %1116
  %1118 = vrot.lane.b32.xlu0 %v1073, 64
  %v1119 = vpop.permute.xlu0 %1118
  %1120 = vrot.lane.b32.xlu0 %v1074, 64
  %v1121 = vpop.permute.xlu0 %1120
  %1122 = vrot.lane.b32.xlu0 %v1075, 64
  %v1123 = vpop.permute.xlu0 %1122
  %vm1140 = vcmask 523264
  %v1141 = vsel %vm1140, %v540, %v1093
  %v1142 = vsel %vm1140, %v541, %v1095
  %v1143 = vsel %vm1140, %v542, %v1097
  %v1144 = vsel %vm1140, %v543, %v1099
  %v1145 = vsel %vm1140, %v544, %v1101
  %v1146 = vsel %vm1140, %v545, %v1103
  %v1147 = vsel %vm1140, %v546, %v1105
  %v1148 = vsel %vm1140, %v547, %v1107
  %v1149 = vsel %vm1140, %v548, %v1109
  %v1150 = vsel %vm1140, %v549, %v1111
  %v1151 = vsel %vm1140, %v550, %v1113
  %v1152 = vsel %vm1140, %v551, %v1115
  %v1153 = vsel %vm1140, %v552, %v1117
  %v1154 = vsel %vm1140, %v553, %v1119
  %v1155 = vsel %vm1140, %v554, %v1121
  %v1156 = vsel %vm1140, %v555, %v1123
  %1157 = vst [vmem:[%s10] sm:$0xff] %v1141
  %1158 = vst [vmem:[%s10 + $0x8] sm:$0xff] %v1142
  %1159 = vst [vmem:[%s10 + $0x10] sm:$0xff] %v1143
  %1160 = vst [vmem:[%s10 + $0x18] sm:$0xff] %v1144
  %1161 = vst [vmem:[%s10 + $0x20] sm:$0xff] %v1145
  %1162 = vst [vmem:[%s10 + $0x28] sm:$0xff] %v1146
  %1163 = vst [vmem:[%s10 + $0x30] sm:$0xff] %v1147
  %1164 = vst [vmem:[%s10 + $0x38] sm:$0xff] %v1148
  %1165 = vst [vmem:[%s10 + $0x40] sm:$0xff] %v1149
  %1166 = vst [vmem:[%s10 + $0x48] sm:$0xff] %v1150
  %1167 = vst [vmem:[%s10 + $0x50] sm:$0xff] %v1151
  %1168 = vst [vmem:[%s10 + $0x58] sm:$0xff] %v1152
  %1169 = vst [vmem:[%s10 + $0x60] sm:$0xff] %v1153
  %1170 = vst [vmem:[%s10 + $0x68] sm:$0xff] %v1154
  %1171 = vst [vmem:[%s10 + $0x70] sm:$0xff] %v1155
  %1172 = vst [vmem:[%s10 + $0x78] sm:$0xff] %v1156
  // Predicated region
  $region42: #{megnet_layer_forward.4} parent=0 // pred_check
    _
  $region43: #{megnet_layer_forward.4} parent=0 // pred_check_branch
    %1174 = sbr.rel (0) target = $region45
  $region44: #{megnet_layer_forward.4} parent=0 // pred_region
    _
  $region45: #{megnet_layer_forward.4} parent=0 // pred_fallthru
    _
  // Predicated region
  $region46: #{megnet_layer_forward.4} parent=0 // pred_check
    _
  $region47: #{megnet_layer_forward.4} parent=0 // pred_check_branch
    %1176 = sbr.rel (0) target = $region49
  $region48: #{megnet_layer_forward.4} parent=0 // pred_region
    _
  $region49: #{megnet_layer_forward.4} parent=0 // pred_fallthru
    _

// kernel: megnet_layer_forward.5
$region0: #{megnet_layer_forward.5}
  #allocation0 [shape = 'u32[]', space=smem, size = 0x4, offset = 0x4, fixed_abs, tag = 'smem constant byte address 0x4 - core index']
  #allocation1 [shape = 'u32[144,128]{1,0:T(1,128)}', space=vmem, size = 0x12000, scoped, tag = 'internal scratch']
  %s0 = inlined_call_operand.vmem [shape: f32[128,32], index: 0, kind: input, shape index: {}]
  %s1 = inlined_call_operand.vmem [shape: s32[128,1], index: 1, kind: input, shape index: {}]
  %s2 = inlined_call_operand.vmem [shape: s32[128,1], index: 2, kind: input, shape index: {}]
  %s3 = inlined_call_operand.vmem [shape: s32[1,128], index: 3, kind: input, shape index: {}]
  %s4 = inlined_call_operand.vmem [shape: f32[128,128], index: 4, kind: input, shape index: {}]
  %s5 = inlined_call_operand.vmem [shape: f32[32,32], index: 5, kind: input, shape index: {}]
  %s6 = inlined_call_operand.vmem [shape: f32[1,32], index: 6, kind: input, shape index: {}]
  %s7 = inlined_call_operand.vmem [shape: f32[32,64], index: 7, kind: input, shape index: {}]
  %s8 = inlined_call_operand.vmem [shape: f32[1,64], index: 8, kind: input, shape index: {}]
  %s9 = inlined_call_operand.vmem [shape: f32[128,64], index: 9, kind: input, shape index: {}]
  %s10 = inlined_call_operand.vmem [shape: f32[128,64], index: 10, kind: input, shape index: {}]
  %s11 = inlined_call_operand.vmem [shape: f32[64,64], index: 11, kind: input, shape index: {}]
  %s12 = inlined_call_operand.vmem [shape: f32[1,64], index: 12, kind: input, shape index: {}]
  %s13 = inlined_call_operand.vmem [shape: f32[64,32], index: 13, kind: input, shape index: {}]
  %s14 = inlined_call_operand.vmem [shape: f32[1,32], index: 14, kind: input, shape index: {}]
  %s15 = inlined_call_operand.vmem [shape: f32[128,32], index: 15, kind: output, shape index: {0}]
  %s16 = inlined_call_operand.vmem [shape: f32[128,64], index: 16, kind: output, shape index: {1}]
  %17 = xla_tuple %s15, %s16
  %s18 = sld [smem:[#allocation0]]
  $region82: #{megnet_layer_forward.5} parent=0
    _
  %s20 = ssub.s32 1, %s18
  %s21 = scalar_select 0, %s20, %s18
  // Predicated region
  $region2: #{megnet_layer_forward.5} parent=0 // pred_check
    _
  $region3: #{megnet_layer_forward.5} parent=0 // pred_check_branch
    %23 = sbr.rel (0) target = $region5
  $region4: #{megnet_layer_forward.5} parent=0 // pred_region
    _
  $region5: #{megnet_layer_forward.5} parent=0 // pred_fallthru
    _
  // Predicated region
  $region6: #{megnet_layer_forward.5} parent=0 // pred_check
    _
  $region7: #{megnet_layer_forward.5} parent=0 // pred_check_branch
    %25 = sbr.rel (0) target = $region9
  $region8: #{megnet_layer_forward.5} parent=0 // pred_region
    _
  $region9: #{megnet_layer_forward.5} parent=0 // pred_fallthru
    _
  // Predicated region
  $region10: #{megnet_layer_forward.5} parent=0 // pred_check
    _
  $region11: #{megnet_layer_forward.5} parent=0 // pred_check_branch
    %27 = sbr.rel (0) target = $region13
  $region12: #{megnet_layer_forward.5} parent=0 // pred_region
    _
  $region13: #{megnet_layer_forward.5} parent=0 // pred_fallthru
    _
  // Predicated region
  $region14: #{megnet_layer_forward.5} parent=0 // pred_check
    _
  $region15: #{megnet_layer_forward.5} parent=0 // pred_check_branch
    %29 = sbr.rel (0) target = $region17
  $region16: #{megnet_layer_forward.5} parent=0 // pred_region
    _
  $region17: #{megnet_layer_forward.5} parent=0 // pred_fallthru
    _
  // Predicated region
  $region18: #{megnet_layer_forward.5} parent=0 // pred_check
    _
  $region19: #{megnet_layer_forward.5} parent=0 // pred_check_branch
    %31 = sbr.rel (0) target = $region21
  $region20: #{megnet_layer_forward.5} parent=0 // pred_region
    _
  $region21: #{megnet_layer_forward.5} parent=0 // pred_fallthru
    _
  // Predicated region
  $region22: #{megnet_layer_forward.5} parent=0 // pred_check
    _
  $region23: #{megnet_layer_forward.5} parent=0 // pred_check_branch
    %33 = sbr.rel (0) target = $region25
  $region24: #{megnet_layer_forward.5} parent=0 // pred_region
    _
  $region25: #{megnet_layer_forward.5} parent=0 // pred_fallthru
    _
  // Predicated region
  $region26: #{megnet_layer_forward.5} parent=0 // pred_check
    _
  $region27: #{megnet_layer_forward.5} parent=0 // pred_check_branch
    %35 = sbr.rel (0) target = $region29
  $region28: #{megnet_layer_forward.5} parent=0 // pred_region
    _
  $region29: #{megnet_layer_forward.5} parent=0 // pred_fallthru
    _
  // Predicated region
  $region30: #{megnet_layer_forward.5} parent=0 // pred_check
    _
  $region31: #{megnet_layer_forward.5} parent=0 // pred_check_branch
    %37 = sbr.rel (0) target = $region33
  $region32: #{megnet_layer_forward.5} parent=0 // pred_region
    _
  $region33: #{megnet_layer_forward.5} parent=0 // pred_fallthru
    _
  // Predicated region
  $region34: #{megnet_layer_forward.5} parent=0 // pred_check
    _
  $region35: #{megnet_layer_forward.5} parent=0 // pred_check_branch
    %39 = sbr.rel (0) target = $region37
  $region36: #{megnet_layer_forward.5} parent=0 // pred_region
    _
  $region37: #{megnet_layer_forward.5} parent=0 // pred_fallthru
    _
  // Predicated region
  $region38: #{megnet_layer_forward.5} parent=0 // pred_check
    _
  $region39: #{megnet_layer_forward.5} parent=0 // pred_check_branch
    %41 = sbr.rel (0) target = $region41
  $region40: #{megnet_layer_forward.5} parent=0 // pred_region
    _
  $region41: #{megnet_layer_forward.5} parent=0 // pred_fallthru
    _
  // Predicated region
  $region42: #{megnet_layer_forward.5} parent=0 // pred_check
    _
  $region43: #{megnet_layer_forward.5} parent=0 // pred_check_branch
    %43 = sbr.rel (0) target = $region45
  $region44: #{megnet_layer_forward.5} parent=0 // pred_region
    _
  $region45: #{megnet_layer_forward.5} parent=0 // pred_fallthru
    _
  // Predicated region
  $region46: #{megnet_layer_forward.5} parent=0 // pred_check
    _
  $region47: #{megnet_layer_forward.5} parent=0 // pred_check_branch
    %45 = sbr.rel (0) target = $region49
  $region48: #{megnet_layer_forward.5} parent=0 // pred_region
    _
  $region49: #{megnet_layer_forward.5} parent=0 // pred_fallthru
    _
  // Predicated region
  $region50: #{megnet_layer_forward.5} parent=0 // pred_check
    _
  $region51: #{megnet_layer_forward.5} parent=0 // pred_check_branch
    %47 = sbr.rel (0) target = $region53
  $region52: #{megnet_layer_forward.5} parent=0 // pred_region
    _
  $region53: #{megnet_layer_forward.5} parent=0 // pred_fallthru
    _
  // Predicated region
  $region54: #{megnet_layer_forward.5} parent=0 // pred_check
    _
  $region55: #{megnet_layer_forward.5} parent=0 // pred_check_branch
    %49 = sbr.rel (0) target = $region57
  $region56: #{megnet_layer_forward.5} parent=0 // pred_region
    _
  $region57: #{megnet_layer_forward.5} parent=0 // pred_fallthru
    _
  // Predicated region
  $region58: #{megnet_layer_forward.5} parent=0 // pred_check
    _
  $region59: #{megnet_layer_forward.5} parent=0 // pred_check_branch
    %51 = sbr.rel (0) target = $region61
  $region60: #{megnet_layer_forward.5} parent=0 // pred_region
    _
  $region61: #{megnet_layer_forward.5} parent=0 // pred_fallthru
    _
  %p52 = scmp.eq.s32.totalorder 0, 0
  // Predicated region
  $region62: #{megnet_layer_forward.5} parent=0 // pred_check
    %p53 = pneg %p52
  $region63: #{megnet_layer_forward.5} parent=0 // pred_check_branch
    %55 = sbr.rel (%p53) target = $region65
  $region64: #{megnet_layer_forward.5} parent=0 // pred_region
    %vm56 = vcmask 523264
    %57 = vst.msk [vmem:[%s16] sm:$0xff] %vm56, 0.0
    %58 = vst.msk [vmem:[%s16 + $0x8] sm:$0xff] %vm56, 0.0
    %59 = vst.msk [vmem:[%s16 + $0x10] sm:$0xff] %vm56, 0.0
    %60 = vst.msk [vmem:[%s16 + $0x18] sm:$0xff] %vm56, 0.0
    %61 = vst.msk [vmem:[%s16 + $0x20] sm:$0xff] %vm56, 0.0
    %62 = vst.msk [vmem:[%s16 + $0x28] sm:$0xff] %vm56, 0.0
    %63 = vst.msk [vmem:[%s16 + $0x30] sm:$0xff] %vm56, 0.0
    %64 = vst.msk [vmem:[%s16 + $0x38] sm:$0xff] %vm56, 0.0
    %65 = vst.msk [vmem:[%s16 + $0x40] sm:$0xff] %vm56, 0.0
    %66 = vst.msk [vmem:[%s16 + $0x48] sm:$0xff] %vm56, 0.0
    %67 = vst.msk [vmem:[%s16 + $0x50] sm:$0xff] %vm56, 0.0
    %68 = vst.msk [vmem:[%s16 + $0x58] sm:$0xff] %vm56, 0.0
    %69 = vst.msk [vmem:[%s16 + $0x60] sm:$0xff] %vm56, 0.0
    %70 = vst.msk [vmem:[%s16 + $0x68] sm:$0xff] %vm56, 0.0
    %71 = vst.msk [vmem:[%s16 + $0x70] sm:$0xff] %vm56, 0.0
    %72 = vst.msk [vmem:[%s16 + $0x78] sm:$0xff] %vm56, 0.0
  $region65: #{megnet_layer_forward.5} parent=0 // pred_fallthru
    _
  %v73 = vld [vmem:[%s0] sm:$0xff]
  %v74 = vld [vmem:[%s0 + $0x8] sm:$0xff]
  %v75 = vld [vmem:[%s0 + $0x10] sm:$0xff]
  %v76 = vld [vmem:[%s0 + $0x18] sm:$0xff]
  %v77 = vld [vmem:[%s0 + $0x20] sm:$0xff]
  %v78 = vld [vmem:[%s0 + $0x28] sm:$0xff]
  %v79 = vld [vmem:[%s0 + $0x30] sm:$0xff]
  %v80 = vld [vmem:[%s0 + $0x38] sm:$0xff]
  %v81 = vld [vmem:[%s0 + $0x40] sm:$0xff]
  %v82 = vld [vmem:[%s0 + $0x48] sm:$0xff]
  %v83 = vld [vmem:[%s0 + $0x50] sm:$0xff]
  %v84 = vld [vmem:[%s0 + $0x58] sm:$0xff]
  %v85 = vld [vmem:[%s0 + $0x60] sm:$0xff]
  %v86 = vld [vmem:[%s0 + $0x68] sm:$0xff]
  %v87 = vld [vmem:[%s0 + $0x70] sm:$0xff]
  %v88 = vld [vmem:[%s0 + $0x78] sm:$0xff]
  %v89 = vld [vmem:[%s5] sm:$0xff]
  %v90 = vld [vmem:[%s5 + $0x8] sm:$0xff]
  %v91 = vld [vmem:[%s5 + $0x10] sm:$0xff]
  %v92 = vld [vmem:[%s5 + $0x18] sm:$0xff]
  %v93 = vld [vmem:[%s6] sm:$0x1]
  %v95 = vlaneseq
  %v96 = vshrl.u32 %v95, 7
  %v97 = vsub.s32 0, %v96
  %v98 = vrot.slane %v93, %v97
  %vm100 = vcmask 261120
  %v102 = vsel %vm100, %v73, 0
  %v105 = vsel %vm100, %v74, 0
  %v108 = vsel %vm100, %v75, 0
  %v111 = vsel %vm100, %v76, 0
  %v114 = vsel %vm100, %v77, 0
  %v117 = vsel %vm100, %v78, 0
  %v120 = vsel %vm100, %v79, 0
  %v123 = vsel %vm100, %v80, 0
  %v126 = vsel %vm100, %v81, 0
  %v129 = vsel %vm100, %v82, 0
  %v132 = vsel %vm100, %v83, 0
  %v135 = vsel %vm100, %v84, 0
  %v138 = vsel %vm100, %v85, 0
  %v141 = vsel %vm100, %v86, 0
  %v144 = vsel %vm100, %v87, 0
  %v147 = vsel %vm100, %v88, 0
  %149 = vmatprep.subr.mxu0 0.0
  %150 = vmatpush1.msra.mxu0 %v89
  %151 = vmatprep.subr.mxu0 0.0
  %152 = vmatpush1.msra.mxu0 %v90
  %153 = vmatprep.subr.mxu0 0.0
  %154 = vmatpush1.msra.mxu0 %v91
  %155 = vmatprep.subr.mxu0 0.0
  %156 = vmatpush1.msra.mxu0 %v92
  %157 = vmatprep.subr.mxu0 0.0
  %158 = vmatpush1.msra.mxu0 0.0
  %159 = vmatprep.subr.mxu0 0.0
  %160 = vmatpush1.msra.mxu0 0.0
  %161 = vmatprep.subr.mxu0 0.0
  %162 = vmatpush1.msra.mxu0 0.0
  %163 = vmatprep.subr.mxu0 0.0
  %164 = vmatpush1.msra.mxu0 0.0
  %165 = vmatprep.subr.mxu0 0.0
  %166 = vmatpush1.msra.mxu0 0.0
  %167 = vmatprep.subr.mxu0 0.0
  %168 = vmatpush1.msra.mxu0 0.0
  %169 = vmatprep.subr.mxu0 0.0
  %170 = vmatpush1.msra.mxu0 0.0
  %171 = vmatprep.subr.mxu0 0.0
  %172 = vmatpush1.msra.mxu0 0.0
  %173 = vmatprep.subr.mxu0 0.0
  %174 = vmatpush1.msra.mxu0 0.0
  %175 = vmatprep.subr.mxu0 0.0
  %176 = vmatpush1.msra.mxu0 0.0
  %177 = vmatprep.subr.mxu0 0.0
  %178 = vmatpush1.msra.mxu0 0.0
  %179 = vmatprep.subr.mxu0 0.0
  %180 = vmatpush1.msra.mxu0 0.0
  %181 = vmatprep.subr.mxu0 0.0
  %182 = vmatpush1.msra.mxu0 0.0
  %183 = vmatprep.subr.mxu0 0.0
  %184 = vmatpush1.msra.mxu0 0.0
  %185 = vmatprep.subr.mxu0 0.0
  %186 = vmatpush1.msra.mxu0 0.0
  %187 = vmatprep.subr.mxu0 0.0
  %188 = vmatpush1.msra.mxu0 0.0
  %189 = vmatprep.subr.mxu0 0.0
  %190 = vmatpush1.msra.mxu0 0.0
  %191 = vmatprep.subr.mxu0 0.0
  %192 = vmatpush1.msra.mxu0 0.0
  %193 = vmatprep.subr.mxu0 0.0
  %194 = vmatpush1.msra.mxu0 0.0
  %195 = vmatprep.subr.mxu0 0.0
  %196 = vmatpush1.msra.mxu0 0.0
  %197 = vmatprep.subr.mxu0 0.0
  %198 = vmatpush1.msra.mxu0 0.0
  %199 = vmatprep.subr.mxu0 0.0
  %200 = vmatpush1.msra.mxu0 0.0
  %201 = vmatprep.subr.mxu0 0.0
  %202 = vmatpush1.msra.mxu0 0.0
  %203 = vmatprep.subr.mxu0 0.0
  %204 = vmatpush1.msra.mxu0 0.0
  %205 = vmatprep.subr.mxu0 0.0
  %206 = vmatpush1.msra.mxu0 0.0
  %207 = vmatprep.subr.mxu0 0.0
  %208 = vmatpush1.msra.mxu0 0.0
  %209 = vmatprep.subr.mxu0 0.0
  %210 = vmatpush1.msra.mxu0 0.0
  %211 = vmatprep.subr.mxu0 0.0
  %212 = vmatpush1.msra.mxu0 0.0
  %213 = vmatprep.mubr.f32.mxu0 0.0
  %214 = vmatmul.mubr.f32.gmra.mrb[0].mxu0 %v102
  %v215 = vpop.f32.mrb[0].mxu0
  %v216 = vadd.f32 %v98, %v215
  %v217 = vpop.f32.mrb[0].mxu0
  %218 = vmatprep.mubr.f32.mxu0 0.0
  %219 = vmatmul.mubr.f32.gmra.mrb[0].mxu0 %v105
  %v220 = vpop.f32.mrb[0].mxu0
  %v221 = vadd.f32 %v98, %v220
  %v222 = vpop.f32.mrb[0].mxu0
  %223 = vmatprep.mubr.f32.mxu0 0.0
  %224 = vmatmul.mubr.f32.gmra.mrb[0].mxu0 %v108
  %v225 = vpop.f32.mrb[0].mxu0
  %v226 = vadd.f32 %v98, %v225
  %v227 = vpop.f32.mrb[0].mxu0
  %228 = vmatprep.mubr.f32.mxu0 0.0
  %229 = vmatmul.mubr.f32.gmra.mrb[0].mxu0 %v111
  %v230 = vpop.f32.mrb[0].mxu0
  %v231 = vadd.f32 %v98, %v230
  %v232 = vpop.f32.mrb[0].mxu0
  %233 = vmatprep.mubr.f32.mxu0 0.0
  %234 = vmatmul.mubr.f32.gmra.mrb[0].mxu0 %v114
  %v235 = vpop.f32.mrb[0].mxu0
  %v236 = vadd.f32 %v98, %v235
  %v237 = vpop.f32.mrb[0].mxu0
  %238 = vmatprep.mubr.f32.mxu0 0.0
  %239 = vmatmul.mubr.f32.gmra.mrb[0].mxu0 %v117
  %v240 = vpop.f32.mrb[0].mxu0
  %v241 = vadd.f32 %v98, %v240
  %v242 = vpop.f32.mrb[0].mxu0
  %243 = vmatprep.mubr.f32.mxu0 0.0
  %244 = vmatmul.mubr.f32.gmra.mrb[0].mxu0 %v120
  %v245 = vpop.f32.mrb[0].mxu0
  %v246 = vadd.f32 %v98, %v245
  %v247 = vpop.f32.mrb[0].mxu0
  %248 = vmatprep.mubr.f32.mxu0 0.0
  %249 = vmatmul.mubr.f32.gmra.mrb[0].mxu0 %v123
  %v250 = vpop.f32.mrb[0].mxu0
  %v251 = vadd.f32 %v98, %v250
  %v252 = vpop.f32.mrb[0].mxu0
  %253 = vmatprep.mubr.f32.mxu0 0.0
  %254 = vmatmul.mubr.f32.gmra.mrb[0].mxu0 %v126
  %v255 = vpop.f32.mrb[0].mxu0
  %v256 = vadd.f32 %v98, %v255
  %v257 = vpop.f32.mrb[0].mxu0
  %258 = vmatprep.mubr.f32.mxu0 0.0
  %259 = vmatmul.mubr.f32.gmra.mrb[0].mxu0 %v129
  %v260 = vpop.f32.mrb[0].mxu0
  %v261 = vadd.f32 %v98, %v260
  %v262 = vpop.f32.mrb[0].mxu0
  %263 = vmatprep.mubr.f32.mxu0 0.0
  %264 = vmatmul.mubr.f32.gmra.mrb[0].mxu0 %v132
  %v265 = vpop.f32.mrb[0].mxu0
  %v266 = vadd.f32 %v98, %v265
  %v267 = vpop.f32.mrb[0].mxu0
  %268 = vmatprep.mubr.f32.mxu0 0.0
  %269 = vmatmul.mubr.f32.gmra.mrb[0].mxu0 %v135
  %v270 = vpop.f32.mrb[0].mxu0
  %v271 = vadd.f32 %v98, %v270
  %v272 = vpop.f32.mrb[0].mxu0
  %273 = vmatprep.mubr.f32.mxu0 0.0
  %274 = vmatmul.mubr.f32.gmra.mrb[0].mxu0 %v138
  %v275 = vpop.f32.mrb[0].mxu0
  %v276 = vadd.f32 %v98, %v275
  %v277 = vpop.f32.mrb[0].mxu0
  %278 = vmatprep.mubr.f32.mxu0 0.0
  %279 = vmatmul.mubr.f32.gmra.mrb[0].mxu0 %v141
  %v280 = vpop.f32.mrb[0].mxu0
  %v281 = vadd.f32 %v98, %v280
  %v282 = vpop.f32.mrb[0].mxu0
  %283 = vmatprep.mubr.f32.mxu0 0.0
  %284 = vmatmul.mubr.f32.gmra.mrb[0].mxu0 %v144
  %v285 = vpop.f32.mrb[0].mxu0
  %v286 = vadd.f32 %v98, %v285
  %v287 = vpop.f32.mrb[0].mxu0
  %288 = vmatprep.mubr.f32.mxu0 0.0
  %289 = vmatmul.mubr.f32.gmra.mrb[0].mxu0 %v147
  %v290 = vpop.f32.mrb[0].mxu0
  %v291 = vadd.f32 %v98, %v290
  %v292 = vpop.f32.mrb[0].mxu0
  %293 = vdwg.mxu0
  %vm294 = vcmp.gt.f32.partialorder %v216, 0.0
  %vm295 = vcmp.gt.f32.partialorder %v221, 0.0
  %vm296 = vcmp.gt.f32.partialorder %v226, 0.0
  %vm297 = vcmp.gt.f32.partialorder %v231, 0.0
  %vm298 = vcmp.gt.f32.partialorder %v236, 0.0
  %vm299 = vcmp.gt.f32.partialorder %v241, 0.0
  %vm300 = vcmp.gt.f32.partialorder %v246, 0.0
  %vm301 = vcmp.gt.f32.partialorder %v251, 0.0
  %vm302 = vcmp.gt.f32.partialorder %v256, 0.0
  %vm303 = vcmp.gt.f32.partialorder %v261, 0.0
  %vm304 = vcmp.gt.f32.partialorder %v266, 0.0
  %vm305 = vcmp.gt.f32.partialorder %v271, 0.0
  %vm306 = vcmp.gt.f32.partialorder %v276, 0.0
  %vm307 = vcmp.gt.f32.partialorder %v281, 0.0
  %vm308 = vcmp.gt.f32.partialorder %v286, 0.0
  %vm309 = vcmp.gt.f32.partialorder %v291, 0.0
  %v310 = vmul.f32 %v216, 0.01
  %v311 = vmul.f32 %v221, 0.01
  %v312 = vmul.f32 %v226, 0.01
  %v313 = vmul.f32 %v231, 0.01
  %v314 = vmul.f32 %v236, 0.01
  %v315 = vmul.f32 %v241, 0.01
  %v316 = vmul.f32 %v246, 0.01
  %v317 = vmul.f32 %v251, 0.01
  %v318 = vmul.f32 %v256, 0.01
  %v319 = vmul.f32 %v261, 0.01
  %v320 = vmul.f32 %v266, 0.01
  %v321 = vmul.f32 %v271, 0.01
  %v322 = vmul.f32 %v276, 0.01
  %v323 = vmul.f32 %v281, 0.01
  %v324 = vmul.f32 %v286, 0.01
  %v325 = vmul.f32 %v291, 0.01
  %v326 = vsel %vm294, %v216, %v310
  %v327 = vsel %vm295, %v221, %v311
  %v328 = vsel %vm296, %v226, %v312
  %v329 = vsel %vm297, %v231, %v313
  %v330 = vsel %vm298, %v236, %v314
  %v331 = vsel %vm299, %v241, %v315
  %v332 = vsel %vm300, %v246, %v316
  %v333 = vsel %vm301, %v251, %v317
  %v334 = vsel %vm302, %v256, %v318
  %v335 = vsel %vm303, %v261, %v319
  %v336 = vsel %vm304, %v266, %v320
  %v337 = vsel %vm305, %v271, %v321
  %v338 = vsel %vm306, %v276, %v322
  %v339 = vsel %vm307, %v281, %v323
  %v340 = vsel %vm308, %v286, %v324
  %v341 = vsel %vm309, %v291, %v325
  %v342 = vld [vmem:[%s7] sm:$0xff]
  %v343 = vld [vmem:[%s7 + $0x8] sm:$0xff]
  %v344 = vld [vmem:[%s7 + $0x10] sm:$0xff]
  %v345 = vld [vmem:[%s7 + $0x18] sm:$0xff]
  %v346 = vld [vmem:[%s8] sm:$0x1]
  %v348 = vlaneseq
  %v349 = vshrl.u32 %v348, 7
  %v350 = vsub.s32 0, %v349
  %v351 = vrot.slane %v346, %v350
  %v354 = vsel %vm100, %v326, 0
  %v357 = vsel %vm100, %v327, 0
  %v360 = vsel %vm100, %v328, 0
  %v363 = vsel %vm100, %v329, 0
  %v366 = vsel %vm100, %v330, 0
  %v369 = vsel %vm100, %v331, 0
  %v372 = vsel %vm100, %v332, 0
  %v375 = vsel %vm100, %v333, 0
  %v378 = vsel %vm100, %v334, 0
  %v381 = vsel %vm100, %v335, 0
  %v384 = vsel %vm100, %v336, 0
  %v387 = vsel %vm100, %v337, 0
  %v390 = vsel %vm100, %v338, 0
  %v393 = vsel %vm100, %v339, 0
  %v396 = vsel %vm100, %v340, 0
  %v399 = vsel %vm100, %v341, 0
  %401 = vmatprep.subr.mxu0 0.0
  %402 = vmatpush1.msra.mxu0 %v342
  %403 = vmatprep.subr.mxu0 0.0
  %404 = vmatpush1.msra.mxu0 %v343
  %405 = vmatprep.subr.mxu0 0.0
  %406 = vmatpush1.msra.mxu0 %v344
  %407 = vmatprep.subr.mxu0 0.0
  %408 = vmatpush1.msra.mxu0 %v345
  %409 = vmatprep.subr.mxu0 0.0
  %410 = vmatpush1.msra.mxu0 0.0
  %411 = vmatprep.subr.mxu0 0.0
  %412 = vmatpush1.msra.mxu0 0.0
  %413 = vmatprep.subr.mxu0 0.0
  %414 = vmatpush1.msra.mxu0 0.0
  %415 = vmatprep.subr.mxu0 0.0
  %416 = vmatpush1.msra.mxu0 0.0
  %417 = vmatprep.subr.mxu0 0.0
  %418 = vmatpush1.msra.mxu0 0.0
  %419 = vmatprep.subr.mxu0 0.0
  %420 = vmatpush1.msra.mxu0 0.0
  %421 = vmatprep.subr.mxu0 0.0
  %422 = vmatpush1.msra.mxu0 0.0
  %423 = vmatprep.subr.mxu0 0.0
  %424 = vmatpush1.msra.mxu0 0.0
  %425 = vmatprep.subr.mxu0 0.0
  %426 = vmatpush1.msra.mxu0 0.0
  %427 = vmatprep.subr.mxu0 0.0
  %428 = vmatpush1.msra.mxu0 0.0
  %429 = vmatprep.subr.mxu0 0.0
  %430 = vmatpush1.msra.mxu0 0.0
  %431 = vmatprep.subr.mxu0 0.0
  %432 = vmatpush1.msra.mxu0 0.0
  %433 = vmatprep.subr.mxu0 0.0
  %434 = vmatpush1.msra.mxu0 0.0
  %435 = vmatprep.subr.mxu0 0.0
  %436 = vmatpush1.msra.mxu0 0.0
  %437 = vmatprep.subr.mxu0 0.0
  %438 = vmatpush1.msra.mxu0 0.0
  %439 = vmatprep.subr.mxu0 0.0
  %440 = vmatpush1.msra.mxu0 0.0
  %441 = vmatprep.subr.mxu0 0.0
  %442 = vmatpush1.msra.mxu0 0.0
  %443 = vmatprep.subr.mxu0 0.0
  %444 = vmatpush1.msra.mxu0 0.0
  %445 = vmatprep.subr.mxu0 0.0
  %446 = vmatpush1.msra.mxu0 0.0
  %447 = vmatprep.subr.mxu0 0.0
  %448 = vmatpush1.msra.mxu0 0.0
  %449 = vmatprep.subr.mxu0 0.0
  %450 = vmatpush1.msra.mxu0 0.0
  %451 = vmatprep.subr.mxu0 0.0
  %452 = vmatpush1.msra.mxu0 0.0
  %453 = vmatprep.subr.mxu0 0.0
  %454 = vmatpush1.msra.mxu0 0.0
  %455 = vmatprep.subr.mxu0 0.0
  %456 = vmatpush1.msra.mxu0 0.0
  %457 = vmatprep.subr.mxu0 0.0
  %458 = vmatpush1.msra.mxu0 0.0
  %459 = vmatprep.subr.mxu0 0.0
  %460 = vmatpush1.msra.mxu0 0.0
  %461 = vmatprep.subr.mxu0 0.0
  %462 = vmatpush1.msra.mxu0 0.0
  %463 = vmatprep.subr.mxu0 0.0
  %464 = vmatpush1.msra.mxu0 0.0
  %465 = vmatprep.mubr.f32.mxu0 0.0
  %466 = vmatmul.mubr.f32.gmra.mrb[0].mxu0 %v354
  %v467 = vpop.f32.mrb[0].mxu0
  %v468 = vadd.f32 %v351, %v467
  %v469 = vpop.f32.mrb[0].mxu0
  %470 = vmatprep.mubr.f32.mxu0 0.0
  %471 = vmatmul.mubr.f32.gmra.mrb[0].mxu0 %v357
  %v472 = vpop.f32.mrb[0].mxu0
  %v473 = vadd.f32 %v351, %v472
  %v474 = vpop.f32.mrb[0].mxu0
  %475 = vmatprep.mubr.f32.mxu0 0.0
  %476 = vmatmul.mubr.f32.gmra.mrb[0].mxu0 %v360
  %v477 = vpop.f32.mrb[0].mxu0
  %v478 = vadd.f32 %v351, %v477
  %v479 = vpop.f32.mrb[0].mxu0
  %480 = vmatprep.mubr.f32.mxu0 0.0
  %481 = vmatmul.mubr.f32.gmra.mrb[0].mxu0 %v363
  %v482 = vpop.f32.mrb[0].mxu0
  %v483 = vadd.f32 %v351, %v482
  %v484 = vpop.f32.mrb[0].mxu0
  %485 = vmatprep.mubr.f32.mxu0 0.0
  %486 = vmatmul.mubr.f32.gmra.mrb[0].mxu0 %v366
  %v487 = vpop.f32.mrb[0].mxu0
  %v488 = vadd.f32 %v351, %v487
  %v489 = vpop.f32.mrb[0].mxu0
  %490 = vmatprep.mubr.f32.mxu0 0.0
  %491 = vmatmul.mubr.f32.gmra.mrb[0].mxu0 %v369
  %v492 = vpop.f32.mrb[0].mxu0
  %v493 = vadd.f32 %v351, %v492
  %v494 = vpop.f32.mrb[0].mxu0
  %495 = vmatprep.mubr.f32.mxu0 0.0
  %496 = vmatmul.mubr.f32.gmra.mrb[0].mxu0 %v372
  %v497 = vpop.f32.mrb[0].mxu0
  %v498 = vadd.f32 %v351, %v497
  %v499 = vpop.f32.mrb[0].mxu0
  %500 = vmatprep.mubr.f32.mxu0 0.0
  %501 = vmatmul.mubr.f32.gmra.mrb[0].mxu0 %v375
  %v502 = vpop.f32.mrb[0].mxu0
  %v503 = vadd.f32 %v351, %v502
  %v504 = vpop.f32.mrb[0].mxu0
  %505 = vmatprep.mubr.f32.mxu0 0.0
  %506 = vmatmul.mubr.f32.gmra.mrb[0].mxu0 %v378
  %v507 = vpop.f32.mrb[0].mxu0
  %v508 = vadd.f32 %v351, %v507
  %v509 = vpop.f32.mrb[0].mxu0
  %510 = vmatprep.mubr.f32.mxu0 0.0
  %511 = vmatmul.mubr.f32.gmra.mrb[0].mxu0 %v381
  %v512 = vpop.f32.mrb[0].mxu0
  %v513 = vadd.f32 %v351, %v512
  %v514 = vpop.f32.mrb[0].mxu0
  %515 = vmatprep.mubr.f32.mxu0 0.0
  %516 = vmatmul.mubr.f32.gmra.mrb[0].mxu0 %v384
  %v517 = vpop.f32.mrb[0].mxu0
  %v518 = vadd.f32 %v351, %v517
  %v519 = vpop.f32.mrb[0].mxu0
  %520 = vmatprep.mubr.f32.mxu0 0.0
  %521 = vmatmul.mubr.f32.gmra.mrb[0].mxu0 %v387
  %v522 = vpop.f32.mrb[0].mxu0
  %v523 = vadd.f32 %v351, %v522
  %v524 = vpop.f32.mrb[0].mxu0
  %525 = vmatprep.mubr.f32.mxu0 0.0
  %526 = vmatmul.mubr.f32.gmra.mrb[0].mxu0 %v390
  %v527 = vpop.f32.mrb[0].mxu0
  %v528 = vadd.f32 %v351, %v527
  %v529 = vpop.f32.mrb[0].mxu0
  %530 = vmatprep.mubr.f32.mxu0 0.0
  %531 = vmatmul.mubr.f32.gmra.mrb[0].mxu0 %v393
  %v532 = vpop.f32.mrb[0].mxu0
  %v533 = vadd.f32 %v351, %v532
  %v534 = vpop.f32.mrb[0].mxu0
  %535 = vmatprep.mubr.f32.mxu0 0.0
  %536 = vmatmul.mubr.f32.gmra.mrb[0].mxu0 %v396
  %v537 = vpop.f32.mrb[0].mxu0
  %v538 = vadd.f32 %v351, %v537
  %v539 = vpop.f32.mrb[0].mxu0
  %540 = vmatprep.mubr.f32.mxu0 0.0
  %541 = vmatmul.mubr.f32.gmra.mrb[0].mxu0 %v399
  %v542 = vpop.f32.mrb[0].mxu0
  %v543 = vadd.f32 %v351, %v542
  %v544 = vpop.f32.mrb[0].mxu0
  %545 = vdwg.mxu0
  %vm546 = vcmp.gt.f32.partialorder %v468, 0.0
  %vm547 = vcmp.gt.f32.partialorder %v473, 0.0
  %vm548 = vcmp.gt.f32.partialorder %v478, 0.0
  %vm549 = vcmp.gt.f32.partialorder %v483, 0.0
  %vm550 = vcmp.gt.f32.partialorder %v488, 0.0
  %vm551 = vcmp.gt.f32.partialorder %v493, 0.0
  %vm552 = vcmp.gt.f32.partialorder %v498, 0.0
  %vm553 = vcmp.gt.f32.partialorder %v503, 0.0
  %vm554 = vcmp.gt.f32.partialorder %v508, 0.0
  %vm555 = vcmp.gt.f32.partialorder %v513, 0.0
  %vm556 = vcmp.gt.f32.partialorder %v518, 0.0
  %vm557 = vcmp.gt.f32.partialorder %v523, 0.0
  %vm558 = vcmp.gt.f32.partialorder %v528, 0.0
  %vm559 = vcmp.gt.f32.partialorder %v533, 0.0
  %vm560 = vcmp.gt.f32.partialorder %v538, 0.0
  %vm561 = vcmp.gt.f32.partialorder %v543, 0.0
  %v562 = vmul.f32 %v468, 0.01
  %v563 = vmul.f32 %v473, 0.01
  %v564 = vmul.f32 %v478, 0.01
  %v565 = vmul.f32 %v483, 0.01
  %v566 = vmul.f32 %v488, 0.01
  %v567 = vmul.f32 %v493, 0.01
  %v568 = vmul.f32 %v498, 0.01
  %v569 = vmul.f32 %v503, 0.01
  %v570 = vmul.f32 %v508, 0.01
  %v571 = vmul.f32 %v513, 0.01
  %v572 = vmul.f32 %v518, 0.01
  %v573 = vmul.f32 %v523, 0.01
  %v574 = vmul.f32 %v528, 0.01
  %v575 = vmul.f32 %v533, 0.01
  %v576 = vmul.f32 %v538, 0.01
  %v577 = vmul.f32 %v543, 0.01
  %v578 = vsel %vm546, %v468, %v562
  %v579 = vsel %vm547, %v473, %v563
  %v580 = vsel %vm548, %v478, %v564
  %v581 = vsel %vm549, %v483, %v565
  %v582 = vsel %vm550, %v488, %v566
  %v583 = vsel %vm551, %v493, %v567
  %v584 = vsel %vm552, %v498, %v568
  %v585 = vsel %vm553, %v503, %v569
  %v586 = vsel %vm554, %v508, %v570
  %v587 = vsel %vm555, %v513, %v571
  %v588 = vsel %vm556, %v518, %v572
  %v589 = vsel %vm557, %v523, %v573
  %v590 = vsel %vm558, %v528, %v574
  %v591 = vsel %vm559, %v533, %v575
  %v592 = vsel %vm560, %v538, %v576
  %v593 = vsel %vm561, %v543, %v577
  %v594 = vld [vmem:[%s4] sm:$0xff]
  %v595 = vld [vmem:[%s4 + $0x8] sm:$0xff]
  %v596 = vld [vmem:[%s4 + $0x10] sm:$0xff]
  %v597 = vld [vmem:[%s4 + $0x18] sm:$0xff]
  %v598 = vld [vmem:[%s4 + $0x20] sm:$0xff]
  %v599 = vld [vmem:[%s4 + $0x28] sm:$0xff]
  %v600 = vld [vmem:[%s4 + $0x30] sm:$0xff]
  %v601 = vld [vmem:[%s4 + $0x38] sm:$0xff]
  %v602 = vld [vmem:[%s4 + $0x40] sm:$0xff]
  %v603 = vld [vmem:[%s4 + $0x48] sm:$0xff]
  %v604 = vld [vmem:[%s4 + $0x50] sm:$0xff]
  %v605 = vld [vmem:[%s4 + $0x58] sm:$0xff]
  %v606 = vld [vmem:[%s4 + $0x60] sm:$0xff]
  %v607 = vld [vmem:[%s4 + $0x68] sm:$0xff]
  %v608 = vld [vmem:[%s4 + $0x70] sm:$0xff]
  %v609 = vld [vmem:[%s4 + $0x78] sm:$0xff]
  %v610 = vlaneseq
  %v611 = vand.u32 %v610, 127
  %v612 = vld [vmem:[%s1] sm:$0xff]
  %v613 = vld [vmem:[%s1 + $0x8] sm:$0xff]
  %v614 = vld [vmem:[%s1 + $0x10] sm:$0xff]
  %v615 = vld [vmem:[%s1 + $0x18] sm:$0xff]
  %v616 = vld [vmem:[%s1 + $0x20] sm:$0xff]
  %v617 = vld [vmem:[%s1 + $0x28] sm:$0xff]
  %v618 = vld [vmem:[%s1 + $0x30] sm:$0xff]
  %v619 = vld [vmem:[%s1 + $0x38] sm:$0xff]
  %v620 = vld [vmem:[%s1 + $0x40] sm:$0xff]
  %v621 = vld [vmem:[%s1 + $0x48] sm:$0xff]
  %v622 = vld [vmem:[%s1 + $0x50] sm:$0xff]
  %v623 = vld [vmem:[%s1 + $0x58] sm:$0xff]
  %v624 = vld [vmem:[%s1 + $0x60] sm:$0xff]
  %v625 = vld [vmem:[%s1 + $0x68] sm:$0xff]
  %v626 = vld [vmem:[%s1 + $0x70] sm:$0xff]
  %v627 = vld [vmem:[%s1 + $0x78] sm:$0xff]
  %628 = vset.pattern.permute.xlu0 0
  %629 = vperm.xlu0 %628, %v612
  %v630 = vpop.permute.xlu0 %629
  %631 = vset.pattern.permute.xlu0 0
  %632 = vperm.xlu0 %631, %v613
  %v633 = vpop.permute.xlu0 %632
  %634 = vset.pattern.permute.xlu0 0
  %635 = vperm.xlu0 %634, %v614
  %v636 = vpop.permute.xlu0 %635
  %637 = vset.pattern.permute.xlu0 0
  %638 = vperm.xlu0 %637, %v615
  %v639 = vpop.permute.xlu0 %638
  %640 = vset.pattern.permute.xlu0 0
  %641 = vperm.xlu0 %640, %v616
  %v642 = vpop.permute.xlu0 %641
  %643 = vset.pattern.permute.xlu0 0
  %644 = vperm.xlu0 %643, %v617
  %v645 = vpop.permute.xlu0 %644
  %646 = vset.pattern.permute.xlu0 0
  %647 = vperm.xlu0 %646, %v618
  %v648 = vpop.permute.xlu0 %647
  %649 = vset.pattern.permute.xlu0 0
  %650 = vperm.xlu0 %649, %v619
  %v651 = vpop.permute.xlu0 %650
  %652 = vset.pattern.permute.xlu0 0
  %653 = vperm.xlu0 %652, %v620
  %v654 = vpop.permute.xlu0 %653
  %655 = vset.pattern.permute.xlu0 0
  %656 = vperm.xlu0 %655, %v621
  %v657 = vpop.permute.xlu0 %656
  %658 = vset.pattern.permute.xlu0 0
  %659 = vperm.xlu0 %658, %v622
  %v660 = vpop.permute.xlu0 %659
  %661 = vset.pattern.permute.xlu0 0
  %662 = vperm.xlu0 %661, %v623
  %v663 = vpop.permute.xlu0 %662
  %664 = vset.pattern.permute.xlu0 0
  %665 = vperm.xlu0 %664, %v624
  %v666 = vpop.permute.xlu0 %665
  %667 = vset.pattern.permute.xlu0 0
  %668 = vperm.xlu0 %667, %v625
  %v669 = vpop.permute.xlu0 %668
  %670 = vset.pattern.permute.xlu0 0
  %671 = vperm.xlu0 %670, %v626
  %v672 = vpop.permute.xlu0 %671
  %673 = vset.pattern.permute.xlu0 0
  %674 = vperm.xlu0 %673, %v627
  %v675 = vpop.permute.xlu0 %674
  %vm676 = vcmp.eq.s32.totalorder %v611, %v630
  %vm677 = vcmp.eq.s32.totalorder %v611, %v633
  %vm678 = vcmp.eq.s32.totalorder %v611, %v636
  %vm679 = vcmp.eq.s32.totalorder %v611, %v639
  %vm680 = vcmp.eq.s32.totalorder %v611, %v642
  %vm681 = vcmp.eq.s32.totalorder %v611, %v645
  %vm682 = vcmp.eq.s32.totalorder %v611, %v648
  %vm683 = vcmp.eq.s32.totalorder %v611, %v651
  %vm684 = vcmp.eq.s32.totalorder %v611, %v654
  %vm685 = vcmp.eq.s32.totalorder %v611, %v657
  %vm686 = vcmp.eq.s32.totalorder %v611, %v660
  %vm687 = vcmp.eq.s32.totalorder %v611, %v663
  %vm688 = vcmp.eq.s32.totalorder %v611, %v666
  %vm689 = vcmp.eq.s32.totalorder %v611, %v669
  %vm690 = vcmp.eq.s32.totalorder %v611, %v672
  %vm691 = vcmp.eq.s32.totalorder %v611, %v675
  %v692 = vsel %vm676, 1, 0
  %v693 = vsel %vm677, 1, 0
  %v694 = vsel %vm678, 1, 0
  %v695 = vsel %vm679, 1, 0
  %v696 = vsel %vm680, 1, 0
  %v697 = vsel %vm681, 1, 0
  %v698 = vsel %vm682, 1, 0
  %v699 = vsel %vm683, 1, 0
  %v700 = vsel %vm684, 1, 0
  %v701 = vsel %vm685, 1, 0
  %v702 = vsel %vm686, 1, 0
  %v703 = vsel %vm687, 1, 0
  %v704 = vsel %vm688, 1, 0
  %v705 = vsel %vm689, 1, 0
  %v706 = vsel %vm690, 1, 0
  %v707 = vsel %vm691, 1, 0
  %v708 = vcvt.s32.f32 %v692
  %v709 = vcvt.s32.f32 %v693
  %v710 = vcvt.s32.f32 %v694
  %v711 = vcvt.s32.f32 %v695
  %v712 = vcvt.s32.f32 %v696
  %v713 = vcvt.s32.f32 %v697
  %v714 = vcvt.s32.f32 %v698
  %v715 = vcvt.s32.f32 %v699
  %v716 = vcvt.s32.f32 %v700
  %v717 = vcvt.s32.f32 %v701
  %v718 = vcvt.s32.f32 %v702
  %v719 = vcvt.s32.f32 %v703
  %v720 = vcvt.s32.f32 %v704
  %v721 = vcvt.s32.f32 %v705
  %v722 = vcvt.s32.f32 %v706
  %v723 = vcvt.s32.f32 %v707
  %v724 = vld [vmem:[%s2] sm:$0xff]
  %v725 = vld [vmem:[%s2 + $0x8] sm:$0xff]
  %v726 = vld [vmem:[%s2 + $0x10] sm:$0xff]
  %v727 = vld [vmem:[%s2 + $0x18] sm:$0xff]
  %v728 = vld [vmem:[%s2 + $0x20] sm:$0xff]
  %v729 = vld [vmem:[%s2 + $0x28] sm:$0xff]
  %v730 = vld [vmem:[%s2 + $0x30] sm:$0xff]
  %v731 = vld [vmem:[%s2 + $0x38] sm:$0xff]
  %v732 = vld [vmem:[%s2 + $0x40] sm:$0xff]
  %v733 = vld [vmem:[%s2 + $0x48] sm:$0xff]
  %v734 = vld [vmem:[%s2 + $0x50] sm:$0xff]
  %v735 = vld [vmem:[%s2 + $0x58] sm:$0xff]
  %v736 = vld [vmem:[%s2 + $0x60] sm:$0xff]
  %v737 = vld [vmem:[%s2 + $0x68] sm:$0xff]
  %v738 = vld [vmem:[%s2 + $0x70] sm:$0xff]
  %v739 = vld [vmem:[%s2 + $0x78] sm:$0xff]
  %740 = vset.pattern.permute.xlu0 0
  %741 = vperm.xlu0 %740, %v724
  %v742 = vpop.permute.xlu0 %741
  %743 = vset.pattern.permute.xlu0 0
  %744 = vperm.xlu0 %743, %v725
  %v745 = vpop.permute.xlu0 %744
  %746 = vset.pattern.permute.xlu0 0
  %747 = vperm.xlu0 %746, %v726
  %v748 = vpop.permute.xlu0 %747
  %749 = vset.pattern.permute.xlu0 0
  %750 = vperm.xlu0 %749, %v727
  %v751 = vpop.permute.xlu0 %750
  %752 = vset.pattern.permute.xlu0 0
  %753 = vperm.xlu0 %752, %v728
  %v754 = vpop.permute.xlu0 %753
  %755 = vset.pattern.permute.xlu0 0
  %756 = vperm.xlu0 %755, %v729
  %v757 = vpop.permute.xlu0 %756
  %758 = vset.pattern.permute.xlu0 0
  %759 = vperm.xlu0 %758, %v730
  %v760 = vpop.permute.xlu0 %759
  %761 = vset.pattern.permute.xlu0 0
  %762 = vperm.xlu0 %761, %v731
  %v763 = vpop.permute.xlu0 %762
  %764 = vset.pattern.permute.xlu0 0
  %765 = vperm.xlu0 %764, %v732
  %v766 = vpop.permute.xlu0 %765
  %767 = vset.pattern.permute.xlu0 0
  %768 = vperm.xlu0 %767, %v733
  %v769 = vpop.permute.xlu0 %768
  %770 = vset.pattern.permute.xlu0 0
  %771 = vperm.xlu0 %770, %v734
  %v772 = vpop.permute.xlu0 %771
  %773 = vset.pattern.permute.xlu0 0
  %774 = vperm.xlu0 %773, %v735
  %v775 = vpop.permute.xlu0 %774
  %776 = vset.pattern.permute.xlu0 0
  %777 = vperm.xlu0 %776, %v736
  %v778 = vpop.permute.xlu0 %777
  %779 = vset.pattern.permute.xlu0 0
  %780 = vperm.xlu0 %779, %v737
  %v781 = vpop.permute.xlu0 %780
  %782 = vset.pattern.permute.xlu0 0
  %783 = vperm.xlu0 %782, %v738
  %v784 = vpop.permute.xlu0 %783
  %785 = vset.pattern.permute.xlu0 0
  %786 = vperm.xlu0 %785, %v739
  %v787 = vpop.permute.xlu0 %786
  %vm788 = vcmp.eq.s32.totalorder %v611, %v742
  %vm789 = vcmp.eq.s32.totalorder %v611, %v745
  %vm790 = vcmp.eq.s32.totalorder %v611, %v748
  %vm791 = vcmp.eq.s32.totalorder %v611, %v751
  %vm792 = vcmp.eq.s32.totalorder %v611, %v754
  %vm793 = vcmp.eq.s32.totalorder %v611, %v757
  %vm794 = vcmp.eq.s32.totalorder %v611, %v760
  %vm795 = vcmp.eq.s32.totalorder %v611, %v763
  %vm796 = vcmp.eq.s32.totalorder %v611, %v766
  %vm797 = vcmp.eq.s32.totalorder %v611, %v769
  %vm798 = vcmp.eq.s32.totalorder %v611, %v772
  %vm799 = vcmp.eq.s32.totalorder %v611, %v775
  %vm800 = vcmp.eq.s32.totalorder %v611, %v778
  %vm801 = vcmp.eq.s32.totalorder %v611, %v781
  %vm802 = vcmp.eq.s32.totalorder %v611, %v784
  %vm803 = vcmp.eq.s32.totalorder %v611, %v787
  %v804 = vsel %vm788, 1, 0
  %v805 = vsel %vm789, 1, 0
  %v806 = vsel %vm790, 1, 0
  %v807 = vsel %vm791, 1, 0
  %v808 = vsel %vm792, 1, 0
  %v809 = vsel %vm793, 1, 0
  %v810 = vsel %vm794, 1, 0
  %v811 = vsel %vm795, 1, 0
  %v812 = vsel %vm796, 1, 0
  %v813 = vsel %vm797, 1, 0
  %v814 = vsel %vm798, 1, 0
  %v815 = vsel %vm799, 1, 0
  %v816 = vsel %vm800, 1, 0
  %v817 = vsel %vm801, 1, 0
  %v818 = vsel %vm802, 1, 0
  %v819 = vsel %vm803, 1, 0
  %v820 = vcvt.s32.f32 %v804
  %v821 = vcvt.s32.f32 %v805
  %v822 = vcvt.s32.f32 %v806
  %v823 = vcvt.s32.f32 %v807
  %v824 = vcvt.s32.f32 %v808
  %v825 = vcvt.s32.f32 %v809
  %v826 = vcvt.s32.f32 %v810
  %v827 = vcvt.s32.f32 %v811
  %v828 = vcvt.s32.f32 %v812
  %v829 = vcvt.s32.f32 %v813
  %v830 = vcvt.s32.f32 %v814
  %v831 = vcvt.s32.f32 %v815
  %v832 = vcvt.s32.f32 %v816
  %v833 = vcvt.s32.f32 %v817
  %v834 = vcvt.s32.f32 %v818
  %v835 = vcvt.s32.f32 %v819
  %836 = vmatprep.subr.mxu0 0.0
  %837 = vmatpush1.msra.mxu0 %v594
  %838 = vmatprep.subr.mxu0 0.0
  %839 = vmatpush1.msra.mxu0 %v595
  %840 = vmatprep.subr.mxu0 0.0
  %841 = vmatpush1.msra.mxu0 %v596
  %842 = vmatprep.subr.mxu0 0.0
  %843 = vmatpush1.msra.mxu0 %v597
  %844 = vmatprep.subr.mxu0 0.0
  %845 = vmatpush1.msra.mxu0 %v598
  %846 = vmatprep.subr.mxu0 0.0
  %847 = vmatpush1.msra.mxu0 %v599
  %848 = vmatprep.subr.mxu0 0.0
  %849 = vmatpush1.msra.mxu0 %v600
  %850 = vmatprep.subr.mxu0 0.0
  %851 = vmatpush1.msra.mxu0 %v601
  %852 = vmatprep.subr.mxu0 0.0
  %853 = vmatpush1.msra.mxu0 %v602
  %854 = vmatprep.subr.mxu0 0.0
  %855 = vmatpush1.msra.mxu0 %v603
  %856 = vmatprep.subr.mxu0 0.0
  %857 = vmatpush1.msra.mxu0 %v604
  %858 = vmatprep.subr.mxu0 0.0
  %859 = vmatpush1.msra.mxu0 %v605
  %860 = vmatprep.subr.mxu0 0.0
  %861 = vmatpush1.msra.mxu0 %v606
  %862 = vmatprep.subr.mxu0 0.0
  %863 = vmatpush1.msra.mxu0 %v607
  %864 = vmatprep.subr.mxu0 0.0
  %865 = vmatpush1.msra.mxu0 %v608
  %866 = vmatprep.subr.mxu0 0.0
  %867 = vmatpush1.msra.mxu0 %v609
  %868 = vmatprep.subr.mxu0 0.0
  %869 = vmatpush1.msra.mxu0 0.0
  %870 = vmatprep.subr.mxu0 0.0
  %871 = vmatpush1.msra.mxu0 0.0
  %872 = vmatprep.subr.mxu0 0.0
  %873 = vmatpush1.msra.mxu0 0.0
  %874 = vmatprep.subr.mxu0 0.0
  %875 = vmatpush1.msra.mxu0 0.0
  %876 = vmatprep.subr.mxu0 0.0
  %877 = vmatpush1.msra.mxu0 0.0
  %878 = vmatprep.subr.mxu0 0.0
  %879 = vmatpush1.msra.mxu0 0.0
  %880 = vmatprep.subr.mxu0 0.0
  %881 = vmatpush1.msra.mxu0 0.0
  %882 = vmatprep.subr.mxu0 0.0
  %883 = vmatpush1.msra.mxu0 0.0
  %884 = vmatprep.subr.mxu0 0.0
  %885 = vmatpush1.msra.mxu0 0.0
  %886 = vmatprep.subr.mxu0 0.0
  %887 = vmatpush1.msra.mxu0 0.0
  %888 = vmatprep.subr.mxu0 0.0
  %889 = vmatpush1.msra.mxu0 0.0
  %890 = vmatprep.subr.mxu0 0.0
  %891 = vmatpush1.msra.mxu0 0.0
  %892 = vmatprep.subr.mxu0 0.0
  %893 = vmatpush1.msra.mxu0 0.0
  %894 = vmatprep.subr.mxu0 0.0
  %895 = vmatpush1.msra.mxu0 0.0
  %896 = vmatprep.subr.mxu0 0.0
  %897 = vmatpush1.msra.mxu0 0.0
  %898 = vmatprep.subr.mxu0 0.0
  %899 = vmatpush1.msra.mxu0 0.0
  %900 = vmatprep.mubr.f32.mxu0 0.0
  %901 = vmatmul.mubr.f32.gmra.mrb[0].mxu0 %v708
  %v902 = vpop.f32.mrb[0].mxu0
  %v903 = vadd.f32 0.0, %v902
  %v904 = vpop.f32.mrb[0].mxu0
  %905 = vmatprep.mubr.f32.mxu0 0.0
  %906 = vmatmul.mubr.f32.gmra.mrb[0].mxu0 %v709
  %v907 = vpop.f32.mrb[0].mxu0
  %v908 = vadd.f32 0.0, %v907
  %v909 = vpop.f32.mrb[0].mxu0
  %910 = vmatprep.mubr.f32.mxu0 0.0
  %911 = vmatmul.mubr.f32.gmra.mrb[0].mxu0 %v710
  %v912 = vpop.f32.mrb[0].mxu0
  %v913 = vadd.f32 0.0, %v912
  %v914 = vpop.f32.mrb[0].mxu0
  %915 = vmatprep.mubr.f32.mxu0 0.0
  %916 = vmatmul.mubr.f32.gmra.mrb[0].mxu0 %v711
  %v917 = vpop.f32.mrb[0].mxu0
  %v918 = vadd.f32 0.0, %v917
  %v919 = vpop.f32.mrb[0].mxu0
  %920 = vmatprep.mubr.f32.mxu0 0.0
  %921 = vmatmul.mubr.f32.gmra.mrb[0].mxu0 %v712
  %v922 = vpop.f32.mrb[0].mxu0
  %v923 = vadd.f32 0.0, %v922
  %v924 = vpop.f32.mrb[0].mxu0
  %925 = vmatprep.mubr.f32.mxu0 0.0
  %926 = vmatmul.mubr.f32.gmra.mrb[0].mxu0 %v713
  %v927 = vpop.f32.mrb[0].mxu0
  %v928 = vadd.f32 0.0, %v927
  %v929 = vpop.f32.mrb[0].mxu0
  %930 = vmatprep.mubr.f32.mxu0 0.0
  %931 = vmatmul.mubr.f32.gmra.mrb[0].mxu0 %v714
  %v932 = vpop.f32.mrb[0].mxu0
  %v933 = vadd.f32 0.0, %v932
  %v934 = vpop.f32.mrb[0].mxu0
  %935 = vmatprep.mubr.f32.mxu0 0.0
  %936 = vmatmul.mubr.f32.gmra.mrb[0].mxu0 %v715
  %v937 = vpop.f32.mrb[0].mxu0
  %v938 = vadd.f32 0.0, %v937
  %v939 = vpop.f32.mrb[0].mxu0
  %940 = vmatprep.mubr.f32.mxu0 0.0
  %941 = vmatmul.mubr.f32.gmra.mrb[0].mxu0 %v716
  %v942 = vpop.f32.mrb[0].mxu0
  %v943 = vadd.f32 0.0, %v942
  %v944 = vpop.f32.mrb[0].mxu0
  %945 = vmatprep.mubr.f32.mxu0 0.0
  %946 = vmatmul.mubr.f32.gmra.mrb[0].mxu0 %v717
  %v947 = vpop.f32.mrb[0].mxu0
  %v948 = vadd.f32 0.0, %v947
  %v949 = vpop.f32.mrb[0].mxu0
  %950 = vmatprep.mubr.f32.mxu0 0.0
  %951 = vmatmul.mubr.f32.gmra.mrb[0].mxu0 %v718
  %v952 = vpop.f32.mrb[0].mxu0
  %v953 = vadd.f32 0.0, %v952
  %v954 = vpop.f32.mrb[0].mxu0
  %955 = vmatprep.mubr.f32.mxu0 0.0
  %956 = vmatmul.mubr.f32.gmra.mrb[0].mxu0 %v719
  %v957 = vpop.f32.mrb[0].mxu0
  %v958 = vadd.f32 0.0, %v957
  %v959 = vpop.f32.mrb[0].mxu0
  %960 = vmatprep.mubr.f32.mxu0 0.0
  %961 = vmatmul.mubr.f32.gmra.mrb[0].mxu0 %v720
  %v962 = vpop.f32.mrb[0].mxu0
  %v963 = vadd.f32 0.0, %v962
  %v964 = vpop.f32.mrb[0].mxu0
  %965 = vmatprep.mubr.f32.mxu0 0.0
  %966 = vmatmul.mubr.f32.gmra.mrb[0].mxu0 %v721
  %v967 = vpop.f32.mrb[0].mxu0
  %v968 = vadd.f32 0.0, %v967
  %v969 = vpop.f32.mrb[0].mxu0
  %970 = vmatprep.mubr.f32.mxu0 0.0
  %971 = vmatmul.mubr.f32.gmra.mrb[0].mxu0 %v722
  %v972 = vpop.f32.mrb[0].mxu0
  %v973 = vadd.f32 0.0, %v972
  %v974 = vpop.f32.mrb[0].mxu0
  %975 = vmatprep.mubr.f32.mxu0 0.0
  %976 = vmatmul.mubr.f32.gmra.mrb[0].mxu0 %v723
  %v977 = vpop.f32.mrb[0].mxu0
  %v978 = vadd.f32 0.0, %v977
  %v979 = vpop.f32.mrb[0].mxu0
  %980 = vdwg.mxu0
  %981 = vmatprep.subr.mxu0 0.0
  %982 = vmatpush1.msra.mxu0 %v594
  %983 = vmatprep.subr.mxu0 0.0
  %984 = vmatpush1.msra.mxu0 %v595
  %985 = vmatprep.subr.mxu0 0.0
  %986 = vmatpush1.msra.mxu0 %v596
  %987 = vmatprep.subr.mxu0 0.0
  %988 = vmatpush1.msra.mxu0 %v597
  %989 = vmatprep.subr.mxu0 0.0
  %990 = vmatpush1.msra.mxu0 %v598
  %991 = vmatprep.subr.mxu0 0.0
  %992 = vmatpush1.msra.mxu0 %v599
  %993 = vmatprep.subr.mxu0 0.0
  %994 = vmatpush1.msra.mxu0 %v600
  %995 = vmatprep.subr.mxu0 0.0
  %996 = vmatpush1.msra.mxu0 %v601
  %997 = vmatprep.subr.mxu0 0.0
  %998 = vmatpush1.msra.mxu0 %v602
  %999 = vmatprep.subr.mxu0 0.0
  %1000 = vmatpush1.msra.mxu0 %v603
  %1001 = vmatprep.subr.mxu0 0.0
  %1002 = vmatpush1.msra.mxu0 %v604
  %1003 = vmatprep.subr.mxu0 0.0
  %1004 = vmatpush1.msra.mxu0 %v605
  %1005 = vmatprep.subr.mxu0 0.0
  %1006 = vmatpush1.msra.mxu0 %v606
  %1007 = vmatprep.subr.mxu0 0.0
  %1008 = vmatpush1.msra.mxu0 %v607
  %1009 = vmatprep.subr.mxu0 0.0
  %1010 = vmatpush1.msra.mxu0 %v608
  %1011 = vmatprep.subr.mxu0 0.0
  %1012 = vmatpush1.msra.mxu0 %v609
  %1013 = vmatprep.subr.mxu0 0.0
  %1014 = vmatpush1.msra.mxu0 0.0
  %1015 = vmatprep.subr.mxu0 0.0
  %1016 = vmatpush1.msra.mxu0 0.0
  %1017 = vmatprep.subr.mxu0 0.0
  %1018 = vmatpush1.msra.mxu0 0.0
  %1019 = vmatprep.subr.mxu0 0.0
  %1020 = vmatpush1.msra.mxu0 0.0
  %1021 = vmatprep.subr.mxu0 0.0
  %1022 = vmatpush1.msra.mxu0 0.0
  %1023 = vmatprep.subr.mxu0 0.0
  %1024 = vmatpush1.msra.mxu0 0.0
  %1025 = vmatprep.subr.mxu0 0.0
  %1026 = vmatpush1.msra.mxu0 0.0
  %1027 = vmatprep.subr.mxu0 0.0
  %1028 = vmatpush1.msra.mxu0 0.0
  %1029 = vmatprep.subr.mxu0 0.0
  %1030 = vmatpush1.msra.mxu0 0.0
  %1031 = vmatprep.subr.mxu0 0.0
  %1032 = vmatpush1.msra.mxu0 0.0
  %1033 = vmatprep.subr.mxu0 0.0
  %1034 = vmatpush1.msra.mxu0 0.0
  %1035 = vmatprep.subr.mxu0 0.0
  %1036 = vmatpush1.msra.mxu0 0.0
  %1037 = vmatprep.subr.mxu0 0.0
  %1038 = vmatpush1.msra.mxu0 0.0
  %1039 = vmatprep.subr.mxu0 0.0
  %1040 = vmatpush1.msra.mxu0 0.0
  %1041 = vmatprep.subr.mxu0 0.0
  %1042 = vmatpush1.msra.mxu0 0.0
  %1043 = vmatprep.subr.mxu0 0.0
  %1044 = vmatpush1.msra.mxu0 0.0
  %1045 = vmatprep.mubr.f32.mxu0 0.0
  %1046 = vmatmul.mubr.f32.gmra.mrb[0].mxu0 %v820
  %v1047 = vpop.f32.mrb[0].mxu0
  %v1048 = vadd.f32 0.0, %v1047
  %v1049 = vpop.f32.mrb[0].mxu0
  %1050 = vmatprep.mubr.f32.mxu0 0.0
  %1051 = vmatmul.mubr.f32.gmra.mrb[0].mxu0 %v821
  %v1052 = vpop.f32.mrb[0].mxu0
  %v1053 = vadd.f32 0.0, %v1052
  %v1054 = vpop.f32.mrb[0].mxu0
  %1055 = vmatprep.mubr.f32.mxu0 0.0
  %1056 = vmatmul.mubr.f32.gmra.mrb[0].mxu0 %v822
  %v1057 = vpop.f32.mrb[0].mxu0
  %v1058 = vadd.f32 0.0, %v1057
  %v1059 = vpop.f32.mrb[0].mxu0
  %1060 = vmatprep.mubr.f32.mxu0 0.0
  %1061 = vmatmul.mubr.f32.gmra.mrb[0].mxu0 %v823
  %v1062 = vpop.f32.mrb[0].mxu0
  %v1063 = vadd.f32 0.0, %v1062
  %v1064 = vpop.f32.mrb[0].mxu0
  %1065 = vmatprep.mubr.f32.mxu0 0.0
  %1066 = vmatmul.mubr.f32.gmra.mrb[0].mxu0 %v824
  %v1067 = vpop.f32.mrb[0].mxu0
  %v1068 = vadd.f32 0.0, %v1067
  %v1069 = vpop.f32.mrb[0].mxu0
  %1070 = vmatprep.mubr.f32.mxu0 0.0
  %1071 = vmatmul.mubr.f32.gmra.mrb[0].mxu0 %v825
  %v1072 = vpop.f32.mrb[0].mxu0
  %v1073 = vadd.f32 0.0, %v1072
  %v1074 = vpop.f32.mrb[0].mxu0
  %1075 = vmatprep.mubr.f32.mxu0 0.0
  %1076 = vmatmul.mubr.f32.gmra.mrb[0].mxu0 %v826
  %v1077 = vpop.f32.mrb[0].mxu0
  %v1078 = vadd.f32 0.0, %v1077
  %v1079 = vpop.f32.mrb[0].mxu0
  %1080 = vmatprep.mubr.f32.mxu0 0.0
  %1081 = vmatmul.mubr.f32.gmra.mrb[0].mxu0 %v827
  %v1082 = vpop.f32.mrb[0].mxu0
  %v1083 = vadd.f32 0.0, %v1082
  %v1084 = vpop.f32.mrb[0].mxu0
  %1085 = vmatprep.mubr.f32.mxu0 0.0
  %1086 = vmatmul.mubr.f32.gmra.mrb[0].mxu0 %v828
  %v1087 = vpop.f32.mrb[0].mxu0
  %v1088 = vadd.f32 0.0, %v1087
  %v1089 = vpop.f32.mrb[0].mxu0
  %1090 = vmatprep.mubr.f32.mxu0 0.0
  %1091 = vmatmul.mubr.f32.gmra.mrb[0].mxu0 %v829
  %v1092 = vpop.f32.mrb[0].mxu0
  %v1093 = vadd.f32 0.0, %v1092
  %v1094 = vpop.f32.mrb[0].mxu0
  %1095 = vmatprep.mubr.f32.mxu0 0.0
  %1096 = vmatmul.mubr.f32.gmra.mrb[0].mxu0 %v830
  %v1097 = vpop.f32.mrb[0].mxu0
  %v1098 = vadd.f32 0.0, %v1097
  %v1099 = vpop.f32.mrb[0].mxu0
  %1100 = vmatprep.mubr.f32.mxu0 0.0
  %1101 = vmatmul.mubr.f32.gmra.mrb[0].mxu0 %v831
  %v1102 = vpop.f32.mrb[0].mxu0
  %v1103 = vadd.f32 0.0, %v1102
  %v1104 = vpop.f32.mrb[0].mxu0
  %1105 = vmatprep.mubr.f32.mxu0 0.0
  %1106 = vmatmul.mubr.f32.gmra.mrb[0].mxu0 %v832
  %v1107 = vpop.f32.mrb[0].mxu0
  %v1108 = vadd.f32 0.0, %v1107
  %v1109 = vpop.f32.mrb[0].mxu0
  %1110 = vmatprep.mubr.f32.mxu0 0.0
  %1111 = vmatmul.mubr.f32.gmra.mrb[0].mxu0 %v833
  %v1112 = vpop.f32.mrb[0].mxu0
  %v1113 = vadd.f32 0.0, %v1112
  %v1114 = vpop.f32.mrb[0].mxu0
  %1115 = vmatprep.mubr.f32.mxu0 0.0
  %1116 = vmatmul.mubr.f32.gmra.mrb[0].mxu0 %v834
  %v1117 = vpop.f32.mrb[0].mxu0
  %v1118 = vadd.f32 0.0, %v1117
  %v1119 = vpop.f32.mrb[0].mxu0
  %1120 = vmatprep.mubr.f32.mxu0 0.0
  %1121 = vmatmul.mubr.f32.gmra.mrb[0].mxu0 %v835
  %v1122 = vpop.f32.mrb[0].mxu0
  %v1123 = vadd.f32 0.0, %v1122
  %v1124 = vpop.f32.mrb[0].mxu0
  %1125 = vdwg.mxu0
  %v1126 = vld [vmem:[%s9] sm:$0xff]
  %v1127 = vld [vmem:[%s9 + $0x8] sm:$0xff]
  %v1128 = vld [vmem:[%s9 + $0x10] sm:$0xff]
  %v1129 = vld [vmem:[%s9 + $0x18] sm:$0xff]
  %v1130 = vld [vmem:[%s9 + $0x20] sm:$0xff]
  %v1131 = vld [vmem:[%s9 + $0x28] sm:$0xff]
  %v1132 = vld [vmem:[%s9 + $0x30] sm:$0xff]
  %v1133 = vld [vmem:[%s9 + $0x38] sm:$0xff]
  %v1134 = vld [vmem:[%s9 + $0x40] sm:$0xff]
  %v1135 = vld [vmem:[%s9 + $0x48] sm:$0xff]
  %v1136 = vld [vmem:[%s9 + $0x50] sm:$0xff]
  %v1137 = vld [vmem:[%s9 + $0x58] sm:$0xff]
  %v1138 = vld [vmem:[%s9 + $0x60] sm:$0xff]
  %v1139 = vld [vmem:[%s9 + $0x68] sm:$0xff]
  %v1140 = vld [vmem:[%s9 + $0x70] sm:$0xff]
  %v1141 = vld [vmem:[%s9 + $0x78] sm:$0xff]
  %v1142 = vld [vmem:[%s10] sm:$0xff]
  %v1143 = vld [vmem:[%s10 + $0x8] sm:$0xff]
  %v1144 = vld [vmem:[%s10 + $0x10] sm:$0xff]
  %v1145 = vld [vmem:[%s10 + $0x18] sm:$0xff]
  %v1146 = vld [vmem:[%s10 + $0x20] sm:$0xff]
  %v1147 = vld [vmem:[%s10 + $0x28] sm:$0xff]
  %v1148 = vld [vmem:[%s10 + $0x30] sm:$0xff]
  %v1149 = vld [vmem:[%s10 + $0x38] sm:$0xff]
  %v1150 = vld [vmem:[%s10 + $0x40] sm:$0xff]
  %v1151 = vld [vmem:[%s10 + $0x48] sm:$0xff]
  %v1152 = vld [vmem:[%s10 + $0x50] sm:$0xff]
  %v1153 = vld [vmem:[%s10 + $0x58] sm:$0xff]
  %v1154 = vld [vmem:[%s10 + $0x60] sm:$0xff]
  %v1155 = vld [vmem:[%s10 + $0x68] sm:$0xff]
  %v1156 = vld [vmem:[%s10 + $0x70] sm:$0xff]
  %v1157 = vld [vmem:[%s10 + $0x78] sm:$0xff]
  %1158 = vmatprep.subr.mxu0 0.0
  %1159 = vmatpush1.msra.mxu0 %v1142
  %1160 = vmatprep.subr.mxu0 0.0
  %1161 = vmatpush1.msra.mxu0 %v1143
  %1162 = vmatprep.subr.mxu0 0.0
  %1163 = vmatpush1.msra.mxu0 %v1144
  %1164 = vmatprep.subr.mxu0 0.0
  %1165 = vmatpush1.msra.mxu0 %v1145
  %1166 = vmatprep.subr.mxu0 0.0
  %1167 = vmatpush1.msra.mxu0 %v1146
  %1168 = vmatprep.subr.mxu0 0.0
  %1169 = vmatpush1.msra.mxu0 %v1147
  %1170 = vmatprep.subr.mxu0 0.0
  %1171 = vmatpush1.msra.mxu0 %v1148
  %1172 = vmatprep.subr.mxu0 0.0
  %1173 = vmatpush1.msra.mxu0 %v1149
  %1174 = vmatprep.subr.mxu0 0.0
  %1175 = vmatpush1.msra.mxu0 %v1150
  %1176 = vmatprep.subr.mxu0 0.0
  %1177 = vmatpush1.msra.mxu0 %v1151
  %1178 = vmatprep.subr.mxu0 0.0
  %1179 = vmatpush1.msra.mxu0 %v1152
  %1180 = vmatprep.subr.mxu0 0.0
  %1181 = vmatpush1.msra.mxu0 %v1153
  %1182 = vmatprep.subr.mxu0 0.0
  %1183 = vmatpush1.msra.mxu0 %v1154
  %1184 = vmatprep.subr.mxu0 0.0
  %1185 = vmatpush1.msra.mxu0 %v1155
  %1186 = vmatprep.subr.mxu0 0.0
  %1187 = vmatpush1.msra.mxu0 %v1156
  %1188 = vmatprep.subr.mxu0 0.0
  %1189 = vmatpush1.msra.mxu0 %v1157
  %1190 = vmatprep.subr.mxu0 0.0
  %1191 = vmatpush1.msra.mxu0 0.0
  %1192 = vmatprep.subr.mxu0 0.0
  %1193 = vmatpush1.msra.mxu0 0.0
  %1194 = vmatprep.subr.mxu0 0.0
  %1195 = vmatpush1.msra.mxu0 0.0
  %1196 = vmatprep.subr.mxu0 0.0
  %1197 = vmatpush1.msra.mxu0 0.0
  %1198 = vmatprep.subr.mxu0 0.0
  %1199 = vmatpush1.msra.mxu0 0.0
  %1200 = vmatprep.subr.mxu0 0.0
  %1201 = vmatpush1.msra.mxu0 0.0
  %1202 = vmatprep.subr.mxu0 0.0
  %1203 = vmatpush1.msra.mxu0 0.0
  %1204 = vmatprep.subr.mxu0 0.0
  %1205 = vmatpush1.msra.mxu0 0.0
  %1206 = vmatprep.subr.mxu0 0.0
  %1207 = vmatpush1.msra.mxu0 0.0
  %1208 = vmatprep.subr.mxu0 0.0
  %1209 = vmatpush1.msra.mxu0 0.0
  %1210 = vmatprep.subr.mxu0 0.0
  %1211 = vmatpush1.msra.mxu0 0.0
  %1212 = vmatprep.subr.mxu0 0.0
  %1213 = vmatpush1.msra.mxu0 0.0
  %1214 = vmatprep.subr.mxu0 0.0
  %1215 = vmatpush1.msra.mxu0 0.0
  %1216 = vmatprep.subr.mxu0 0.0
  %1217 = vmatpush1.msra.mxu0 0.0
  %1218 = vmatprep.subr.mxu0 0.0
  %1219 = vmatpush1.msra.mxu0 0.0
  %1220 = vmatprep.subr.mxu0 0.0
  %1221 = vmatpush1.msra.mxu0 0.0
  %1222 = vmatprep.mubr.f32.mxu0 0.0
  %1223 = vmatmul.mubr.f32.gmra.mrb[0].mxu0 %v1048
  %v1224 = vpop.f32.mrb[0].mxu0
  %v1225 = vadd.f32 0.0, %v1224
  %v1226 = vpop.f32.mrb[0].mxu0
  %1227 = vmatprep.mubr.f32.mxu0 0.0
  %1228 = vmatmul.mubr.f32.gmra.mrb[0].mxu0 %v1053
  %v1229 = vpop.f32.mrb[0].mxu0
  %v1230 = vadd.f32 0.0, %v1229
  %v1231 = vpop.f32.mrb[0].mxu0
  %1232 = vmatprep.mubr.f32.mxu0 0.0
  %1233 = vmatmul.mubr.f32.gmra.mrb[0].mxu0 %v1058
  %v1234 = vpop.f32.mrb[0].mxu0
  %v1235 = vadd.f32 0.0, %v1234
  %v1236 = vpop.f32.mrb[0].mxu0
  %1237 = vmatprep.mubr.f32.mxu0 0.0
  %1238 = vmatmul.mubr.f32.gmra.mrb[0].mxu0 %v1063
  %v1239 = vpop.f32.mrb[0].mxu0
  %v1240 = vadd.f32 0.0, %v1239
  %v1241 = vpop.f32.mrb[0].mxu0
  %1242 = vmatprep.mubr.f32.mxu0 0.0
  %1243 = vmatmul.mubr.f32.gmra.mrb[0].mxu0 %v1068
  %v1244 = vpop.f32.mrb[0].mxu0
  %v1245 = vadd.f32 0.0, %v1244
  %v1246 = vpop.f32.mrb[0].mxu0
  %1247 = vmatprep.mubr.f32.mxu0 0.0
  %1248 = vmatmul.mubr.f32.gmra.mrb[0].mxu0 %v1073
  %v1249 = vpop.f32.mrb[0].mxu0
  %v1250 = vadd.f32 0.0, %v1249
  %v1251 = vpop.f32.mrb[0].mxu0
  %1252 = vmatprep.mubr.f32.mxu0 0.0
  %1253 = vmatmul.mubr.f32.gmra.mrb[0].mxu0 %v1078
  %v1254 = vpop.f32.mrb[0].mxu0
  %v1255 = vadd.f32 0.0, %v1254
  %v1256 = vpop.f32.mrb[0].mxu0
  %1257 = vmatprep.mubr.f32.mxu0 0.0
  %1258 = vmatmul.mubr.f32.gmra.mrb[0].mxu0 %v1083
  %v1259 = vpop.f32.mrb[0].mxu0
  %v1260 = vadd.f32 0.0, %v1259
  %v1261 = vpop.f32.mrb[0].mxu0
  %1262 = vmatprep.mubr.f32.mxu0 0.0
  %1263 = vmatmul.mubr.f32.gmra.mrb[0].mxu0 %v1088
  %v1264 = vpop.f32.mrb[0].mxu0
  %v1265 = vadd.f32 0.0, %v1264
  %v1266 = vpop.f32.mrb[0].mxu0
  %1267 = vmatprep.mubr.f32.mxu0 0.0
  %1268 = vmatmul.mubr.f32.gmra.mrb[0].mxu0 %v1093
  %v1269 = vpop.f32.mrb[0].mxu0
  %v1270 = vadd.f32 0.0, %v1269
  %v1271 = vpop.f32.mrb[0].mxu0
  %1272 = vmatprep.mubr.f32.mxu0 0.0
  %1273 = vmatmul.mubr.f32.gmra.mrb[0].mxu0 %v1098
  %v1274 = vpop.f32.mrb[0].mxu0
  %v1275 = vadd.f32 0.0, %v1274
  %v1276 = vpop.f32.mrb[0].mxu0
  %1277 = vmatprep.mubr.f32.mxu0 0.0
  %1278 = vmatmul.mubr.f32.gmra.mrb[0].mxu0 %v1103
  %v1279 = vpop.f32.mrb[0].mxu0
  %v1280 = vadd.f32 0.0, %v1279
  %v1281 = vpop.f32.mrb[0].mxu0
  %1282 = vmatprep.mubr.f32.mxu0 0.0
  %1283 = vmatmul.mubr.f32.gmra.mrb[0].mxu0 %v1108
  %v1284 = vpop.f32.mrb[0].mxu0
  %v1285 = vadd.f32 0.0, %v1284
  %v1286 = vpop.f32.mrb[0].mxu0
  %1287 = vmatprep.mubr.f32.mxu0 0.0
  %1288 = vmatmul.mubr.f32.gmra.mrb[0].mxu0 %v1113
  %v1289 = vpop.f32.mrb[0].mxu0
  %v1290 = vadd.f32 0.0, %v1289
  %v1291 = vpop.f32.mrb[0].mxu0
  %1292 = vmatprep.mubr.f32.mxu0 0.0
  %1293 = vmatmul.mubr.f32.gmra.mrb[0].mxu0 %v1118
  %v1294 = vpop.f32.mrb[0].mxu0
  %v1295 = vadd.f32 0.0, %v1294
  %v1296 = vpop.f32.mrb[0].mxu0
  %1297 = vmatprep.mubr.f32.mxu0 0.0
  %1298 = vmatmul.mubr.f32.gmra.mrb[0].mxu0 %v1123
  %v1299 = vpop.f32.mrb[0].mxu0
  %v1300 = vadd.f32 0.0, %v1299
  %v1301 = vpop.f32.mrb[0].mxu0
  %1302 = vdwg.mxu0
  %1303 = vmatprep.subr.mxu0 0.0
  %1304 = vmatpush1.msra.mxu0 %v1126
  %1305 = vmatprep.subr.mxu0 0.0
  %1306 = vmatpush1.msra.mxu0 %v1127
  %1307 = vmatprep.subr.mxu0 0.0
  %1308 = vmatpush1.msra.mxu0 %v1128
  %1309 = vmatprep.subr.mxu0 0.0
  %1310 = vmatpush1.msra.mxu0 %v1129
  %1311 = vmatprep.subr.mxu0 0.0
  %1312 = vmatpush1.msra.mxu0 %v1130
  %1313 = vmatprep.subr.mxu0 0.0
  %1314 = vmatpush1.msra.mxu0 %v1131
  %1315 = vmatprep.subr.mxu0 0.0
  %1316 = vmatpush1.msra.mxu0 %v1132
  %1317 = vmatprep.subr.mxu0 0.0
  %1318 = vmatpush1.msra.mxu0 %v1133
  %1319 = vmatprep.subr.mxu0 0.0
  %1320 = vmatpush1.msra.mxu0 %v1134
  %1321 = vmatprep.subr.mxu0 0.0
  %1322 = vmatpush1.msra.mxu0 %v1135
  %1323 = vmatprep.subr.mxu0 0.0
  %1324 = vmatpush1.msra.mxu0 %v1136
  %1325 = vmatprep.subr.mxu0 0.0
  %1326 = vmatpush1.msra.mxu0 %v1137
  %1327 = vmatprep.subr.mxu0 0.0
  %1328 = vmatpush1.msra.mxu0 %v1138
  %1329 = vmatprep.subr.mxu0 0.0
  %1330 = vmatpush1.msra.mxu0 %v1139
  %1331 = vmatprep.subr.mxu0 0.0
  %1332 = vmatpush1.msra.mxu0 %v1140
  %1333 = vmatprep.subr.mxu0 0.0
  %1334 = vmatpush1.msra.mxu0 %v1141
  %1335 = vmatprep.subr.mxu0 0.0
  %1336 = vmatpush1.msra.mxu0 0.0
  %1337 = vmatprep.subr.mxu0 0.0
  %1338 = vmatpush1.msra.mxu0 0.0
  %1339 = vmatprep.subr.mxu0 0.0
  %1340 = vmatpush1.msra.mxu0 0.0
  %1341 = vmatprep.subr.mxu0 0.0
  %1342 = vmatpush1.msra.mxu0 0.0
  %1343 = vmatprep.subr.mxu0 0.0
  %1344 = vmatpush1.msra.mxu0 0.0
  %1345 = vmatprep.subr.mxu0 0.0
  %1346 = vmatpush1.msra.mxu0 0.0
  %1347 = vmatprep.subr.mxu0 0.0
  %1348 = vmatpush1.msra.mxu0 0.0
  %1349 = vmatprep.subr.mxu0 0.0
  %1350 = vmatpush1.msra.mxu0 0.0
  %1351 = vmatprep.subr.mxu0 0.0
  %1352 = vmatpush1.msra.mxu0 0.0
  %1353 = vmatprep.subr.mxu0 0.0
  %1354 = vmatpush1.msra.mxu0 0.0
  %1355 = vmatprep.subr.mxu0 0.0
  %1356 = vmatpush1.msra.mxu0 0.0
  %1357 = vmatprep.subr.mxu0 0.0
  %1358 = vmatpush1.msra.mxu0 0.0
  %1359 = vmatprep.subr.mxu0 0.0
  %1360 = vmatpush1.msra.mxu0 0.0
  %1361 = vmatprep.subr.mxu0 0.0
  %1362 = vmatpush1.msra.mxu0 0.0
  %1363 = vmatprep.subr.mxu0 0.0
  %1364 = vmatpush1.msra.mxu0 0.0
  %1365 = vmatprep.subr.mxu0 0.0
  %1366 = vmatpush1.msra.mxu0 0.0
  %1367 = vmatprep.mubr.f32.mxu0 0.0
  %1368 = vmatmul.mubr.f32.gmra.mrb[0].mxu0 %v903
  %v1369 = vpop.f32.mrb[0].mxu0
  %v1370 = vadd.f32 %v1225, %v1369
  %v1371 = vpop.f32.mrb[0].mxu0
  %1372 = vmatprep.mubr.f32.mxu0 0.0
  %1373 = vmatmul.mubr.f32.gmra.mrb[0].mxu0 %v908
  %v1374 = vpop.f32.mrb[0].mxu0
  %v1375 = vadd.f32 %v1230, %v1374
  %v1376 = vpop.f32.mrb[0].mxu0
  %1377 = vmatprep.mubr.f32.mxu0 0.0
  %1378 = vmatmul.mubr.f32.gmra.mrb[0].mxu0 %v913
  %v1379 = vpop.f32.mrb[0].mxu0
  %v1380 = vadd.f32 %v1235, %v1379
  %v1381 = vpop.f32.mrb[0].mxu0
  %1382 = vmatprep.mubr.f32.mxu0 0.0
  %1383 = vmatmul.mubr.f32.gmra.mrb[0].mxu0 %v918
  %v1384 = vpop.f32.mrb[0].mxu0
  %v1385 = vadd.f32 %v1240, %v1384
  %v1386 = vpop.f32.mrb[0].mxu0
  %1387 = vmatprep.mubr.f32.mxu0 0.0
  %1388 = vmatmul.mubr.f32.gmra.mrb[0].mxu0 %v923
  %v1389 = vpop.f32.mrb[0].mxu0
  %v1390 = vadd.f32 %v1245, %v1389
  %v1391 = vpop.f32.mrb[0].mxu0
  %1392 = vmatprep.mubr.f32.mxu0 0.0
  %1393 = vmatmul.mubr.f32.gmra.mrb[0].mxu0 %v928
  %v1394 = vpop.f32.mrb[0].mxu0
  %v1395 = vadd.f32 %v1250, %v1394
  %v1396 = vpop.f32.mrb[0].mxu0
  %1397 = vmatprep.mubr.f32.mxu0 0.0
  %1398 = vmatmul.mubr.f32.gmra.mrb[0].mxu0 %v933
  %v1399 = vpop.f32.mrb[0].mxu0
  %v1400 = vadd.f32 %v1255, %v1399
  %v1401 = vpop.f32.mrb[0].mxu0
  %1402 = vmatprep.mubr.f32.mxu0 0.0
  %1403 = vmatmul.mubr.f32.gmra.mrb[0].mxu0 %v938
  %v1404 = vpop.f32.mrb[0].mxu0
  %v1405 = vadd.f32 %v1260, %v1404
  %v1406 = vpop.f32.mrb[0].mxu0
  %1407 = vmatprep.mubr.f32.mxu0 0.0
  %1408 = vmatmul.mubr.f32.gmra.mrb[0].mxu0 %v943
  %v1409 = vpop.f32.mrb[0].mxu0
  %v1410 = vadd.f32 %v1265, %v1409
  %v1411 = vpop.f32.mrb[0].mxu0
  %1412 = vmatprep.mubr.f32.mxu0 0.0
  %1413 = vmatmul.mubr.f32.gmra.mrb[0].mxu0 %v948
  %v1414 = vpop.f32.mrb[0].mxu0
  %v1415 = vadd.f32 %v1270, %v1414
  %v1416 = vpop.f32.mrb[0].mxu0
  %1417 = vmatprep.mubr.f32.mxu0 0.0
  %1418 = vmatmul.mubr.f32.gmra.mrb[0].mxu0 %v953
  %v1419 = vpop.f32.mrb[0].mxu0
  %v1420 = vadd.f32 %v1275, %v1419
  %v1421 = vpop.f32.mrb[0].mxu0
  %1422 = vmatprep.mubr.f32.mxu0 0.0
  %1423 = vmatmul.mubr.f32.gmra.mrb[0].mxu0 %v958
  %v1424 = vpop.f32.mrb[0].mxu0
  %v1425 = vadd.f32 %v1280, %v1424
  %v1426 = vpop.f32.mrb[0].mxu0
  %1427 = vmatprep.mubr.f32.mxu0 0.0
  %1428 = vmatmul.mubr.f32.gmra.mrb[0].mxu0 %v963
  %v1429 = vpop.f32.mrb[0].mxu0
  %v1430 = vadd.f32 %v1285, %v1429
  %v1431 = vpop.f32.mrb[0].mxu0
  %1432 = vmatprep.mubr.f32.mxu0 0.0
  %1433 = vmatmul.mubr.f32.gmra.mrb[0].mxu0 %v968
  %v1434 = vpop.f32.mrb[0].mxu0
  %v1435 = vadd.f32 %v1290, %v1434
  %v1436 = vpop.f32.mrb[0].mxu0
  %1437 = vmatprep.mubr.f32.mxu0 0.0
  %1438 = vmatmul.mubr.f32.gmra.mrb[0].mxu0 %v973
  %v1439 = vpop.f32.mrb[0].mxu0
  %v1440 = vadd.f32 %v1295, %v1439
  %v1441 = vpop.f32.mrb[0].mxu0
  %1442 = vmatprep.mubr.f32.mxu0 0.0
  %1443 = vmatmul.mubr.f32.gmra.mrb[0].mxu0 %v978
  %v1444 = vpop.f32.mrb[0].mxu0
  %v1445 = vadd.f32 %v1300, %v1444
  %v1446 = vpop.f32.mrb[0].mxu0
  %1447 = vdwg.mxu0
  %v1448 = vld [vmem:[%s11] sm:$0xff]
  %v1449 = vld [vmem:[%s11 + $0x8] sm:$0xff]
  %v1450 = vld [vmem:[%s11 + $0x10] sm:$0xff]
  %v1451 = vld [vmem:[%s11 + $0x18] sm:$0xff]
  %v1452 = vld [vmem:[%s11 + $0x20] sm:$0xff]
  %v1453 = vld [vmem:[%s11 + $0x28] sm:$0xff]
  %v1454 = vld [vmem:[%s11 + $0x30] sm:$0xff]
  %v1455 = vld [vmem:[%s11 + $0x38] sm:$0xff]
  %vm1456 = vcmask 523264
  %v1458 = vsel %vm1456, %v578, 0
  %v1461 = vsel %vm1456, %v579, 0
  %v1464 = vsel %vm1456, %v580, 0
  %v1467 = vsel %vm1456, %v581, 0
  %v1470 = vsel %vm1456, %v582, 0
  %v1473 = vsel %vm1456, %v583, 0
  %v1476 = vsel %vm1456, %v584, 0
  %v1479 = vsel %vm1456, %v585, 0
  %v1482 = vsel %vm1456, %v586, 0
  %v1485 = vsel %vm1456, %v587, 0
  %v1488 = vsel %vm1456, %v588, 0
  %v1491 = vsel %vm1456, %v589, 0
  %v1494 = vsel %vm1456, %v590, 0
  %v1497 = vsel %vm1456, %v591, 0
  %v1500 = vsel %vm1456, %v592, 0
  %v1503 = vsel %vm1456, %v593, 0
  %1505 = vmatprep.subr.mxu0 0.0
  %1506 = vmatpush1.msra.mxu0 %v1448
  %1507 = vmatprep.subr.mxu0 0.0
  %1508 = vmatpush1.msra.mxu0 %v1449
  %1509 = vmatprep.subr.mxu0 0.0
  %1510 = vmatpush1.msra.mxu0 %v1450
  %1511 = vmatprep.subr.mxu0 0.0
  %1512 = vmatpush1.msra.mxu0 %v1451
  %1513 = vmatprep.subr.mxu0 0.0
  %1514 = vmatpush1.msra.mxu0 %v1452
  %1515 = vmatprep.subr.mxu0 0.0
  %1516 = vmatpush1.msra.mxu0 %v1453
  %1517 = vmatprep.subr.mxu0 0.0
  %1518 = vmatpush1.msra.mxu0 %v1454
  %1519 = vmatprep.subr.mxu0 0.0
  %1520 = vmatpush1.msra.mxu0 %v1455
  %1521 = vmatprep.subr.mxu0 0.0
  %1522 = vmatpush1.msra.mxu0 0.0
  %1523 = vmatprep.subr.mxu0 0.0
  %1524 = vmatpush1.msra.mxu0 0.0
  %1525 = vmatprep.subr.mxu0 0.0
  %1526 = vmatpush1.msra.mxu0 0.0
  %1527 = vmatprep.subr.mxu0 0.0
  %1528 = vmatpush1.msra.mxu0 0.0
  %1529 = vmatprep.subr.mxu0 0.0
  %1530 = vmatpush1.msra.mxu0 0.0
  %1531 = vmatprep.subr.mxu0 0.0
  %1532 = vmatpush1.msra.mxu0 0.0
  %1533 = vmatprep.subr.mxu0 0.0
  %1534 = vmatpush1.msra.mxu0 0.0
  %1535 = vmatprep.subr.mxu0 0.0
  %1536 = vmatpush1.msra.mxu0 0.0
  %1537 = vmatprep.subr.mxu0 0.0
  %1538 = vmatpush1.msra.mxu0 0.0
  %1539 = vmatprep.subr.mxu0 0.0
  %1540 = vmatpush1.msra.mxu0 0.0
  %1541 = vmatprep.subr.mxu0 0.0
  %1542 = vmatpush1.msra.mxu0 0.0
  %1543 = vmatprep.subr.mxu0 0.0
  %1544 = vmatpush1.msra.mxu0 0.0
  %1545 = vmatprep.subr.mxu0 0.0
  %1546 = vmatpush1.msra.mxu0 0.0
  %1547 = vmatprep.subr.mxu0 0.0
  %1548 = vmatpush1.msra.mxu0 0.0
  %1549 = vmatprep.subr.mxu0 0.0
  %1550 = vmatpush1.msra.mxu0 0.0
  %1551 = vmatprep.subr.mxu0 0.0
  %1552 = vmatpush1.msra.mxu0 0.0
  %1553 = vmatprep.subr.mxu0 0.0
  %1554 = vmatpush1.msra.mxu0 0.0
  %1555 = vmatprep.subr.mxu0 0.0
  %1556 = vmatpush1.msra.mxu0 0.0
  %1557 = vmatprep.subr.mxu0 0.0
  %1558 = vmatpush1.msra.mxu0 0.0
  %1559 = vmatprep.subr.mxu0 0.0
  %1560 = vmatpush1.msra.mxu0 0.0
  %1561 = vmatprep.subr.mxu0 0.0
  %1562 = vmatpush1.msra.mxu0 0.0
  %1563 = vmatprep.subr.mxu0 0.0
  %1564 = vmatpush1.msra.mxu0 0.0
  %1565 = vmatprep.subr.mxu0 0.0
  %1566 = vmatpush1.msra.mxu0 0.0
  %1567 = vmatprep.subr.mxu0 0.0
  %1568 = vmatpush1.msra.mxu0 0.0
  %1569 = vmatprep.mubr.f32.mxu0 0.0
  %1570 = vmatmul.mubr.f32.gmra.mrb[0].mxu0 %v1458
  %v1571 = vpop.f32.mrb[0].mxu0
  %v1572 = vadd.f32 0.0, %v1571
  %v1573 = vpop.f32.mrb[0].mxu0
  %1574 = vmatprep.mubr.f32.mxu0 0.0
  %1575 = vmatmul.mubr.f32.gmra.mrb[0].mxu0 %v1461
  %v1576 = vpop.f32.mrb[0].mxu0
  %v1577 = vadd.f32 0.0, %v1576
  %v1578 = vpop.f32.mrb[0].mxu0
  %1579 = vmatprep.mubr.f32.mxu0 0.0
  %1580 = vmatmul.mubr.f32.gmra.mrb[0].mxu0 %v1464
  %v1581 = vpop.f32.mrb[0].mxu0
  %v1582 = vadd.f32 0.0, %v1581
  %v1583 = vpop.f32.mrb[0].mxu0
  %1584 = vmatprep.mubr.f32.mxu0 0.0
  %1585 = vmatmul.mubr.f32.gmra.mrb[0].mxu0 %v1467
  %v1586 = vpop.f32.mrb[0].mxu0
  %v1587 = vadd.f32 0.0, %v1586
  %v1588 = vpop.f32.mrb[0].mxu0
  %1589 = vmatprep.mubr.f32.mxu0 0.0
  %1590 = vmatmul.mubr.f32.gmra.mrb[0].mxu0 %v1470
  %v1591 = vpop.f32.mrb[0].mxu0
  %v1592 = vadd.f32 0.0, %v1591
  %v1593 = vpop.f32.mrb[0].mxu0
  %1594 = vmatprep.mubr.f32.mxu0 0.0
  %1595 = vmatmul.mubr.f32.gmra.mrb[0].mxu0 %v1473
  %v1596 = vpop.f32.mrb[0].mxu0
  %v1597 = vadd.f32 0.0, %v1596
  %v1598 = vpop.f32.mrb[0].mxu0
  %1599 = vmatprep.mubr.f32.mxu0 0.0
  %1600 = vmatmul.mubr.f32.gmra.mrb[0].mxu0 %v1476
  %v1601 = vpop.f32.mrb[0].mxu0
  %v1602 = vadd.f32 0.0, %v1601
  %v1603 = vpop.f32.mrb[0].mxu0
  %1604 = vmatprep.mubr.f32.mxu0 0.0
  %1605 = vmatmul.mubr.f32.gmra.mrb[0].mxu0 %v1479
  %v1606 = vpop.f32.mrb[0].mxu0
  %v1607 = vadd.f32 0.0, %v1606
  %v1608 = vpop.f32.mrb[0].mxu0
  %1609 = vmatprep.mubr.f32.mxu0 0.0
  %1610 = vmatmul.mubr.f32.gmra.mrb[0].mxu0 %v1482
  %v1611 = vpop.f32.mrb[0].mxu0
  %v1612 = vadd.f32 0.0, %v1611
  %v1613 = vpop.f32.mrb[0].mxu0
  %1614 = vmatprep.mubr.f32.mxu0 0.0
  %1615 = vmatmul.mubr.f32.gmra.mrb[0].mxu0 %v1485
  %v1616 = vpop.f32.mrb[0].mxu0
  %v1617 = vadd.f32 0.0, %v1616
  %v1618 = vpop.f32.mrb[0].mxu0
  %1619 = vmatprep.mubr.f32.mxu0 0.0
  %1620 = vmatmul.mubr.f32.gmra.mrb[0].mxu0 %v1488
  %v1621 = vpop.f32.mrb[0].mxu0
  %v1622 = vadd.f32 0.0, %v1621
  %v1623 = vpop.f32.mrb[0].mxu0
  %1624 = vmatprep.mubr.f32.mxu0 0.0
  %1625 = vmatmul.mubr.f32.gmra.mrb[0].mxu0 %v1491
  %v1626 = vpop.f32.mrb[0].mxu0
  %v1627 = vadd.f32 0.0, %v1626
  %v1628 = vpop.f32.mrb[0].mxu0
  %1629 = vmatprep.mubr.f32.mxu0 0.0
  %1630 = vmatmul.mubr.f32.gmra.mrb[0].mxu0 %v1494
  %v1631 = vpop.f32.mrb[0].mxu0
  %v1632 = vadd.f32 0.0, %v1631
  %v1633 = vpop.f32.mrb[0].mxu0
  %1634 = vmatprep.mubr.f32.mxu0 0.0
  %1635 = vmatmul.mubr.f32.gmra.mrb[0].mxu0 %v1497
  %v1636 = vpop.f32.mrb[0].mxu0
  %v1637 = vadd.f32 0.0, %v1636
  %v1638 = vpop.f32.mrb[0].mxu0
  %1639 = vmatprep.mubr.f32.mxu0 0.0
  %1640 = vmatmul.mubr.f32.gmra.mrb[0].mxu0 %v1500
  %v1641 = vpop.f32.mrb[0].mxu0
  %v1642 = vadd.f32 0.0, %v1641
  %v1643 = vpop.f32.mrb[0].mxu0
  %1644 = vmatprep.mubr.f32.mxu0 0.0
  %1645 = vmatmul.mubr.f32.gmra.mrb[0].mxu0 %v1503
  %v1646 = vpop.f32.mrb[0].mxu0
  %v1647 = vadd.f32 0.0, %v1646
  %v1648 = vpop.f32.mrb[0].mxu0
  %1649 = vdwg.mxu0
  %v1650 = vadd.f32 %v1370, %v1572
  %v1651 = vadd.f32 %v1375, %v1577
  %v1652 = vadd.f32 %v1380, %v1582
  %v1653 = vadd.f32 %v1385, %v1587
  %v1654 = vadd.f32 %v1390, %v1592
  %v1655 = vadd.f32 %v1395, %v1597
  %v1656 = vadd.f32 %v1400, %v1602
  %v1657 = vadd.f32 %v1405, %v1607
  %v1658 = vadd.f32 %v1410, %v1612
  %v1659 = vadd.f32 %v1415, %v1617
  %v1660 = vadd.f32 %v1420, %v1622
  %v1661 = vadd.f32 %v1425, %v1627
  %v1662 = vadd.f32 %v1430, %v1632
  %v1663 = vadd.f32 %v1435, %v1637
  %v1664 = vadd.f32 %v1440, %v1642
  %v1665 = vadd.f32 %v1445, %v1647
  %v1666 = vld [vmem:[%s12] sm:$0x1]
  %v1668 = vlaneseq
  %v1669 = vshrl.u32 %v1668, 7
  %v1670 = vsub.s32 0, %v1669
  %v1671 = vrot.slane %v1666, %v1670
  %v1673 = vadd.f32 %v1650, %v1671
  %v1674 = vadd.f32 %v1651, %v1671
  %v1675 = vadd.f32 %v1652, %v1671
  %v1676 = vadd.f32 %v1653, %v1671
  %v1677 = vadd.f32 %v1654, %v1671
  %v1678 = vadd.f32 %v1655, %v1671
  %v1679 = vadd.f32 %v1656, %v1671
  %v1680 = vadd.f32 %v1657, %v1671
  %v1681 = vadd.f32 %v1658, %v1671
  %v1682 = vadd.f32 %v1659, %v1671
  %v1683 = vadd.f32 %v1660, %v1671
  %v1684 = vadd.f32 %v1661, %v1671
  %v1685 = vadd.f32 %v1662, %v1671
  %v1686 = vadd.f32 %v1663, %v1671
  %v1687 = vadd.f32 %v1664, %v1671
  %v1688 = vadd.f32 %v1665, %v1671
  %vm1689 = vcmp.gt.f32.partialorder %v1673, 0.0
  %vm1690 = vcmp.gt.f32.partialorder %v1674, 0.0
  %vm1691 = vcmp.gt.f32.partialorder %v1675, 0.0
  %vm1692 = vcmp.gt.f32.partialorder %v1676, 0.0
  %vm1693 = vcmp.gt.f32.partialorder %v1677, 0.0
  %vm1694 = vcmp.gt.f32.partialorder %v1678, 0.0
  %vm1695 = vcmp.gt.f32.partialorder %v1679, 0.0
  %vm1696 = vcmp.gt.f32.partialorder %v1680, 0.0
  %vm1697 = vcmp.gt.f32.partialorder %v1681, 0.0
  %vm1698 = vcmp.gt.f32.partialorder %v1682, 0.0
  %vm1699 = vcmp.gt.f32.partialorder %v1683, 0.0
  %vm1700 = vcmp.gt.f32.partialorder %v1684, 0.0
  %vm1701 = vcmp.gt.f32.partialorder %v1685, 0.0
  %vm1702 = vcmp.gt.f32.partialorder %v1686, 0.0
  %vm1703 = vcmp.gt.f32.partialorder %v1687, 0.0
  %vm1704 = vcmp.gt.f32.partialorder %v1688, 0.0
  %v1705 = vmul.f32 %v1673, 0.01
  %v1706 = vmul.f32 %v1674, 0.01
  %v1707 = vmul.f32 %v1675, 0.01
  %v1708 = vmul.f32 %v1676, 0.01
  %v1709 = vmul.f32 %v1677, 0.01
  %v1710 = vmul.f32 %v1678, 0.01
  %v1711 = vmul.f32 %v1679, 0.01
  %v1712 = vmul.f32 %v1680, 0.01
  %v1713 = vmul.f32 %v1681, 0.01
  %v1714 = vmul.f32 %v1682, 0.01
  %v1715 = vmul.f32 %v1683, 0.01
  %v1716 = vmul.f32 %v1684, 0.01
  %v1717 = vmul.f32 %v1685, 0.01
  %v1718 = vmul.f32 %v1686, 0.01
  %v1719 = vmul.f32 %v1687, 0.01
  %v1720 = vmul.f32 %v1688, 0.01
  %v1721 = vsel %vm1689, %v1673, %v1705
  %v1722 = vsel %vm1690, %v1674, %v1706
  %v1723 = vsel %vm1691, %v1675, %v1707
  %v1724 = vsel %vm1692, %v1676, %v1708
  %v1725 = vsel %vm1693, %v1677, %v1709
  %v1726 = vsel %vm1694, %v1678, %v1710
  %v1727 = vsel %vm1695, %v1679, %v1711
  %v1728 = vsel %vm1696, %v1680, %v1712
  %v1729 = vsel %vm1697, %v1681, %v1713
  %v1730 = vsel %vm1698, %v1682, %v1714
  %v1731 = vsel %vm1699, %v1683, %v1715
  %v1732 = vsel %vm1700, %v1684, %v1716
  %v1733 = vsel %vm1701, %v1685, %v1717
  %v1734 = vsel %vm1702, %v1686, %v1718
  %v1735 = vsel %vm1703, %v1687, %v1719
  %v1736 = vsel %vm1704, %v1688, %v1720
  %v1737 = vld [vmem:[%s13] sm:$0xff]
  %v1738 = vld [vmem:[%s13 + $0x8] sm:$0xff]
  %v1739 = vld [vmem:[%s13 + $0x10] sm:$0xff]
  %v1740 = vld [vmem:[%s13 + $0x18] sm:$0xff]
  %v1741 = vld [vmem:[%s13 + $0x20] sm:$0xff]
  %v1742 = vld [vmem:[%s13 + $0x28] sm:$0xff]
  %v1743 = vld [vmem:[%s13 + $0x30] sm:$0xff]
  %v1744 = vld [vmem:[%s13 + $0x38] sm:$0xff]
  %v1745 = vld [vmem:[%s14] sm:$0x1]
  %v1747 = vlaneseq
  %v1748 = vshrl.u32 %v1747, 7
  %v1749 = vsub.s32 0, %v1748
  %v1750 = vrot.slane %v1745, %v1749
  %v1753 = vsel %vm1456, %v1721, 0
  %v1756 = vsel %vm1456, %v1722, 0
  %v1759 = vsel %vm1456, %v1723, 0
  %v1762 = vsel %vm1456, %v1724, 0
  %v1765 = vsel %vm1456, %v1725, 0
  %v1768 = vsel %vm1456, %v1726, 0
  %v1771 = vsel %vm1456, %v1727, 0
  %v1774 = vsel %vm1456, %v1728, 0
  %v1777 = vsel %vm1456, %v1729, 0
  %v1780 = vsel %vm1456, %v1730, 0
  %v1783 = vsel %vm1456, %v1731, 0
  %v1786 = vsel %vm1456, %v1732, 0
  %v1789 = vsel %vm1456, %v1733, 0
  %v1792 = vsel %vm1456, %v1734, 0
  %v1795 = vsel %vm1456, %v1735, 0
  %v1798 = vsel %vm1456, %v1736, 0
  %1800 = vmatprep.subr.mxu0 0.0
  %1801 = vmatpush1.msra.mxu0 %v1737
  %1802 = vmatprep.subr.mxu0 0.0
  %1803 = vmatpush1.msra.mxu0 %v1738
  %1804 = vmatprep.subr.mxu0 0.0
  %1805 = vmatpush1.msra.mxu0 %v1739
  %1806 = vmatprep.subr.mxu0 0.0
  %1807 = vmatpush1.msra.mxu0 %v1740
  %1808 = vmatprep.subr.mxu0 0.0
  %1809 = vmatpush1.msra.mxu0 %v1741
  %1810 = vmatprep.subr.mxu0 0.0
  %1811 = vmatpush1.msra.mxu0 %v1742
  %1812 = vmatprep.subr.mxu0 0.0
  %1813 = vmatpush1.msra.mxu0 %v1743
  %1814 = vmatprep.subr.mxu0 0.0
  %1815 = vmatpush1.msra.mxu0 %v1744
  %1816 = vmatprep.subr.mxu0 0.0
  %1817 = vmatpush1.msra.mxu0 0.0
  %1818 = vmatprep.subr.mxu0 0.0
  %1819 = vmatpush1.msra.mxu0 0.0
  %1820 = vmatprep.subr.mxu0 0.0
  %1821 = vmatpush1.msra.mxu0 0.0
  %1822 = vmatprep.subr.mxu0 0.0
  %1823 = vmatpush1.msra.mxu0 0.0
  %1824 = vmatprep.subr.mxu0 0.0
  %1825 = vmatpush1.msra.mxu0 0.0
  %1826 = vmatprep.subr.mxu0 0.0
  %1827 = vmatpush1.msra.mxu0 0.0
  %1828 = vmatprep.subr.mxu0 0.0
  %1829 = vmatpush1.msra.mxu0 0.0
  %1830 = vmatprep.subr.mxu0 0.0
  %1831 = vmatpush1.msra.mxu0 0.0
  %1832 = vmatprep.subr.mxu0 0.0
  %1833 = vmatpush1.msra.mxu0 0.0
  %1834 = vmatprep.subr.mxu0 0.0
  %1835 = vmatpush1.msra.mxu0 0.0
  %1836 = vmatprep.subr.mxu0 0.0
  %1837 = vmatpush1.msra.mxu0 0.0
  %1838 = vmatprep.subr.mxu0 0.0
  %1839 = vmatpush1.msra.mxu0 0.0
  %1840 = vmatprep.subr.mxu0 0.0
  %1841 = vmatpush1.msra.mxu0 0.0
  %1842 = vmatprep.subr.mxu0 0.0
  %1843 = vmatpush1.msra.mxu0 0.0
  %1844 = vmatprep.subr.mxu0 0.0
  %1845 = vmatpush1.msra.mxu0 0.0
  %1846 = vmatprep.subr.mxu0 0.0
  %1847 = vmatpush1.msra.mxu0 0.0
  %1848 = vmatprep.subr.mxu0 0.0
  %1849 = vmatpush1.msra.mxu0 0.0
  %1850 = vmatprep.subr.mxu0 0.0
  %1851 = vmatpush1.msra.mxu0 0.0
  %1852 = vmatprep.subr.mxu0 0.0
  %1853 = vmatpush1.msra.mxu0 0.0
  %1854 = vmatprep.subr.mxu0 0.0
  %1855 = vmatpush1.msra.mxu0 0.0
  %1856 = vmatprep.subr.mxu0 0.0
  %1857 = vmatpush1.msra.mxu0 0.0
  %1858 = vmatprep.subr.mxu0 0.0
  %1859 = vmatpush1.msra.mxu0 0.0
  %1860 = vmatprep.subr.mxu0 0.0
  %1861 = vmatpush1.msra.mxu0 0.0
  %1862 = vmatprep.subr.mxu0 0.0
  %1863 = vmatpush1.msra.mxu0 0.0
  %1864 = vmatprep.mubr.f32.mxu0 0.0
  %1865 = vmatmul.mubr.f32.gmra.mrb[0].mxu0 %v1753
  %v1866 = vpop.f32.mrb[0].mxu0
  %v1867 = vadd.f32 %v1750, %v1866
  %v1868 = vpop.f32.mrb[0].mxu0
  %1869 = vmatprep.mubr.f32.mxu0 0.0
  %1870 = vmatmul.mubr.f32.gmra.mrb[0].mxu0 %v1756
  %v1871 = vpop.f32.mrb[0].mxu0
  %v1872 = vadd.f32 %v1750, %v1871
  %v1873 = vpop.f32.mrb[0].mxu0
  %1874 = vmatprep.mubr.f32.mxu0 0.0
  %1875 = vmatmul.mubr.f32.gmra.mrb[0].mxu0 %v1759
  %v1876 = vpop.f32.mrb[0].mxu0
  %v1877 = vadd.f32 %v1750, %v1876
  %v1878 = vpop.f32.mrb[0].mxu0
  %1879 = vmatprep.mubr.f32.mxu0 0.0
  %1880 = vmatmul.mubr.f32.gmra.mrb[0].mxu0 %v1762
  %v1881 = vpop.f32.mrb[0].mxu0
  %v1882 = vadd.f32 %v1750, %v1881
  %v1883 = vpop.f32.mrb[0].mxu0
  %1884 = vmatprep.mubr.f32.mxu0 0.0
  %1885 = vmatmul.mubr.f32.gmra.mrb[0].mxu0 %v1765
  %v1886 = vpop.f32.mrb[0].mxu0
  %v1887 = vadd.f32 %v1750, %v1886
  %v1888 = vpop.f32.mrb[0].mxu0
  %1889 = vmatprep.mubr.f32.mxu0 0.0
  %1890 = vmatmul.mubr.f32.gmra.mrb[0].mxu0 %v1768
  %v1891 = vpop.f32.mrb[0].mxu0
  %v1892 = vadd.f32 %v1750, %v1891
  %v1893 = vpop.f32.mrb[0].mxu0
  %1894 = vmatprep.mubr.f32.mxu0 0.0
  %1895 = vmatmul.mubr.f32.gmra.mrb[0].mxu0 %v1771
  %v1896 = vpop.f32.mrb[0].mxu0
  %v1897 = vadd.f32 %v1750, %v1896
  %v1898 = vpop.f32.mrb[0].mxu0
  %1899 = vmatprep.mubr.f32.mxu0 0.0
  %1900 = vmatmul.mubr.f32.gmra.mrb[0].mxu0 %v1774
  %v1901 = vpop.f32.mrb[0].mxu0
  %v1902 = vadd.f32 %v1750, %v1901
  %v1903 = vpop.f32.mrb[0].mxu0
  %1904 = vmatprep.mubr.f32.mxu0 0.0
  %1905 = vmatmul.mubr.f32.gmra.mrb[0].mxu0 %v1777
  %v1906 = vpop.f32.mrb[0].mxu0
  %v1907 = vadd.f32 %v1750, %v1906
  %v1908 = vpop.f32.mrb[0].mxu0
  %1909 = vmatprep.mubr.f32.mxu0 0.0
  %1910 = vmatmul.mubr.f32.gmra.mrb[0].mxu0 %v1780
  %v1911 = vpop.f32.mrb[0].mxu0
  %v1912 = vadd.f32 %v1750, %v1911
  %v1913 = vpop.f32.mrb[0].mxu0
  %1914 = vmatprep.mubr.f32.mxu0 0.0
  %1915 = vmatmul.mubr.f32.gmra.mrb[0].mxu0 %v1783
  %v1916 = vpop.f32.mrb[0].mxu0
  %v1917 = vadd.f32 %v1750, %v1916
  %v1918 = vpop.f32.mrb[0].mxu0
  %1919 = vmatprep.mubr.f32.mxu0 0.0
  %1920 = vmatmul.mubr.f32.gmra.mrb[0].mxu0 %v1786
  %v1921 = vpop.f32.mrb[0].mxu0
  %v1922 = vadd.f32 %v1750, %v1921
  %v1923 = vpop.f32.mrb[0].mxu0
  %1924 = vmatprep.mubr.f32.mxu0 0.0
  %1925 = vmatmul.mubr.f32.gmra.mrb[0].mxu0 %v1789
  %v1926 = vpop.f32.mrb[0].mxu0
  %v1927 = vadd.f32 %v1750, %v1926
  %v1928 = vpop.f32.mrb[0].mxu0
  %1929 = vmatprep.mubr.f32.mxu0 0.0
  %1930 = vmatmul.mubr.f32.gmra.mrb[0].mxu0 %v1792
  %v1931 = vpop.f32.mrb[0].mxu0
  %v1932 = vadd.f32 %v1750, %v1931
  %v1933 = vpop.f32.mrb[0].mxu0
  %1934 = vmatprep.mubr.f32.mxu0 0.0
  %1935 = vmatmul.mubr.f32.gmra.mrb[0].mxu0 %v1795
  %v1936 = vpop.f32.mrb[0].mxu0
  %v1937 = vadd.f32 %v1750, %v1936
  %v1938 = vpop.f32.mrb[0].mxu0
  %1939 = vmatprep.mubr.f32.mxu0 0.0
  %1940 = vmatmul.mubr.f32.gmra.mrb[0].mxu0 %v1798
  %v1941 = vpop.f32.mrb[0].mxu0
  %v1942 = vadd.f32 %v1750, %v1941
  %v1943 = vpop.f32.mrb[0].mxu0
  %1944 = vdwg.mxu0
  %vm1945 = vcmp.gt.f32.partialorder %v1867, 0.0
  %vm1946 = vcmp.gt.f32.partialorder %v1872, 0.0
  %vm1947 = vcmp.gt.f32.partialorder %v1877, 0.0
  %vm1948 = vcmp.gt.f32.partialorder %v1882, 0.0
  %vm1949 = vcmp.gt.f32.partialorder %v1887, 0.0
  %vm1950 = vcmp.gt.f32.partialorder %v1892, 0.0
  %vm1951 = vcmp.gt.f32.partialorder %v1897, 0.0
  %vm1952 = vcmp.gt.f32.partialorder %v1902, 0.0
  %vm1953 = vcmp.gt.f32.partialorder %v1907, 0.0
  %vm1954 = vcmp.gt.f32.partialorder %v1912, 0.0
  %vm1955 = vcmp.gt.f32.partialorder %v1917, 0.0
  %vm1956 = vcmp.gt.f32.partialorder %v1922, 0.0
  %vm1957 = vcmp.gt.f32.partialorder %v1927, 0.0
  %vm1958 = vcmp.gt.f32.partialorder %v1932, 0.0
  %vm1959 = vcmp.gt.f32.partialorder %v1937, 0.0
  %vm1960 = vcmp.gt.f32.partialorder %v1942, 0.0
  %v1961 = vmul.f32 %v1867, 0.01
  %v1962 = vmul.f32 %v1872, 0.01
  %v1963 = vmul.f32 %v1877, 0.01
  %v1964 = vmul.f32 %v1882, 0.01
  %v1965 = vmul.f32 %v1887, 0.01
  %v1966 = vmul.f32 %v1892, 0.01
  %v1967 = vmul.f32 %v1897, 0.01
  %v1968 = vmul.f32 %v1902, 0.01
  %v1969 = vmul.f32 %v1907, 0.01
  %v1970 = vmul.f32 %v1912, 0.01
  %v1971 = vmul.f32 %v1917, 0.01
  %v1972 = vmul.f32 %v1922, 0.01
  %v1973 = vmul.f32 %v1927, 0.01
  %v1974 = vmul.f32 %v1932, 0.01
  %v1975 = vmul.f32 %v1937, 0.01
  %v1976 = vmul.f32 %v1942, 0.01
  %v1977 = vsel %vm1945, %v1867, %v1961
  %v1978 = vsel %vm1946, %v1872, %v1962
  %v1979 = vsel %vm1947, %v1877, %v1963
  %v1980 = vsel %vm1948, %v1882, %v1964
  %v1981 = vsel %vm1949, %v1887, %v1965
  %v1982 = vsel %vm1950, %v1892, %v1966
  %v1983 = vsel %vm1951, %v1897, %v1967
  %v1984 = vsel %vm1952, %v1902, %v1968
  %v1985 = vsel %vm1953, %v1907, %v1969
  %v1986 = vsel %vm1954, %v1912, %v1970
  %v1987 = vsel %vm1955, %v1917, %v1971
  %v1988 = vsel %vm1956, %v1922, %v1972
  %v1989 = vsel %vm1957, %v1927, %v1973
  %v1990 = vsel %vm1958, %v1932, %v1974
  %v1991 = vsel %vm1959, %v1937, %v1975
  %v1992 = vsel %vm1960, %v1942, %v1976
  %v1993 = vadd.f32 %v1977, %v73
  %v1994 = vadd.f32 %v1978, %v74
  %v1995 = vadd.f32 %v1979, %v75
  %v1996 = vadd.f32 %v1980, %v76
  %v1997 = vadd.f32 %v1981, %v77
  %v1998 = vadd.f32 %v1982, %v78
  %v1999 = vadd.f32 %v1983, %v79
  %v2000 = vadd.f32 %v1984, %v80
  %v2001 = vadd.f32 %v1985, %v81
  %v2002 = vadd.f32 %v1986, %v82
  %v2003 = vadd.f32 %v1987, %v83
  %v2004 = vadd.f32 %v1988, %v84
  %v2005 = vadd.f32 %v1989, %v85
  %v2006 = vadd.f32 %v1990, %v86
  %v2007 = vadd.f32 %v1991, %v87
  %v2008 = vadd.f32 %v1992, %v88
  %2009 = vst.msk [vmem:[%s15] sm:$0xff] %vm100, %v1993
  %2010 = vst.msk [vmem:[%s15 + $0x8] sm:$0xff] %vm100, %v1994
  %2011 = vst.msk [vmem:[%s15 + $0x10] sm:$0xff] %vm100, %v1995
  %2012 = vst.msk [vmem:[%s15 + $0x18] sm:$0xff] %vm100, %v1996
  %2013 = vst.msk [vmem:[%s15 + $0x20] sm:$0xff] %vm100, %v1997
  %2014 = vst.msk [vmem:[%s15 + $0x28] sm:$0xff] %vm100, %v1998
  %2015 = vst.msk [vmem:[%s15 + $0x30] sm:$0xff] %vm100, %v1999
  %2016 = vst.msk [vmem:[%s15 + $0x38] sm:$0xff] %vm100, %v2000
  %2017 = vst.msk [vmem:[%s15 + $0x40] sm:$0xff] %vm100, %v2001
  %2018 = vst.msk [vmem:[%s15 + $0x48] sm:$0xff] %vm100, %v2002
  %2019 = vst.msk [vmem:[%s15 + $0x50] sm:$0xff] %vm100, %v2003
  %2020 = vst.msk [vmem:[%s15 + $0x58] sm:$0xff] %vm100, %v2004
  %2021 = vst.msk [vmem:[%s15 + $0x60] sm:$0xff] %vm100, %v2005
  %2022 = vst.msk [vmem:[%s15 + $0x68] sm:$0xff] %vm100, %v2006
  %2023 = vst.msk [vmem:[%s15 + $0x70] sm:$0xff] %vm100, %v2007
  %2024 = vst.msk [vmem:[%s15 + $0x78] sm:$0xff] %vm100, %v2008
  %v2025 = vsel %vm100, %v1977, 1.0
  %v2026 = vsel %vm100, %v1978, 1.0
  %v2027 = vsel %vm100, %v1979, 1.0
  %v2028 = vsel %vm100, %v1980, 1.0
  %v2029 = vsel %vm100, %v1981, 1.0
  %v2030 = vsel %vm100, %v1982, 1.0
  %v2031 = vsel %vm100, %v1983, 1.0
  %v2032 = vsel %vm100, %v1984, 1.0
  %v2033 = vsel %vm100, %v1985, 1.0
  %v2034 = vsel %vm100, %v1986, 1.0
  %v2035 = vsel %vm100, %v1987, 1.0
  %v2036 = vsel %vm100, %v1988, 1.0
  %v2037 = vsel %vm100, %v1989, 1.0
  %v2038 = vsel %vm100, %v1990, 1.0
  %v2039 = vsel %vm100, %v1991, 1.0
  %v2040 = vsel %vm100, %v1992, 1.0
  %v2041 = vlaneseq
  %v2042 = vshrl.u32 %v2041, 7
  %v2043 = vadd.s32 %v2042, 8
  %v2044 = vadd.s32 %v2042, 16
  %v2045 = vadd.s32 %v2042, 24
  %v2046 = vadd.s32 %v2042, 32
  %v2047 = vadd.s32 %v2042, 40
  %v2048 = vadd.s32 %v2042, 48
  %v2049 = vadd.s32 %v2042, 56
  %v2050 = vadd.s32 %v2042, 64
  %v2051 = vadd.s32 %v2042, 72
  %v2052 = vadd.s32 %v2042, 80
  %v2053 = vadd.s32 %v2042, 88
  %v2054 = vadd.s32 %v2042, 96
  %v2055 = vadd.s32 %v2042, 104
  %v2056 = vadd.s32 %v2042, 112
  %v2057 = vadd.s32 %v2042, 120
  %v2058 = vld [vmem:[%s3] sm:$0x1]
  %v2059 = vlaneseq
  %v2060 = vshrl.u32 %v2059, 7
  %v2061 = vsub.s32 0, %v2060
  %v2062 = vrot.slane %v2058, %v2061
  %vm2063 = vcmp.eq.s32.totalorder %v2042, %v2062
  %vm2064 = vcmp.eq.s32.totalorder %v2043, %v2062
  %vm2065 = vcmp.eq.s32.totalorder %v2044, %v2062
  %vm2066 = vcmp.eq.s32.totalorder %v2045, %v2062
  %vm2067 = vcmp.eq.s32.totalorder %v2046, %v2062
  %vm2068 = vcmp.eq.s32.totalorder %v2047, %v2062
  %vm2069 = vcmp.eq.s32.totalorder %v2048, %v2062
  %vm2070 = vcmp.eq.s32.totalorder %v2049, %v2062
  %vm2071 = vcmp.eq.s32.totalorder %v2050, %v2062
  %vm2072 = vcmp.eq.s32.totalorder %v2051, %v2062
  %vm2073 = vcmp.eq.s32.totalorder %v2052, %v2062
  %vm2074 = vcmp.eq.s32.totalorder %v2053, %v2062
  %vm2075 = vcmp.eq.s32.totalorder %v2054, %v2062
  %vm2076 = vcmp.eq.s32.totalorder %v2055, %v2062
  %vm2077 = vcmp.eq.s32.totalorder %v2056, %v2062
  %vm2078 = vcmp.eq.s32.totalorder %v2057, %v2062
  %v2079 = vsel %vm2063, 1, 0
  %v2080 = vsel %vm2064, 1, 0
  %v2081 = vsel %vm2065, 1, 0
  %v2082 = vsel %vm2066, 1, 0
  %v2083 = vsel %vm2067, 1, 0
  %v2084 = vsel %vm2068, 1, 0
  %v2085 = vsel %vm2069, 1, 0
  %v2086 = vsel %vm2070, 1, 0
  %v2087 = vsel %vm2071, 1, 0
  %v2088 = vsel %vm2072, 1, 0
  %v2089 = vsel %vm2073, 1, 0
  %v2090 = vsel %vm2074, 1, 0
  %v2091 = vsel %vm2075, 1, 0
  %v2092 = vsel %vm2076, 1, 0
  %v2093 = vsel %vm2077, 1, 0
  %v2094 = vsel %vm2078, 1, 0
  %v2095 = vcvt.s32.f32 %v2079
  %v2096 = vcvt.s32.f32 %v2080
  %v2097 = vcvt.s32.f32 %v2081
  %v2098 = vcvt.s32.f32 %v2082
  %v2099 = vcvt.s32.f32 %v2083
  %v2100 = vcvt.s32.f32 %v2084
  %v2101 = vcvt.s32.f32 %v2085
  %v2102 = vcvt.s32.f32 %v2086
  %v2103 = vcvt.s32.f32 %v2087
  %v2104 = vcvt.s32.f32 %v2088
  %v2105 = vcvt.s32.f32 %v2089
  %v2106 = vcvt.s32.f32 %v2090
  %v2107 = vcvt.s32.f32 %v2091
  %v2108 = vcvt.s32.f32 %v2092
  %v2109 = vcvt.s32.f32 %v2093
  %v2110 = vcvt.s32.f32 %v2094
  %v2111 = vld [vmem:[%s16] sm:$0xff]
  %v2112 = vld [vmem:[%s16 + $0x8] sm:$0xff]
  %v2113 = vld [vmem:[%s16 + $0x10] sm:$0xff]
  %v2114 = vld [vmem:[%s16 + $0x18] sm:$0xff]
  %v2115 = vld [vmem:[%s16 + $0x20] sm:$0xff]
  %v2116 = vld [vmem:[%s16 + $0x28] sm:$0xff]
  %v2117 = vld [vmem:[%s16 + $0x30] sm:$0xff]
  %v2118 = vld [vmem:[%s16 + $0x38] sm:$0xff]
  %v2119 = vld [vmem:[%s16 + $0x40] sm:$0xff]
  %v2120 = vld [vmem:[%s16 + $0x48] sm:$0xff]
  %v2121 = vld [vmem:[%s16 + $0x50] sm:$0xff]
  %v2122 = vld [vmem:[%s16 + $0x58] sm:$0xff]
  %v2123 = vld [vmem:[%s16 + $0x60] sm:$0xff]
  %v2124 = vld [vmem:[%s16 + $0x68] sm:$0xff]
  %v2125 = vld [vmem:[%s16 + $0x70] sm:$0xff]
  %v2126 = vld [vmem:[%s16 + $0x78] sm:$0xff]
  %2127 = vmatprep.subr.mxu0 0.0
  %2128 = vmatpush1.msra.mxu0 %v2025
  %2129 = vmatprep.subr.mxu0 0.0
  %2130 = vmatpush1.msra.mxu0 %v2026
  %2131 = vmatprep.subr.mxu0 0.0
  %2132 = vmatpush1.msra.mxu0 %v2027
  %2133 = vmatprep.subr.mxu0 0.0
  %2134 = vmatpush1.msra.mxu0 %v2028
  %2135 = vmatprep.subr.mxu0 0.0
  %2136 = vmatpush1.msra.mxu0 %v2029
  %2137 = vmatprep.subr.mxu0 0.0
  %2138 = vmatpush1.msra.mxu0 %v2030
  %2139 = vmatprep.subr.mxu0 0.0
  %2140 = vmatpush1.msra.mxu0 %v2031
  %2141 = vmatprep.subr.mxu0 0.0
  %2142 = vmatpush1.msra.mxu0 %v2032
  %2143 = vmatprep.subr.mxu0 0.0
  %2144 = vmatpush1.msra.mxu0 %v2033
  %2145 = vmatprep.subr.mxu0 0.0
  %2146 = vmatpush1.msra.mxu0 %v2034
  %2147 = vmatprep.subr.mxu0 0.0
  %2148 = vmatpush1.msra.mxu0 %v2035
  %2149 = vmatprep.subr.mxu0 0.0
  %2150 = vmatpush1.msra.mxu0 %v2036
  %2151 = vmatprep.subr.mxu0 0.0
  %2152 = vmatpush1.msra.mxu0 %v2037
  %2153 = vmatprep.subr.mxu0 0.0
  %2154 = vmatpush1.msra.mxu0 %v2038
  %2155 = vmatprep.subr.mxu0 0.0
  %2156 = vmatpush1.msra.mxu0 %v2039
  %2157 = vmatprep.subr.mxu0 0.0
  %2158 = vmatpush1.msra.mxu0 %v2040
  %2159 = vmatprep.subr.mxu0 0.0
  %2160 = vmatpush1.msra.mxu0 0.0
  %2161 = vmatprep.subr.mxu0 0.0
  %2162 = vmatpush1.msra.mxu0 0.0
  %2163 = vmatprep.subr.mxu0 0.0
  %2164 = vmatpush1.msra.mxu0 0.0
  %2165 = vmatprep.subr.mxu0 0.0
  %2166 = vmatpush1.msra.mxu0 0.0
  %2167 = vmatprep.subr.mxu0 0.0
  %2168 = vmatpush1.msra.mxu0 0.0
  %2169 = vmatprep.subr.mxu0 0.0
  %2170 = vmatpush1.msra.mxu0 0.0
  %2171 = vmatprep.subr.mxu0 0.0
  %2172 = vmatpush1.msra.mxu0 0.0
  %2173 = vmatprep.subr.mxu0 0.0
  %2174 = vmatpush1.msra.mxu0 0.0
  %2175 = vmatprep.subr.mxu0 0.0
  %2176 = vmatpush1.msra.mxu0 0.0
  %2177 = vmatprep.subr.mxu0 0.0
  %2178 = vmatpush1.msra.mxu0 0.0
  %2179 = vmatprep.subr.mxu0 0.0
  %2180 = vmatpush1.msra.mxu0 0.0
  %2181 = vmatprep.subr.mxu0 0.0
  %2182 = vmatpush1.msra.mxu0 0.0
  %2183 = vmatprep.subr.mxu0 0.0
  %2184 = vmatpush1.msra.mxu0 0.0
  %2185 = vmatprep.subr.mxu0 0.0
  %2186 = vmatpush1.msra.mxu0 0.0
  %2187 = vmatprep.subr.mxu0 0.0
  %2188 = vmatpush1.msra.mxu0 0.0
  %2189 = vmatprep.subr.mxu0 0.0
  %2190 = vmatpush1.msra.mxu0 0.0
  %2191 = vmatprep.mubr.f32.mxu0 0.0
  %2192 = vmatmul.mubr.f32.gmra.mrb[0].mxu0 %v2095
  %v2193 = vpop.f32.mrb[0].mxu0
  %v2194 = vadd.f32 0.0, %v2193
  %v2195 = vpop.f32.mrb[0].mxu0
  %2196 = vmatprep.mubr.f32.mxu0 0.0
  %2197 = vmatmul.mubr.f32.gmra.mrb[0].mxu0 %v2096
  %v2198 = vpop.f32.mrb[0].mxu0
  %v2199 = vadd.f32 0.0, %v2198
  %v2200 = vpop.f32.mrb[0].mxu0
  %2201 = vmatprep.mubr.f32.mxu0 0.0
  %2202 = vmatmul.mubr.f32.gmra.mrb[0].mxu0 %v2097
  %v2203 = vpop.f32.mrb[0].mxu0
  %v2204 = vadd.f32 0.0, %v2203
  %v2205 = vpop.f32.mrb[0].mxu0
  %2206 = vmatprep.mubr.f32.mxu0 0.0
  %2207 = vmatmul.mubr.f32.gmra.mrb[0].mxu0 %v2098
  %v2208 = vpop.f32.mrb[0].mxu0
  %v2209 = vadd.f32 0.0, %v2208
  %v2210 = vpop.f32.mrb[0].mxu0
  %2211 = vmatprep.mubr.f32.mxu0 0.0
  %2212 = vmatmul.mubr.f32.gmra.mrb[0].mxu0 %v2099
  %v2213 = vpop.f32.mrb[0].mxu0
  %v2214 = vadd.f32 0.0, %v2213
  %v2215 = vpop.f32.mrb[0].mxu0
  %2216 = vmatprep.mubr.f32.mxu0 0.0
  %2217 = vmatmul.mubr.f32.gmra.mrb[0].mxu0 %v2100
  %v2218 = vpop.f32.mrb[0].mxu0
  %v2219 = vadd.f32 0.0, %v2218
  %v2220 = vpop.f32.mrb[0].mxu0
  %2221 = vmatprep.mubr.f32.mxu0 0.0
  %2222 = vmatmul.mubr.f32.gmra.mrb[0].mxu0 %v2101
  %v2223 = vpop.f32.mrb[0].mxu0
  %v2224 = vadd.f32 0.0, %v2223
  %v2225 = vpop.f32.mrb[0].mxu0
  %2226 = vmatprep.mubr.f32.mxu0 0.0
  %2227 = vmatmul.mubr.f32.gmra.mrb[0].mxu0 %v2102
  %v2228 = vpop.f32.mrb[0].mxu0
  %v2229 = vadd.f32 0.0, %v2228
  %v2230 = vpop.f32.mrb[0].mxu0
  %2231 = vmatprep.mubr.f32.mxu0 0.0
  %2232 = vmatmul.mubr.f32.gmra.mrb[0].mxu0 %v2103
  %v2233 = vpop.f32.mrb[0].mxu0
  %v2234 = vadd.f32 0.0, %v2233
  %v2235 = vpop.f32.mrb[0].mxu0
  %2236 = vmatprep.mubr.f32.mxu0 0.0
  %2237 = vmatmul.mubr.f32.gmra.mrb[0].mxu0 %v2104
  %v2238 = vpop.f32.mrb[0].mxu0
  %v2239 = vadd.f32 0.0, %v2238
  %v2240 = vpop.f32.mrb[0].mxu0
  %2241 = vmatprep.mubr.f32.mxu0 0.0
  %2242 = vmatmul.mubr.f32.gmra.mrb[0].mxu0 %v2105
  %v2243 = vpop.f32.mrb[0].mxu0
  %v2244 = vadd.f32 0.0, %v2243
  %v2245 = vpop.f32.mrb[0].mxu0
  %2246 = vmatprep.mubr.f32.mxu0 0.0
  %2247 = vmatmul.mubr.f32.gmra.mrb[0].mxu0 %v2106
  %v2248 = vpop.f32.mrb[0].mxu0
  %v2249 = vadd.f32 0.0, %v2248
  %v2250 = vpop.f32.mrb[0].mxu0
  %2251 = vmatprep.mubr.f32.mxu0 0.0
  %2252 = vmatmul.mubr.f32.gmra.mrb[0].mxu0 %v2107
  %v2253 = vpop.f32.mrb[0].mxu0
  %v2254 = vadd.f32 0.0, %v2253
  %v2255 = vpop.f32.mrb[0].mxu0
  %2256 = vmatprep.mubr.f32.mxu0 0.0
  %2257 = vmatmul.mubr.f32.gmra.mrb[0].mxu0 %v2108
  %v2258 = vpop.f32.mrb[0].mxu0
  %v2259 = vadd.f32 0.0, %v2258
  %v2260 = vpop.f32.mrb[0].mxu0
  %2261 = vmatprep.mubr.f32.mxu0 0.0
  %2262 = vmatmul.mubr.f32.gmra.mrb[0].mxu0 %v2109
  %v2263 = vpop.f32.mrb[0].mxu0
  %v2264 = vadd.f32 0.0, %v2263
  %v2265 = vpop.f32.mrb[0].mxu0
  %2266 = vmatprep.mubr.f32.mxu0 0.0
  %2267 = vmatmul.mubr.f32.gmra.mrb[0].mxu0 %v2110
  %v2268 = vpop.f32.mrb[0].mxu0
  %v2269 = vadd.f32 0.0, %v2268
  %v2270 = vpop.f32.mrb[0].mxu0
  %2271 = vdwg.mxu0
  %v2272 = vadd.f32 %v2111, %v2194
  %v2273 = vadd.f32 %v2112, %v2199
  %v2274 = vadd.f32 %v2113, %v2204
  %v2275 = vadd.f32 %v2114, %v2209
  %v2276 = vadd.f32 %v2115, %v2214
  %v2277 = vadd.f32 %v2116, %v2219
  %v2278 = vadd.f32 %v2117, %v2224
  %v2279 = vadd.f32 %v2118, %v2229
  %v2280 = vadd.f32 %v2119, %v2234
  %v2281 = vadd.f32 %v2120, %v2239
  %v2282 = vadd.f32 %v2121, %v2244
  %v2283 = vadd.f32 %v2122, %v2249
  %v2284 = vadd.f32 %v2123, %v2254
  %v2285 = vadd.f32 %v2124, %v2259
  %v2286 = vadd.f32 %v2125, %v2264
  %v2287 = vadd.f32 %v2126, %v2269
  %2288 = vst.msk [vmem:[%s16] sm:$0xff] %vm1456, %v2272
  %2289 = vst.msk [vmem:[%s16 + $0x8] sm:$0xff] %vm1456, %v2273
  %2290 = vst.msk [vmem:[%s16 + $0x10] sm:$0xff] %vm1456, %v2274
  %2291 = vst.msk [vmem:[%s16 + $0x18] sm:$0xff] %vm1456, %v2275
  %2292 = vst.msk [vmem:[%s16 + $0x20] sm:$0xff] %vm1456, %v2276
  %2293 = vst.msk [vmem:[%s16 + $0x28] sm:$0xff] %vm1456, %v2277
  %2294 = vst.msk [vmem:[%s16 + $0x30] sm:$0xff] %vm1456, %v2278
  %2295 = vst.msk [vmem:[%s16 + $0x38] sm:$0xff] %vm1456, %v2279
  %2296 = vst.msk [vmem:[%s16 + $0x40] sm:$0xff] %vm1456, %v2280
  %2297 = vst.msk [vmem:[%s16 + $0x48] sm:$0xff] %vm1456, %v2281
  %2298 = vst.msk [vmem:[%s16 + $0x50] sm:$0xff] %vm1456, %v2282
  %2299 = vst.msk [vmem:[%s16 + $0x58] sm:$0xff] %vm1456, %v2283
  %2300 = vst.msk [vmem:[%s16 + $0x60] sm:$0xff] %vm1456, %v2284
  %2301 = vst.msk [vmem:[%s16 + $0x68] sm:$0xff] %vm1456, %v2285
  %2302 = vst.msk [vmem:[%s16 + $0x70] sm:$0xff] %vm1456, %v2286
  %2303 = vst.msk [vmem:[%s16 + $0x78] sm:$0xff] %vm1456, %v2287
  // Predicated region
  $region66: #{megnet_layer_forward.5} parent=0 // pred_check
    _
  $region67: #{megnet_layer_forward.5} parent=0 // pred_check_branch
    %2305 = sbr.rel (0) target = $region69
  $region68: #{megnet_layer_forward.5} parent=0 // pred_region
    _
  $region69: #{megnet_layer_forward.5} parent=0 // pred_fallthru
    _
  // Predicated region
  $region70: #{megnet_layer_forward.5} parent=0 // pred_check
    _
  $region71: #{megnet_layer_forward.5} parent=0 // pred_check_branch
    %2307 = sbr.rel (0) target = $region73
  $region72: #{megnet_layer_forward.5} parent=0 // pred_region
    _
  $region73: #{megnet_layer_forward.5} parent=0 // pred_fallthru
    _
  // Predicated region
  $region74: #{megnet_layer_forward.5} parent=0 // pred_check
    _
  $region75: #{megnet_layer_forward.5} parent=0 // pred_check_branch
    %2309 = sbr.rel (0) target = $region77
  $region76: #{megnet_layer_forward.5} parent=0 // pred_region
    _
  $region77: #{megnet_layer_forward.5} parent=0 // pred_fallthru
    _
  // Predicated region
  $region78: #{megnet_layer_forward.5} parent=0 // pred_check
    _
  $region79: #{megnet_layer_forward.5} parent=0 // pred_check_branch
    %2311 = sbr.rel (0) target = $region81
  $region80: #{megnet_layer_forward.5} parent=0 // pred_region
    _
  $region81: #{megnet_layer_forward.5} parent=0 // pred_fallthru
    _

</llo_original>
